<compile_context>
chip_gen: v6e
topology: v6e:2x2x1
jax: 0.10.0
libtpu: 0.0.40
codegen_flags: <defaults>
</compile_context>

<pallas_src>
from functools import partial

import numpy as np
import jax
import jax.numpy as jnp
from jax.experimental import pallas as pl
from jax.experimental.pallas import tpu as pltpu


def get_frequency_modes(seq_len, modes=64, mode_select_method='random'):
    """Same as the PyTorch helper (numpy RNG is seeded in __main__)."""
    modes = min(modes, seq_len // 2)
    if mode_select_method == 'random':
        index = list(range(0, seq_len // 2))
        np.random.shuffle(index)
        index = index[:modes]
    else:
        index = list(range(0, modes))
    index.sort()
    return index


# ----------------------------------------------------------------------------
# Parameter-prep (run ONCE, outside the forward path)
# ----------------------------------------------------------------------------
def prepare_fourier_block_operators(w_real, w_imag, index, seq_len):
    """Build the fused rDFT / complex-mix operators once.

    Returns dict with F4 (L,4M), W4 (E,H,O,4M), A4 (4M,L) and dims (H,E,O,M,L).
    """
    H, E, O, M = w_real.shape
    L = int(seq_len)
    assert len(index) == M

    # Forward truncated rDFT for the gathered modes `index`:
    #   X[k_i] = sum_l x[l] * exp(-2j*pi*index[i]*l/L)
    l = np.arange(L, dtype=np.float64)[:, None]                      # (L, 1)
    k_sel = np.asarray(index, dtype=np.float64)[None, :]             # (1, M)
    ang_f = 2.0 * np.pi * l * k_sel / L
    Fr = np.cos(ang_f)
    Fi = -np.sin(ang_f)
    F4 = np.concatenate([Fr, Fi, Fi, Fr], axis=1).astype(np.float32)   # (L, 4M)

    # Inverse truncated real DFT. out_ft is written at *positions* wi = 0..M-1
    # (the `out_ft[..., wi] = ...` quirk of the PyTorch module), so the inverse
    # uses positions 0..M-1 as active frequencies, weight 2/L (1/L at DC).
    # NOTE: the pos == L//2 Nyquist branch is intentionally dead code
    # (M <= L//2 so positions never reach L//2); kept so the formula reads as a
    # standard real iDFT — do not "fix" it.
    pos = np.arange(M, dtype=np.float64)[:, None]                    # (M, 1)
    n = np.arange(L, dtype=np.float64)[None, :]                      # (1, L)
    ang_i = 2.0 * np.pi * pos * n / L
    wgt = np.where((pos == 0) | (pos == L // 2), 1.0, 2.0) / L
    Ar = wgt * np.cos(ang_i)
    Ai = -wgt * np.sin(ang_i)
    A4 = np.concatenate([Ar, Ar, Ai, Ai], axis=0).astype(np.float32)   # (4M, L)

    # Fused complex-mix weights in (E, H, O, 4M) layout, lanes [wr | -wi | wr | wi].
    #  - E major  -> whole-tile w_ref[e] reads in the kernel mixing loop.
    #  - (H, O) row order -> kernel output rows are already (h, o), so the final
    #    (B, H, O, L) result is a free reshape (no post-kernel transpose).
    w4 = jnp.concatenate([w_real, -w_imag, w_real, w_imag], axis=-1)   # (H,E,O,4M)
    w4 = jnp.transpose(w4, (1, 0, 2, 3)).astype(jnp.float32)           # (E,H,O,4M)

    return {
        "F4": jnp.asarray(F4),
        "W4": w4,
        "A4": jnp.asarray(A4),
        "dims": (H, E, O, M, L),
    }


# ----------------------------------------------------------------------------
# Kernel
# ----------------------------------------------------------------------------
def _fourier_block_kernel(x_ref, f_ref, w_ref, a_ref, o_ref, *, precision):
    # x_ref : (1, E*H, L)    rows ordered (e, h) for one batch element
    # f_ref : (L, 4M)        fused forward truncated rDFT   [cos | -sin | -sin | cos]
    # w_ref : (E, H, O, 4M)  fused complex-mix weights      [wr  | -wi  |  wr  |  wi]
    # a_ref : (4M, L)        fused inverse truncated rDFT   [Ar ; Ar ; Ai ; Ai]
    # o_ref : (1, H*O, L)    output rows ordered (h, o) -> reshape(B,H,O,L) is free
    E, H, O, M4 = w_ref.shape

    x = x_ref[0]                                                     # (E*H, L)
    # Single truncated-rDFT matmul over all (e, h) rows at once:
    #   lanes = [xr | xi | xi | xr] for the M selected modes.
    xf = jnp.dot(x, f_ref[...], preferred_element_type=jnp.float32,
                 precision=precision)                                # (E*H, 4M)

    # Complex per-mode channel mixing:
    #   acc[h, o, :] = sum_e xf[e*H + h, :] * W4[e, h, o, :]
    # lanes [0:2M] accumulate the real part (xr*wr, -xi*wi); lanes [2M:4M] the
    # imaginary part (xi*wr, xr*wi).  The per-e (H,4M) slab is broadcast over O
    # *inside the multiply* (no materialized tile/repeat copy).  With H == 8 the
    # slab slice is a whole-sublane-tile view (free); other H stay correct.
    def slab(e):
        return xf[e * H:(e + 1) * H][:, None, :]                     # (H, 1, 4M)

    if E <= 8:
        # Small E: fully unrolled static loop (LLO scheduling visibility).
        acc = slab(0) * w_ref[0]
        for e in range(1, E):
            acc = acc + slab(e) * w_ref[e]
    else:
        # Large E (production): fori_loop bounds vreg live ranges (w_ref[e] is
        # ~128 vregs at production size) while keeping partial unrolling.
        def body(e, a):
            xe = jax.lax.dynamic_slice_in_dim(xf, e * H, H, axis=0)
            return a + xe[:, None, :] * w_ref[e]
        acc = jax.lax.fori_loop(1, E, body, slab(0) * w_ref[0], unroll=4)
    # acc: (H, O, 4M)

    # Single truncated inverse-rDFT matmul back to the time axis; A4 folds the
    # (Re, Im) recombination so no lane slicing / roll is needed.
    a4 = a_ref[...]
    if O % 8 == 0:
        # (H, O, 4M) -> (H*O, 4M) is layout-preserving when O is a multiple of
        # the sublane count: one big matmul + one lane-dense (H*O, L) store.
        out = jnp.dot(acc.reshape(H * O, M4), a4,
                      preferred_element_type=jnp.float32, precision=precision)
        o_ref[0] = out
    else:
        # Small-O fallback (test shapes): H per-head matmuls avoid a relayouting
        # reshape; stores are contiguous (O, L) slabs of the (H*O, L) block.
        for h in range(H):
            o_ref[0, h * O:(h + 1) * O, :] = jnp.dot(
                acc[h], a4, preferred_element_type=jnp.float32,
                precision=precision)


def _maybe_single_buffered(block_shape, index_map, single_buffer):
    """Grid-invariant operand spec; request single buffering when it is large
    enough to matter for the VMEM budget (v7x: 64 MiB physical)."""
    if single_buffer:
        try:
            return pl.BlockSpec(block_shape, index_map,
                                pipeline_mode=pl.Buffered(1))
        except TypeError:  # older Pallas without pipeline_mode: fall through
            pass
    return pl.BlockSpec(block_shape, index_map)


# ----------------------------------------------------------------------------
# Forward wrapper
# ----------------------------------------------------------------------------
def fourier_block_forward(q, operators, *, q_channels_first=False,
                          matmul_precision=jax.lax.Precision.HIGHEST):
    """FourierBlock forward.

    q: (B, L, H, E)  (or (B, E*H, L) with q_channels_first=True).
    operators: output of prepare_fourier_block_operators (built once).
    matmul_precision: HIGHEST by default (atol=1e-5 budget); Precision.HIGH is
    the one-line knob for v5e/v6e if the accuracy budget allows (~2x fewer MXU
    passes) — re-validate against the reference when changing it.
    Returns (out, None) with out: (B, H, O, L) float32.
    """
    F4, W4, A4 = operators["F4"], operators["W4"], operators["A4"]
    H, E, O, M, L = operators["dims"]
    M4 = 4 * M

    if q_channels_first:
        x = q.astype(jnp.float32)                                   # (B, E*H, L)
        B = x.shape[0]
        assert x.shape == (B, E * H, L)
    else:
        B, Lq, Hq, Eq = q.shape
        assert (Lq, Hq, Eq) == (L, H, E)
        # TODO(synk): produce q upstream in (B, E*H, L) layout so this transpose
        # (a full activation HBM round-trip) disappears at production sizes.
        x = jnp.transpose(q, (0, 3, 2, 1)).astype(jnp.float32).reshape(B, E * H, L)

    # VMEM budgeting: resident operators (F4, W4, A4) + double-buffered x/out.
    operator_bytes = 4 * (2 * L * M4 + E * H * O * M4)
    stream_bytes = 4 * 2 * (E * H * L + H * O * L)
    vmem_limit = int(min(max(2 * (operator_bytes + stream_bytes), 32 << 20),
                         64 << 20))
    single_buffer = operator_bytes >= (8 << 20)   # only worth it when big

    flops = 2 * B * M4 * (E * H * L + E * H * O + H * O * L)
    bytes_accessed = 4 * (B * E * H * L + B * H * O * L) + operator_bytes

    out2 = pl.pallas_call(
        partial(_fourier_block_kernel, precision=matmul_precision),
        out_shape=jax.ShapeDtypeStruct((B, H * O, L), jnp.float32),
        grid=(B,),
        in_specs=[
            pl.BlockSpec((1, E * H, L), lambda b: (b, 0, 0)),            # x (per batch)
            _maybe_single_buffered((L, M4), lambda b: (0, 0), single_buffer),        # F4
            _maybe_single_buffered((E, H, O, M4), lambda b: (0, 0, 0, 0), single_buffer),  # W4
            _maybe_single_buffered((M4, L), lambda b: (0, 0), single_buffer),        # A4
        ],
        out_specs=pl.BlockSpec((1, H * O, L), lambda b: (b, 0, 0)),
        compiler_params=pltpu.CompilerParams(
            dimension_semantics=("parallel",),       # batch steps across TCs
            vmem_limit_bytes=vmem_limit),
        cost_estimate=pl.CostEstimate(flops=int(flops), transcendentals=0,
                                      bytes_accessed=int(bytes_accessed)),
    )(x, F4, W4, A4)

    # rows (h, o) -> (B, H, O, L): free reshape, no HBM transpose.
    out = out2.reshape(B, H, O, L)
    return out, None


# ----------------------------------------------------------------------------
# Pure-JAX reference (mirrors the PyTorch forward exactly)
# ----------------------------------------------------------------------------
def fourier_block_reference(q, w_real, w_imag, index):
    B, L, H, E = q.shape
    O = w_real.shape[2]
    x = jnp.transpose(q, (0, 2, 3, 1)).astype(jnp.float32)           # (B, H, E, L)
    x_ft = jnp.fft.rfft(x, axis=-1)
    W = (w_real + 1j * w_imag).astype(jnp.complex64)                 # (H, E, O, M)
    out_ft = jnp.zeros((B, H, O, L // 2 + 1), dtype=jnp.complex64)
    for wi, i in enumerate(index):
        out_ft = out_ft.at[:, :, :, wi].set(
            jnp.einsum('bhe,heo->bho', x_ft[:, :, :, i], W[:, :, :, wi]))
    return jnp.fft.irfft(out_ft, n=L, axis=-1)


if __name__ == "__main__":
    np.random.seed(0)  # deterministic 'random' mode selection

    B, L, H = 2, 16, 8
    in_channels = 32
    out_channels = 32
    E = in_channels // 8        # 4
    O = out_channels // 8       # 4
    modes = 4
    index = get_frequency_modes(L, modes=modes, mode_select_method='random')
    M = len(index)

    key = jax.random.PRNGKey(0)
    kq, kr, ki = jax.random.split(key, 3)
    q = jax.random.normal(kq, (B, L, H, E), dtype=jnp.float32)

    # weights1 = scale * torch.rand(8, in//8, out//8, M, dtype=cfloat)
    scale = 1.0 / (in_channels * out_channels)
    w_real = scale * jax.random.uniform(kr, (8, E, O, M), dtype=jnp.float32)
    w_imag = scale * jax.random.uniform(ki, (8, E, O, M), dtype=jnp.float32)

    # Parameter-prep: fused operators are built ONCE here, not per forward call.
    ops = prepare_fourier_block_operators(w_real, w_imag, index, L)

    out, _ = fourier_block_forward(q, ops)
    out = jax.block_until_ready(out)

    ref = fourier_block_reference(q, w_real, w_imag, index)
    np.testing.assert_allclose(np.asarray(out), np.asarray(ref),
                               rtol=5e-3, atol=1e-5)
    print("KERNEL_OK")
</pallas_src>

<mosaic_0001>
module attributes {stable_mosaic.version = 11 : i64} {
  func.func @_fourier_block_kernel(%arg0: i32, %arg1: memref<1x32x16xf32, #tpu.memory_space<vmem>>, %arg2: memref<16x16xf32, #tpu.memory_space<vmem>>, %arg3: memref<4x8x4x16xf32, #tpu.memory_space<vmem>>, %arg4: memref<16x16xf32, #tpu.memory_space<vmem>>, %arg5: memref<1x32x16xf32, #tpu.memory_space<vmem>>) attributes {dimension_semantics = [#tpu.dimension_semantics<parallel>], iteration_bounds = array<i64: 2>, scalar_prefetch = 0 : i64, scratch_operands = 0 : i64, tpu.core_type = #tpu.core_type<tc>, window_params = [{transform_indices = @transform_0, window_bounds = array<i64: 1, 32, 16>}, {pipeline_mode = #tpu.pipeline_mode<synchronous>, transform_indices = @transform_1, window_bounds = array<i64: 16, 16>}, {pipeline_mode = #tpu.pipeline_mode<synchronous>, transform_indices = @transform_2, window_bounds = array<i64: 4, 8, 4, 16>}, {pipeline_mode = #tpu.pipeline_mode<synchronous>, transform_indices = @transform_3, window_bounds = array<i64: 16, 16>}, {transform_indices = @transform_4, window_bounds = array<i64: 1, 32, 16>}]} {
    %c0 = arith.constant 0 : index
    %c0_0 = arith.constant 0 : index
    %c0_1 = arith.constant 0 : index
    %0 = vector.load %arg1[%c0, %c0_0, %c0_1] : memref<1x32x16xf32, #tpu.memory_space<vmem>>, vector<1x32x16xf32>
    %1 = vector.shape_cast %0 : vector<1x32x16xf32> to vector<32x16xf32>
    %c0_2 = arith.constant 0 : index
    %c0_3 = arith.constant 0 : index
    %2 = vector.load %arg2[%c0_2, %c0_3] : memref<16x16xf32, #tpu.memory_space<vmem>>, vector<16x16xf32>
    %cst = arith.constant dense<0.000000e+00> : vector<32x16xf32>
    %3 = tpu.matmul %1, %2, %cst {dimension_numbers = #tpu.dot_dimension_numbers<[1], [0], [0], [1], [0, 0, 1, 1], [], []>, precision = #tpu.contract_precision<fp32>} : vector<32x16xf32>, vector<16x16xf32>, vector<32x16xf32> -> vector<32x16xf32>
    %4 = vector.extract_strided_slice %3 {offsets = [0, 0], sizes = [8, 16], strides = [1, 1]} : vector<32x16xf32> to vector<8x16xf32>
    %5 = vector.shape_cast %4 : vector<8x16xf32> to vector<8x1x16xf32>
    %c0_4 = arith.constant 0 : index
    %c0_5 = arith.constant 0 : index
    %c0_6 = arith.constant 0 : index
    %c0_7 = arith.constant 0 : index
    %6 = vector.load %arg3[%c0_4, %c0_5, %c0_6, %c0_7] : memref<4x8x4x16xf32, #tpu.memory_space<vmem>>, vector<1x8x4x16xf32>
    %7 = vector.shape_cast %6 : vector<1x8x4x16xf32> to vector<8x4x16xf32>
    %8 = vector.broadcast %5 : vector<8x1x16xf32> to vector<8x4x16xf32>
    %9 = arith.mulf %8, %7 : vector<8x4x16xf32>
    %10 = vector.extract_strided_slice %3 {offsets = [8, 0], sizes = [8, 16], strides = [1, 1]} : vector<32x16xf32> to vector<8x16xf32>
    %11 = vector.shape_cast %10 : vector<8x16xf32> to vector<8x1x16xf32>
    %c1 = arith.constant 1 : index
    %c0_8 = arith.constant 0 : index
    %c0_9 = arith.constant 0 : index
    %c0_10 = arith.constant 0 : index
    %12 = vector.load %arg3[%c1, %c0_8, %c0_9, %c0_10] : memref<4x8x4x16xf32, #tpu.memory_space<vmem>>, vector<1x8x4x16xf32>
    %13 = vector.shape_cast %12 : vector<1x8x4x16xf32> to vector<8x4x16xf32>
    %14 = vector.broadcast %11 : vector<8x1x16xf32> to vector<8x4x16xf32>
    %15 = arith.mulf %14, %13 : vector<8x4x16xf32>
    %16 = arith.addf %9, %15 : vector<8x4x16xf32>
    %17 = vector.extract_strided_slice %3 {offsets = [16, 0], sizes = [8, 16], strides = [1, 1]} : vector<32x16xf32> to vector<8x16xf32>
    %18 = vector.shape_cast %17 : vector<8x16xf32> to vector<8x1x16xf32>
    %c2 = arith.constant 2 : index
    %c0_11 = arith.constant 0 : index
    %c0_12 = arith.constant 0 : index
    %c0_13 = arith.constant 0 : index
    %19 = vector.load %arg3[%c2, %c0_11, %c0_12, %c0_13] : memref<4x8x4x16xf32, #tpu.memory_space<vmem>>, vector<1x8x4x16xf32>
    %20 = vector.shape_cast %19 : vector<1x8x4x16xf32> to vector<8x4x16xf32>
    %21 = vector.broadcast %18 : vector<8x1x16xf32> to vector<8x4x16xf32>
    %22 = arith.mulf %21, %20 : vector<8x4x16xf32>
    %23 = arith.addf %16, %22 : vector<8x4x16xf32>
    %24 = vector.extract_strided_slice %3 {offsets = [24, 0], sizes = [8, 16], strides = [1, 1]} : vector<32x16xf32> to vector<8x16xf32>
    %25 = vector.shape_cast %24 : vector<8x16xf32> to vector<8x1x16xf32>
    %c3 = arith.constant 3 : index
    %c0_14 = arith.constant 0 : index
    %c0_15 = arith.constant 0 : index
    %c0_16 = arith.constant 0 : index
    %26 = vector.load %arg3[%c3, %c0_14, %c0_15, %c0_16] : memref<4x8x4x16xf32, #tpu.memory_space<vmem>>, vector<1x8x4x16xf32>
    %27 = vector.shape_cast %26 : vector<1x8x4x16xf32> to vector<8x4x16xf32>
    %28 = vector.broadcast %25 : vector<8x1x16xf32> to vector<8x4x16xf32>
    %29 = arith.mulf %28, %27 : vector<8x4x16xf32>
    %30 = arith.addf %23, %29 : vector<8x4x16xf32>
    %c0_17 = arith.constant 0 : index
    %c0_18 = arith.constant 0 : index
    %31 = vector.load %arg4[%c0_17, %c0_18] : memref<16x16xf32, #tpu.memory_space<vmem>>, vector<16x16xf32>
    %32 = vector.extract_strided_slice %30 {offsets = [0, 0, 0], sizes = [1, 4, 16], strides = [1, 1, 1]} : vector<8x4x16xf32> to vector<1x4x16xf32>
    %33 = vector.shape_cast %32 : vector<1x4x16xf32> to vector<4x16xf32>
    %cst_19 = arith.constant dense<0.000000e+00> : vector<4x16xf32>
    %34 = tpu.matmul %33, %31, %cst_19 {dimension_numbers = #tpu.dot_dimension_numbers<[1], [0], [0], [1], [0, 0, 1, 1], [], []>, precision = #tpu.contract_precision<fp32>} : vector<4x16xf32>, vector<16x16xf32>, vector<4x16xf32> -> vector<4x16xf32>
    %c0_20 = arith.constant 0 : index
    %c0_21 = arith.constant 0 : index
    %c0_22 = arith.constant 0 : index
    %35 = vector.load %arg5[%c0_20, %c0_21, %c0_22] : memref<1x32x16xf32, #tpu.memory_space<vmem>>, vector<1x4x16xf32>
    %36 = vector.shape_cast %35 : vector<1x4x16xf32> to vector<4x16xf32>
    %37 = vector.shape_cast %34 : vector<4x16xf32> to vector<1x4x16xf32>
    tpu.vector_store %arg5[%c0_20, %c0_21, %c0_22], %37 {strides = array<i32>} : memref<1x32x16xf32, #tpu.memory_space<vmem>>, vector<1x4x16xf32>,
    %38 = vector.extract_strided_slice %30 {offsets = [1, 0, 0], sizes = [1, 4, 16], strides = [1, 1, 1]} : vector<8x4x16xf32> to vector<1x4x16xf32>
    %39 = vector.shape_cast %38 : vector<1x4x16xf32> to vector<4x16xf32>
    %cst_23 = arith.constant dense<0.000000e+00> : vector<4x16xf32>
    %40 = tpu.matmul %39, %31, %cst_23 {dimension_numbers = #tpu.dot_dimension_numbers<[1], [0], [0], [1], [0, 0, 1, 1], [], []>, precision = #tpu.contract_precision<fp32>} : vector<4x16xf32>, vector<16x16xf32>, vector<4x16xf32> -> vector<4x16xf32>
    %c0_24 = arith.constant 0 : index
    %c4 = arith.constant 4 : index
    %c0_25 = arith.constant 0 : index
    %41 = vector.load %arg5[%c0_24, %c4, %c0_25] : memref<1x32x16xf32, #tpu.memory_space<vmem>>, vector<1x4x16xf32>
    %42 = vector.shape_cast %41 : vector<1x4x16xf32> to vector<4x16xf32>
    %43 = vector.shape_cast %40 : vector<4x16xf32> to vector<1x4x16xf32>
    tpu.vector_store %arg5[%c0_24, %c4, %c0_25], %43 {strides = array<i32>} : memref<1x32x16xf32, #tpu.memory_space<vmem>>, vector<1x4x16xf32>,
    %44 = vector.extract_strided_slice %30 {offsets = [2, 0, 0], sizes = [1, 4, 16], strides = [1, 1, 1]} : vector<8x4x16xf32> to vector<1x4x16xf32>
    %45 = vector.shape_cast %44 : vector<1x4x16xf32> to vector<4x16xf32>
    %cst_26 = arith.constant dense<0.000000e+00> : vector<4x16xf32>
    %46 = tpu.matmul %45, %31, %cst_26 {dimension_numbers = #tpu.dot_dimension_numbers<[1], [0], [0], [1], [0, 0, 1, 1], [], []>, precision = #tpu.contract_precision<fp32>} : vector<4x16xf32>, vector<16x16xf32>, vector<4x16xf32> -> vector<4x16xf32>
    %c0_27 = arith.constant 0 : index
    %c8 = arith.constant 8 : index
    %c0_28 = arith.constant 0 : index
    %47 = vector.load %arg5[%c0_27, %c8, %c0_28] : memref<1x32x16xf32, #tpu.memory_space<vmem>>, vector<1x4x16xf32>
    %48 = vector.shape_cast %47 : vector<1x4x16xf32> to vector<4x16xf32>
    %49 = vector.shape_cast %46 : vector<4x16xf32> to vector<1x4x16xf32>
    tpu.vector_store %arg5[%c0_27, %c8, %c0_28], %49 {strides = array<i32>} : memref<1x32x16xf32, #tpu.memory_space<vmem>>, vector<1x4x16xf32>,
    %50 = vector.extract_strided_slice %30 {offsets = [3, 0, 0], sizes = [1, 4, 16], strides = [1, 1, 1]} : vector<8x4x16xf32> to vector<1x4x16xf32>
    %51 = vector.shape_cast %50 : vector<1x4x16xf32> to vector<4x16xf32>
    %cst_29 = arith.constant dense<0.000000e+00> : vector<4x16xf32>
    %52 = tpu.matmul %51, %31, %cst_29 {dimension_numbers = #tpu.dot_dimension_numbers<[1], [0], [0], [1], [0, 0, 1, 1], [], []>, precision = #tpu.contract_precision<fp32>} : vector<4x16xf32>, vector<16x16xf32>, vector<4x16xf32> -> vector<4x16xf32>
    %c0_30 = arith.constant 0 : index
    %c12 = arith.constant 12 : index
    %c0_31 = arith.constant 0 : index
    %53 = vector.load %arg5[%c0_30, %c12, %c0_31] : memref<1x32x16xf32, #tpu.memory_space<vmem>>, vector<1x4x16xf32>
    %54 = vector.shape_cast %53 : vector<1x4x16xf32> to vector<4x16xf32>
    %55 = vector.shape_cast %52 : vector<4x16xf32> to vector<1x4x16xf32>
    tpu.vector_store %arg5[%c0_30, %c12, %c0_31], %55 {strides = array<i32>} : memref<1x32x16xf32, #tpu.memory_space<vmem>>, vector<1x4x16xf32>,
    %56 = vector.extract_strided_slice %30 {offsets = [4, 0, 0], sizes = [1, 4, 16], strides = [1, 1, 1]} : vector<8x4x16xf32> to vector<1x4x16xf32>
    %57 = vector.shape_cast %56 : vector<1x4x16xf32> to vector<4x16xf32>
    %cst_32 = arith.constant dense<0.000000e+00> : vector<4x16xf32>
    %58 = tpu.matmul %57, %31, %cst_32 {dimension_numbers = #tpu.dot_dimension_numbers<[1], [0], [0], [1], [0, 0, 1, 1], [], []>, precision = #tpu.contract_precision<fp32>} : vector<4x16xf32>, vector<16x16xf32>, vector<4x16xf32> -> vector<4x16xf32>
    %c0_33 = arith.constant 0 : index
    %c16 = arith.constant 16 : index
    %c0_34 = arith.constant 0 : index
    %59 = vector.load %arg5[%c0_33, %c16, %c0_34] : memref<1x32x16xf32, #tpu.memory_space<vmem>>, vector<1x4x16xf32>
    %60 = vector.shape_cast %59 : vector<1x4x16xf32> to vector<4x16xf32>
    %61 = vector.shape_cast %58 : vector<4x16xf32> to vector<1x4x16xf32>
    tpu.vector_store %arg5[%c0_33, %c16, %c0_34], %61 {strides = array<i32>} : memref<1x32x16xf32, #tpu.memory_space<vmem>>, vector<1x4x16xf32>,
    %62 = vector.extract_strided_slice %30 {offsets = [5, 0, 0], sizes = [1, 4, 16], strides = [1, 1, 1]} : vector<8x4x16xf32> to vector<1x4x16xf32>
    %63 = vector.shape_cast %62 : vector<1x4x16xf32> to vector<4x16xf32>
    %cst_35 = arith.constant dense<0.000000e+00> : vector<4x16xf32>
    %64 = tpu.matmul %63, %31, %cst_35 {dimension_numbers = #tpu.dot_dimension_numbers<[1], [0], [0], [1], [0, 0, 1, 1], [], []>, precision = #tpu.contract_precision<fp32>} : vector<4x16xf32>, vector<16x16xf32>, vector<4x16xf32> -> vector<4x16xf32>
    %c0_36 = arith.constant 0 : index
    %c20 = arith.constant 20 : index
    %c0_37 = arith.constant 0 : index
    %65 = vector.load %arg5[%c0_36, %c20, %c0_37] : memref<1x32x16xf32, #tpu.memory_space<vmem>>, vector<1x4x16xf32>
    %66 = vector.shape_cast %65 : vector<1x4x16xf32> to vector<4x16xf32>
    %67 = vector.shape_cast %64 : vector<4x16xf32> to vector<1x4x16xf32>
    tpu.vector_store %arg5[%c0_36, %c20, %c0_37], %67 {strides = array<i32>} : memref<1x32x16xf32, #tpu.memory_space<vmem>>, vector<1x4x16xf32>,
    %68 = vector.extract_strided_slice %30 {offsets = [6, 0, 0], sizes = [1, 4, 16], strides = [1, 1, 1]} : vector<8x4x16xf32> to vector<1x4x16xf32>
    %69 = vector.shape_cast %68 : vector<1x4x16xf32> to vector<4x16xf32>
    %cst_38 = arith.constant dense<0.000000e+00> : vector<4x16xf32>
    %70 = tpu.matmul %69, %31, %cst_38 {dimension_numbers = #tpu.dot_dimension_numbers<[1], [0], [0], [1], [0, 0, 1, 1], [], []>, precision = #tpu.contract_precision<fp32>} : vector<4x16xf32>, vector<16x16xf32>, vector<4x16xf32> -> vector<4x16xf32>
    %c0_39 = arith.constant 0 : index
    %c24 = arith.constant 24 : index
    %c0_40 = arith.constant 0 : index
    %71 = vector.load %arg5[%c0_39, %c24, %c0_40] : memref<1x32x16xf32, #tpu.memory_space<vmem>>, vector<1x4x16xf32>
    %72 = vector.shape_cast %71 : vector<1x4x16xf32> to vector<4x16xf32>
    %73 = vector.shape_cast %70 : vector<4x16xf32> to vector<1x4x16xf32>
    tpu.vector_store %arg5[%c0_39, %c24, %c0_40], %73 {strides = array<i32>} : memref<1x32x16xf32, #tpu.memory_space<vmem>>, vector<1x4x16xf32>,
    %74 = vector.extract_strided_slice %30 {offsets = [7, 0, 0], sizes = [1, 4, 16], strides = [1, 1, 1]} : vector<8x4x16xf32> to vector<1x4x16xf32>
    %75 = vector.shape_cast %74 : vector<1x4x16xf32> to vector<4x16xf32>
    %cst_41 = arith.constant dense<0.000000e+00> : vector<4x16xf32>
    %76 = tpu.matmul %75, %31, %cst_41 {dimension_numbers = #tpu.dot_dimension_numbers<[1], [0], [0], [1], [0, 0, 1, 1], [], []>, precision = #tpu.contract_precision<fp32>} : vector<4x16xf32>, vector<16x16xf32>, vector<4x16xf32> -> vector<4x16xf32>
    %c0_42 = arith.constant 0 : index
    %c28 = arith.constant 28 : index
    %c0_43 = arith.constant 0 : index
    %77 = vector.load %arg5[%c0_42, %c28, %c0_43] : memref<1x32x16xf32, #tpu.memory_space<vmem>>, vector<1x4x16xf32>
    %78 = vector.shape_cast %77 : vector<1x4x16xf32> to vector<4x16xf32>
    %79 = vector.shape_cast %76 : vector<4x16xf32> to vector<1x4x16xf32>
    tpu.vector_store %arg5[%c0_42, %c28, %c0_43], %79 {strides = array<i32>} : memref<1x32x16xf32, #tpu.memory_space<vmem>>, vector<1x4x16xf32>,
    return
  }
  func.func @transform_0(%arg0: i32) -> (i32, i32, i32) {
    %c0_i32 = arith.constant 0 : i32
    %c0_i32_0 = arith.constant 0 : i32
    %c0_i32_1 = arith.constant 0 : i32
    return %arg0, %c0_i32, %c0_i32_0 : i32, i32, i32
  }
  func.func @transform_1(%arg0: i32) -> (i32, i32) {
    %c0_i32 = arith.constant 0 : i32
    %c0_i32_0 = arith.constant 0 : i32
    %c0_i32_1 = arith.constant 0 : i32
    return %c0_i32, %c0_i32_0 : i32, i32
  }
  func.func @transform_2(%arg0: i32) -> (i32, i32, i32, i32) {
    %c0_i32 = arith.constant 0 : i32
    %c0_i32_0 = arith.constant 0 : i32
    %c0_i32_1 = arith.constant 0 : i32
    %c0_i32_2 = arith.constant 0 : i32
    %c0_i32_3 = arith.constant 0 : i32
    return %c0_i32, %c0_i32_0, %c0_i32_1, %c0_i32_2 : i32, i32, i32, i32
  }
  func.func @transform_3(%arg0: i32) -> (i32, i32) {
    %c0_i32 = arith.constant 0 : i32
    %c0_i32_0 = arith.constant 0 : i32
    %c0_i32_1 = arith.constant 0 : i32
    return %c0_i32, %c0_i32_0 : i32, i32
  }
  func.func @transform_4(%arg0: i32) -> (i32, i32, i32) {
    %c0_i32 = arith.constant 0 : i32
    %c0_i32_0 = arith.constant 0 : i32
    %c0_i32_1 = arith.constant 0 : i32
    return %arg0, %c0_i32, %c0_i32_0 : i32, i32, i32
  }
}

</mosaic_0001>

<llo_original>
// kernel: tpu_custom_call.1
$region0: #{tpu_custom_call.1}
  #allocation0 [shape = 'u32[]', space=smem, size = 0x4, offset = 0x4, fixed_abs, tag = 'smem constant byte address 0x4 - core index']
  #allocation1 [shape = 'u32[144,128]{1,0:T(1,128)}', space=vmem, size = 0x12000, scoped, tag = 'internal scratch']
  %s0 = inlined_call_operand.vmem [shape: f32[2,32,16], index: 0, kind: input, shape index: {}]
  %s1 = inlined_call_operand.vmem [shape: f32[16,16], index: 1, kind: input, shape index: {}]
  %s2 = inlined_call_operand.hbm [shape: f32[4,8,4,16], index: 2, kind: input, shape index: {}]
  %s3 = inlined_call_operand.vmem [shape: f32[16,16], index: 3, kind: input, shape index: {}]
  %s4 = inlined_call_operand.vmem [shape: f32[2,32,16], index: 4, kind: output, shape index: {}]
  %s5 = sld [smem:[#allocation0]]
  $region53: #{tpu_custom_call.1} parent=0
    _
  %s7 = ssub.s32 1, %s5
  %s8 = scalar_select 0, %s7, %s5
  $region1: #{tpu_custom_call.1} parent=0
    #allocation2 [shape = 'u8[65536]{0}', space=vmem, size = 0x10000, scoped, tag = 'input window, operand 2, single buffered']
    #allocation3 [shape = 's32[2]{0}', space=sflag, size = 0x8, scoped, tag = 'scoped memory for tpu_custom_call.1']
    %9 = vsyncpa [#allocation3], 0
    loop: start=0, step=1, limit=4
    $region2: #{tpu_custom_call.1} parent=1 // loop_pre_header
      _
    $region3: #{tpu_custom_call.1} parent=1 // loop_header
      %s11 = sphi 0, %s15
      %p12 = scmp.ge.s32.totalorder %s11, 4
      %s21 = sphi 0, %s23
      %s24 = sphi 0, %s21
      %s25 = sphi 0, %s24
      %s41 = sphi 0, %s25
      %s45 = sphi 0, %s45
      %s47 = sphi 0, %s45
      %s48 = sphi 0, %s47
      %s62 = sphi 0, %s48
      %s66 = sphi 0, %s66
      %s68 = sphi 0, %s66
      %s69 = sphi 0, %s68
      %s83 = sphi 0, %s69
      %s87 = sphi 0, %s87
      %s89 = sphi 0, %s87
      %s90 = sphi 0, %s89
      %s104 = sphi 0, %s90
      %s110 = sphi 0, %s112
      %s113 = sphi 0, %s110
      %s114 = sphi 0, %s113
      %s130 = sphi 0, %s114
    $region4: #{tpu_custom_call.1} parent=1 // loop_header_branch
      %14 = sbr.rel (%p12) target = $region8
    $region5: #{tpu_custom_call.1} parent=1 // loop_body
      %s16 = ssub.s32 %s11, 1
      %s17 = ssub.s32 %s11, 2
      %s18 = sadd.s32 %s11, 1
      %s19 = ssub.s32 %s11, %s18
      %p20 = scmp.eq.s32.totalorder %s19, 0
      %s22 = sadd.s32 %s21, 1
      %s23 = scalar_select %p20, %s21, %s22
      %p26 = pneg %p20
      %p27 = scmp.eq.s32.totalorder %s11, 1
      %p28 = por %p26, %p27
      %p29 = scmp.ne.s32.totalorder %s21, %s24
      %p30 = scmp.eq.s32.totalorder %s11, 0
      %p31 = por %p29, %p30
      %p32 = scmp.ne.s32.totalorder %s21, %s24
      %p33 = scmp.eq.s32.totalorder %s16, 1
      %p34 = por %p32, %p33
      %p35 = scmp.ne.s32.totalorder %s24, %s25
      %p36 = scmp.eq.s32.totalorder %s16, 0
      %p37 = por %p35, %p36
      %p38 = scmp.ne.s32.totalorder %s24, %s25
      %p39 = scmp.eq.s32.totalorder %s17, 1
      %p40 = por %p38, %p39
      %p42 = scmp.ne.s32.totalorder %s25, %s41
      %p43 = scmp.eq.s32.totalorder %s17, 0
      %p44 = por %p42, %p43
      %s46 = sadd.s32 %s45, 1
      %p49 = scmp.eq.s32.totalorder %s11, 1
      %p50 = scmp.ne.s32.totalorder %s45, %s47
      %p51 = scmp.eq.s32.totalorder %s11, 0
      %p52 = por %p50, %p51
      %p53 = scmp.ne.s32.totalorder %s45, %s47
      %p54 = scmp.eq.s32.totalorder %s16, 1
      %p55 = por %p53, %p54
      %p56 = scmp.ne.s32.totalorder %s47, %s48
      %p57 = scmp.eq.s32.totalorder %s16, 0
      %p58 = por %p56, %p57
      %p59 = scmp.ne.s32.totalorder %s47, %s48
      %p60 = scmp.eq.s32.totalorder %s17, 1
      %p61 = por %p59, %p60
      %p63 = scmp.ne.s32.totalorder %s48, %s62
      %p64 = scmp.eq.s32.totalorder %s17, 0
      %p65 = por %p63, %p64
      %s67 = sadd.s32 %s66, 1
      %p70 = scmp.eq.s32.totalorder %s11, 1
      %p71 = scmp.ne.s32.totalorder %s66, %s68
      %p72 = scmp.eq.s32.totalorder %s11, 0
      %p73 = por %p71, %p72
      %p74 = scmp.ne.s32.totalorder %s66, %s68
      %p75 = scmp.eq.s32.totalorder %s16, 1
      %p76 = por %p74, %p75
      %p77 = scmp.ne.s32.totalorder %s68, %s69
      %p78 = scmp.eq.s32.totalorder %s16, 0
      %p79 = por %p77, %p78
      %p80 = scmp.ne.s32.totalorder %s68, %s69
      %p81 = scmp.eq.s32.totalorder %s17, 1
      %p82 = por %p80, %p81
      %p84 = scmp.ne.s32.totalorder %s69, %s83
      %p85 = scmp.eq.s32.totalorder %s17, 0
      %p86 = por %p84, %p85
      %s88 = sadd.s32 %s87, 1
      %p91 = scmp.eq.s32.totalorder %s11, 1
      %p92 = scmp.ne.s32.totalorder %s87, %s89
      %p93 = scmp.eq.s32.totalorder %s11, 0
      %p94 = por %p92, %p93
      %p95 = scmp.ne.s32.totalorder %s87, %s89
      %p96 = scmp.eq.s32.totalorder %s16, 1
      %p97 = por %p95, %p96
      %p98 = scmp.ne.s32.totalorder %s89, %s90
      %p99 = scmp.eq.s32.totalorder %s16, 0
      %p100 = por %p98, %p99
      %p101 = scmp.ne.s32.totalorder %s89, %s90
      %p102 = scmp.eq.s32.totalorder %s17, 1
      %p103 = por %p101, %p102
      %p105 = scmp.ne.s32.totalorder %s90, %s104
      %p106 = scmp.eq.s32.totalorder %s17, 0
      %p107 = por %p105, %p106
      %s108 = ssub.s32 %s11, %s18
      %p109 = scmp.eq.s32.totalorder %s108, 0
      %s111 = sadd.s32 %s110, 1
      %s112 = scalar_select %p109, %s110, %s111
      %p115 = pneg %p109
      %p116 = scmp.eq.s32.totalorder %s11, 1
      %p117 = por %p115, %p116
      %p118 = scmp.ne.s32.totalorder %s110, %s113
      %p119 = scmp.eq.s32.totalorder %s11, 0
      %p120 = por %p118, %p119
      %p121 = scmp.ne.s32.totalorder %s110, %s113
      %p122 = scmp.eq.s32.totalorder %s16, 1
      %p123 = por %p121, %p122
      %p124 = scmp.ne.s32.totalorder %s113, %s114
      %p125 = scmp.eq.s32.totalorder %s16, 0
      %p126 = por %p124, %p125
      %p127 = scmp.ne.s32.totalorder %s113, %s114
      %p128 = scmp.eq.s32.totalorder %s17, 1
      %p129 = por %p127, %p128
      %p131 = scmp.ne.s32.totalorder %s114, %s130
      %p132 = scmp.eq.s32.totalorder %s17, 0
      %p133 = por %p131, %p132
      %p134 = scmp.le.s32.totalorder 1, %s11
      %p135 = scmp.lt.s32.totalorder %s11, 3
      %p136 = pnand %p134, %p135
      %p137 = pneg %p136
      // Predicated region
      $region9: #{tpu_custom_call.1} parent=5 // pred_check
        _
      $region10: #{tpu_custom_call.1} parent=5 // pred_check_branch
        %139 = sbr.rel (%p136) target = $region12
      $region11: #{tpu_custom_call.1} parent=5 // pred_region
        %s140 = ssub.s32 %s11, 1
        // Predicated region
        $region13: #{tpu_custom_call.1} parent=11 // pred_check
          %p141 = pneg %p58
        $region14: #{tpu_custom_call.1} parent=11 // pred_check_branch
          %143 = sbr.rel (%p141) target = $region16
        $region15: #{tpu_custom_call.1} parent=11 // pred_region
          _
        $region16: #{tpu_custom_call.1} parent=11 // pred_fallthru
          _
        // Predicated region
        $region17: #{tpu_custom_call.1} parent=11 // pred_check
          %p144 = pneg %p79
        $region18: #{tpu_custom_call.1} parent=11 // pred_check_branch
          %146 = sbr.rel (%p144) target = $region20
        $region19: #{tpu_custom_call.1} parent=11 // pred_region
          %s148 = ssub.s32 2048, 2048
          %149 = vsyncadd [#allocation3], %s148
          %s150 = sshll.u32 [#allocation2], 4
          %s151 = int_to_ptr.vmem [resolvable:$true] %s150
          %156 = dma.hbm_to_vmem [thread:$0]  %s2, 2048, %s151, [#allocation3], 64, 64, 4
        $region20: #{tpu_custom_call.1} parent=11 // pred_fallthru
          _
        // Predicated region
        $region21: #{tpu_custom_call.1} parent=11 // pred_check
          %p157 = pneg %p100
        $region22: #{tpu_custom_call.1} parent=11 // pred_check_branch
          %159 = sbr.rel (%p157) target = $region24
        $region23: #{tpu_custom_call.1} parent=11 // pred_region
          _
        $region24: #{tpu_custom_call.1} parent=11 // pred_fallthru
          _
      $region12: #{tpu_custom_call.1} parent=5 // pred_fallthru
        _
      %p160 = scmp.lt.s32.totalorder %s11, 2
      // Predicated region
      $region25: #{tpu_custom_call.1} parent=5 // pred_check
        %p161 = pneg %p160
      $region26: #{tpu_custom_call.1} parent=5 // pred_check_branch
        %163 = sbr.rel (%p161) target = $region28
      $region27: #{tpu_custom_call.1} parent=5 // pred_region
        // Predicated region
        $region29: #{tpu_custom_call.1} parent=27 // pred_check
          %p164 = pneg %p31
        $region30: #{tpu_custom_call.1} parent=27 // pred_check_branch
          %166 = sbr.rel (%p164) target = $region32
        $region31: #{tpu_custom_call.1} parent=27 // pred_region
          %p167 = scmp.lt.s32.totalorder %s11, 1
          %s168 = scalar_select %p167, %s11, 1
          %s169 = smul.addr %s168, 4
          %s170 = smul.addr %s169, 8
          %s171 = scalar_lea.vmem %s0, %s170
        $region32: #{tpu_custom_call.1} parent=27 // pred_fallthru
          _
      $region28: #{tpu_custom_call.1} parent=5 // pred_fallthru
        _
      %p172 = scmp.le.s32.totalorder 1, %s11
      %p173 = scmp.lt.s32.totalorder %s11, 3
      %p174 = pnand %p172, %p173
      %p175 = pneg %p174
      // Predicated region
      $region33: #{tpu_custom_call.1} parent=5 // pred_check
        _
      $region34: #{tpu_custom_call.1} parent=5 // pred_check_branch
        %177 = sbr.rel (%p174) target = $region36
      $region35: #{tpu_custom_call.1} parent=5 // pred_region
        %s178 = ssub.s32 %s11, 1
        // Predicated region
        $region37: #{tpu_custom_call.1} parent=35 // pred_check
          %p179 = pneg %p79
        $region38: #{tpu_custom_call.1} parent=35 // pred_check_branch
          %181 = sbr.rel (%p179) target = $region40
        $region39: #{tpu_custom_call.1} parent=35 // pred_region
          %182 = dma.done [#allocation3], 2048
        $region40: #{tpu_custom_call.1} parent=35 // pred_fallthru
          _
        %p183 = scmp.lt.s32.totalorder %s16, 1
        %s184 = scalar_select %p183, %s16, 1
        %s185 = smul.addr %s184, 4
        %s186 = smul.addr %s185, 8
        %s187 = scalar_lea.vmem %s0, %s186
        %p188 = pneg %p37
        %p189 = pneg %p34
        %p190 = pneg %p58
        %p191 = pneg %p55
        %p192 = pneg %p79
        %p193 = pneg %p76
        %p194 = pneg %p100
        %p195 = pneg %p97
        %p196 = pneg %p126
        %p197 = pneg %p123
        %p198 = scmp.lt.s32.totalorder %s16, 1
        %s199 = scalar_select %p198, %s16, 1
        %s200 = smul.addr %s199, 4
        %s201 = smul.addr %s200, 8
        %s202 = scalar_lea.vmem %s4, %s201
        %p203 = scmp.lt.s32.totalorder %s16, 1
        %s204 = scalar_select %p203, %s16, 1
        %s205 = smul.addr %s204, 4
        %s206 = smul.addr %s205, 8
        %s207 = scalar_lea.vmem %s0, %s206
        %p208 = scmp.lt.s32.totalorder %s16, 1
        %s209 = scalar_select %p208, %s16, 1
        %s210 = smul.addr %s209, 4
        %s211 = smul.addr %s210, 8
        %s212 = scalar_lea.vmem %s4, %s211
        %v213 = vld [vmem:[%s207] sm:$0xff]
        %v214 = vld [vmem:[%s207 + $0x8] sm:$0xff]
        %v215 = vld [vmem:[%s207 + $0x10] sm:$0xff]
        %v216 = vld [vmem:[%s207 + $0x18] sm:$0xff]
        %v217 = vld [vmem:[%s1] sm:$0xff]
        %v218 = vld [vmem:[%s1 + $0x8] sm:$0xff]
        %vm219 = vcmask 130048
        %v221 = vsel %vm219, %v213, 0
        %v224 = vsel %vm219, %v214, 0
        %v227 = vsel %vm219, %v215, 0
        %v230 = vsel %vm219, %v216, 0
        %232 = vmatprep.subr.mxu0 0.0
        %233 = vmatpush1.msra.mxu0 0.0
        %234 = vmatprep.subr.mxu0 0.0
        %235 = vmatpush1.msra.mxu0 0.0
        %236 = vmatprep.subr.mxu0 0.0
        %237 = vmatpush1.msra.mxu0 0.0
        %238 = vmatprep.subr.mxu0 0.0
        %239 = vmatpush1.msra.mxu0 0.0
        %240 = vmatprep.subr.mxu0 0.0
        %241 = vmatpush1.msra.mxu0 0.0
        %242 = vmatprep.subr.mxu0 0.0
        %243 = vmatpush1.msra.mxu0 0.0
        %244 = vmatprep.subr.mxu0 0.0
        %245 = vmatpush1.msra.mxu0 0.0
        %246 = vmatprep.subr.mxu0 0.0
        %247 = vmatpush1.msra.mxu0 0.0
        %248 = vmatprep.subr.mxu0 0.0
        %249 = vmatpush1.msra.mxu0 0.0
        %250 = vmatprep.subr.mxu0 0.0
        %251 = vmatpush1.msra.mxu0 0.0
        %252 = vmatprep.subr.mxu0 0.0
        %253 = vmatpush1.msra.mxu0 0.0
        %254 = vmatprep.subr.mxu0 0.0
        %255 = vmatpush1.msra.mxu0 0.0
        %256 = vmatprep.subr.mxu0 0.0
        %257 = vmatpush1.msra.mxu0 0.0
        %258 = vmatprep.subr.mxu0 0.0
        %259 = vmatpush1.msra.mxu0 0.0
        %260 = vmatprep.subr.mxu0 0.0
        %v261 = vand.u32 %v218, 4294901760
        %262 = vmatpush1.msra.mxu0 %v261
        %263 = vmatprep.subr.mxu0 0.0
        %v264 = vand.u32 %v217, 4294901760
        %265 = vmatpush1.msra.mxu0 %v264
        %266 = vmatprep.subr.mxu0 0.0
        %267 = vmatpush2.msra.mxu0 0.0
        %268 = vmatprep.subr.mxu0 0.0
        %269 = vmatpush2.msra.mxu0 0.0
        %270 = vmatprep.subr.mxu0 0.0
        %271 = vmatpush2.msra.mxu0 0.0
        %272 = vmatprep.subr.mxu0 0.0
        %273 = vmatpush2.msra.mxu0 0.0
        %274 = vmatprep.subr.mxu0 0.0
        %275 = vmatpush2.msra.mxu0 0.0
        %276 = vmatprep.subr.mxu0 0.0
        %277 = vmatpush2.msra.mxu0 0.0
        %278 = vmatprep.subr.mxu0 0.0
        %279 = vmatpush2.msra.mxu0 0.0
        %280 = vmatprep.subr.mxu0 0.0
        %281 = vmatpush2.msra.mxu0 0.0
        %282 = vmatprep.subr.mxu0 0.0
        %283 = vmatpush2.msra.mxu0 0.0
        %284 = vmatprep.subr.mxu0 0.0
        %285 = vmatpush2.msra.mxu0 0.0
        %286 = vmatprep.subr.mxu0 0.0
        %287 = vmatpush2.msra.mxu0 0.0
        %288 = vmatprep.subr.mxu0 0.0
        %289 = vmatpush2.msra.mxu0 0.0
        %290 = vmatprep.subr.mxu0 0.0
        %291 = vmatpush2.msra.mxu0 0.0
        %292 = vmatprep.subr.mxu0 0.0
        %293 = vmatpush2.msra.mxu0 0.0
        %294 = vmatprep.subr.mxu0 0.0
        %295 = vmatpush2.msra.mxu0 0.0
        %296 = vmatprep.subr.mxu0 0.0
        %297 = vmatpush2.msra.mxu0 0.0
        %298 = vmatprep.mubr.f32.mxu0 0.0
        %v299 = vand.u32 %v221, 4294901760
        %v300 = vsub.f32 %v221, %v299
        %v301 = vand.u32 %v300, 4294901760
        %v302 = vsub.f32 %v300, %v301
        %v303 = vand.u32 %v302, 4294901760
        %304 = vmatmul.mubr.f32.gmra.mxu0 %v303
        %v305 = vpop.f32.mrf.mxu0
        %v306 = vadd.f32 0.0, %v305
        %v307 = vpop.f32.mrf.mxu0
        %308 = vmatprep.mubr.f32.mxu0 0.0
        %v309 = vand.u32 %v224, 4294901760
        %v310 = vsub.f32 %v224, %v309
        %v311 = vand.u32 %v310, 4294901760
        %v312 = vsub.f32 %v310, %v311
        %v313 = vand.u32 %v312, 4294901760
        %314 = vmatmul.mubr.f32.gmra.mxu0 %v313
        %v315 = vpop.f32.mrf.mxu0
        %v316 = vadd.f32 0.0, %v315
        %v317 = vpop.f32.mrf.mxu0
        %318 = vmatprep.mubr.f32.mxu0 0.0
        %v319 = vand.u32 %v227, 4294901760
        %v320 = vsub.f32 %v227, %v319
        %v321 = vand.u32 %v320, 4294901760
        %v322 = vsub.f32 %v320, %v321
        %v323 = vand.u32 %v322, 4294901760
        %324 = vmatmul.mubr.f32.gmra.mxu0 %v323
        %v325 = vpop.f32.mrf.mxu0
        %v326 = vadd.f32 0.0, %v325
        %v327 = vpop.f32.mrf.mxu0
        %328 = vmatprep.mubr.f32.mxu0 0.0
        %v329 = vand.u32 %v230, 4294901760
        %v330 = vsub.f32 %v230, %v329
        %v331 = vand.u32 %v330, 4294901760
        %v332 = vsub.f32 %v330, %v331
        %v333 = vand.u32 %v332, 4294901760
        %334 = vmatmul.mubr.f32.gmra.mxu0 %v333
        %v335 = vpop.f32.mrf.mxu0
        %v336 = vadd.f32 0.0, %v335
        %v337 = vpop.f32.mrf.mxu0
        %338 = vdwg.mxu0
        %339 = vmatprep.subr.mxu0 0.0
        %340 = vmatpush1.msra.mxu0 0.0
        %341 = vmatprep.subr.mxu0 0.0
        %342 = vmatpush1.msra.mxu0 0.0
        %343 = vmatprep.subr.mxu0 0.0
        %344 = vmatpush1.msra.mxu0 0.0
        %345 = vmatprep.subr.mxu0 0.0
        %346 = vmatpush1.msra.mxu0 0.0
        %347 = vmatprep.subr.mxu0 0.0
        %348 = vmatpush1.msra.mxu0 0.0
        %349 = vmatprep.subr.mxu0 0.0
        %350 = vmatpush1.msra.mxu0 0.0
        %351 = vmatprep.subr.mxu0 0.0
        %352 = vmatpush1.msra.mxu0 0.0
        %353 = vmatprep.subr.mxu0 0.0
        %354 = vmatpush1.msra.mxu0 0.0
        %355 = vmatprep.subr.mxu0 0.0
        %356 = vmatpush1.msra.mxu0 0.0
        %357 = vmatprep.subr.mxu0 0.0
        %358 = vmatpush1.msra.mxu0 0.0
        %359 = vmatprep.subr.mxu0 0.0
        %360 = vmatpush1.msra.mxu0 0.0
        %361 = vmatprep.subr.mxu0 0.0
        %362 = vmatpush1.msra.mxu0 0.0
        %363 = vmatprep.subr.mxu0 0.0
        %364 = vmatpush1.msra.mxu0 0.0
        %365 = vmatprep.subr.mxu0 0.0
        %366 = vmatpush1.msra.mxu0 0.0
        %367 = vmatprep.subr.mxu0 0.0
        %v368 = vand.u32 %v218, 4294901760
        %v369 = vsub.f32 %v218, %v368
        %v370 = vand.u32 %v369, 4294901760
        %v371 = vsub.f32 %v369, %v370
        %v372 = vand.u32 %v371, 4294901760
        %373 = vmatpush1.msra.mxu0 %v372
        %374 = vmatprep.subr.mxu0 0.0
        %v375 = vand.u32 %v217, 4294901760
        %v376 = vsub.f32 %v217, %v375
        %v377 = vand.u32 %v376, 4294901760
        %v378 = vsub.f32 %v376, %v377
        %v379 = vand.u32 %v378, 4294901760
        %380 = vmatpush1.msra.mxu0 %v379
        %381 = vmatprep.subr.mxu0 0.0
        %382 = vmatpush2.msra.mxu0 0.0
        %383 = vmatprep.subr.mxu0 0.0
        %384 = vmatpush2.msra.mxu0 0.0
        %385 = vmatprep.subr.mxu0 0.0
        %386 = vmatpush2.msra.mxu0 0.0
        %387 = vmatprep.subr.mxu0 0.0
        %388 = vmatpush2.msra.mxu0 0.0
        %389 = vmatprep.subr.mxu0 0.0
        %390 = vmatpush2.msra.mxu0 0.0
        %391 = vmatprep.subr.mxu0 0.0
        %392 = vmatpush2.msra.mxu0 0.0
        %393 = vmatprep.subr.mxu0 0.0
        %394 = vmatpush2.msra.mxu0 0.0
        %395 = vmatprep.subr.mxu0 0.0
        %396 = vmatpush2.msra.mxu0 0.0
        %397 = vmatprep.subr.mxu0 0.0
        %398 = vmatpush2.msra.mxu0 0.0
        %399 = vmatprep.subr.mxu0 0.0
        %400 = vmatpush2.msra.mxu0 0.0
        %401 = vmatprep.subr.mxu0 0.0
        %402 = vmatpush2.msra.mxu0 0.0
        %403 = vmatprep.subr.mxu0 0.0
        %404 = vmatpush2.msra.mxu0 0.0
        %405 = vmatprep.subr.mxu0 0.0
        %406 = vmatpush2.msra.mxu0 0.0
        %407 = vmatprep.subr.mxu0 0.0
        %408 = vmatpush2.msra.mxu0 0.0
        %409 = vmatprep.subr.mxu0 0.0
        %410 = vmatpush2.msra.mxu0 0.0
        %411 = vmatprep.subr.mxu0 0.0
        %412 = vmatpush2.msra.mxu0 0.0
        %413 = vmatprep.mubr.f32.mxu0 0.0
        %v414 = vand.u32 %v221, 4294901760
        %415 = vmatmul.mubr.f32.gmra.mxu0 %v414
        %v416 = vpop.f32.mrf.mxu0
        %v417 = vadd.f32 %v306, %v416
        %v418 = vpop.f32.mrf.mxu0
        %419 = vmatprep.mubr.f32.mxu0 0.0
        %v420 = vand.u32 %v224, 4294901760
        %421 = vmatmul.mubr.f32.gmra.mxu0 %v420
        %v422 = vpop.f32.mrf.mxu0
        %v423 = vadd.f32 %v316, %v422
        %v424 = vpop.f32.mrf.mxu0
        %425 = vmatprep.mubr.f32.mxu0 0.0
        %v426 = vand.u32 %v227, 4294901760
        %427 = vmatmul.mubr.f32.gmra.mxu0 %v426
        %v428 = vpop.f32.mrf.mxu0
        %v429 = vadd.f32 %v326, %v428
        %v430 = vpop.f32.mrf.mxu0
        %431 = vmatprep.mubr.f32.mxu0 0.0
        %v432 = vand.u32 %v230, 4294901760
        %433 = vmatmul.mubr.f32.gmra.mxu0 %v432
        %v434 = vpop.f32.mrf.mxu0
        %v435 = vadd.f32 %v336, %v434
        %v436 = vpop.f32.mrf.mxu0
        %437 = vdwg.mxu0
        %438 = vmatprep.subr.mxu0 0.0
        %439 = vmatpush1.msra.mxu0 0.0
        %440 = vmatprep.subr.mxu0 0.0
        %441 = vmatpush1.msra.mxu0 0.0
        %442 = vmatprep.subr.mxu0 0.0
        %443 = vmatpush1.msra.mxu0 0.0
        %444 = vmatprep.subr.mxu0 0.0
        %445 = vmatpush1.msra.mxu0 0.0
        %446 = vmatprep.subr.mxu0 0.0
        %447 = vmatpush1.msra.mxu0 0.0
        %448 = vmatprep.subr.mxu0 0.0
        %449 = vmatpush1.msra.mxu0 0.0
        %450 = vmatprep.subr.mxu0 0.0
        %451 = vmatpush1.msra.mxu0 0.0
        %452 = vmatprep.subr.mxu0 0.0
        %453 = vmatpush1.msra.mxu0 0.0
        %454 = vmatprep.subr.mxu0 0.0
        %455 = vmatpush1.msra.mxu0 0.0
        %456 = vmatprep.subr.mxu0 0.0
        %457 = vmatpush1.msra.mxu0 0.0
        %458 = vmatprep.subr.mxu0 0.0
        %459 = vmatpush1.msra.mxu0 0.0
        %460 = vmatprep.subr.mxu0 0.0
        %461 = vmatpush1.msra.mxu0 0.0
        %462 = vmatprep.subr.mxu0 0.0
        %463 = vmatpush1.msra.mxu0 0.0
        %464 = vmatprep.subr.mxu0 0.0
        %465 = vmatpush1.msra.mxu0 0.0
        %466 = vmatprep.subr.mxu0 0.0
        %v467 = vand.u32 %v218, 4294901760
        %v468 = vsub.f32 %v218, %v467
        %469 = vmatpush1.msra.mxu0 %v468
        %470 = vmatprep.subr.mxu0 0.0
        %v471 = vand.u32 %v217, 4294901760
        %v472 = vsub.f32 %v217, %v471
        %473 = vmatpush1.msra.mxu0 %v472
        %474 = vmatprep.subr.mxu0 0.0
        %475 = vmatpush2.msra.mxu0 0.0
        %476 = vmatprep.subr.mxu0 0.0
        %477 = vmatpush2.msra.mxu0 0.0
        %478 = vmatprep.subr.mxu0 0.0
        %479 = vmatpush2.msra.mxu0 0.0
        %480 = vmatprep.subr.mxu0 0.0
        %481 = vmatpush2.msra.mxu0 0.0
        %482 = vmatprep.subr.mxu0 0.0
        %483 = vmatpush2.msra.mxu0 0.0
        %484 = vmatprep.subr.mxu0 0.0
        %485 = vmatpush2.msra.mxu0 0.0
        %486 = vmatprep.subr.mxu0 0.0
        %487 = vmatpush2.msra.mxu0 0.0
        %488 = vmatprep.subr.mxu0 0.0
        %489 = vmatpush2.msra.mxu0 0.0
        %490 = vmatprep.subr.mxu0 0.0
        %491 = vmatpush2.msra.mxu0 0.0
        %492 = vmatprep.subr.mxu0 0.0
        %493 = vmatpush2.msra.mxu0 0.0
        %494 = vmatprep.subr.mxu0 0.0
        %495 = vmatpush2.msra.mxu0 0.0
        %496 = vmatprep.subr.mxu0 0.0
        %497 = vmatpush2.msra.mxu0 0.0
        %498 = vmatprep.subr.mxu0 0.0
        %499 = vmatpush2.msra.mxu0 0.0
        %500 = vmatprep.subr.mxu0 0.0
        %501 = vmatpush2.msra.mxu0 0.0
        %502 = vmatprep.subr.mxu0 0.0
        %503 = vmatpush2.msra.mxu0 0.0
        %504 = vmatprep.subr.mxu0 0.0
        %505 = vmatpush2.msra.mxu0 0.0
        %506 = vmatprep.mubr.f32.mxu0 0.0
        %v507 = vand.u32 %v221, 4294901760
        %v508 = vsub.f32 %v221, %v507
        %509 = vmatmul.mubr.f32.gmra.mxu0 %v508
        %v510 = vpop.f32.mrf.mxu0
        %v511 = vadd.f32 %v417, %v510
        %v512 = vpop.f32.mrf.mxu0
        %513 = vmatprep.mubr.f32.mxu0 0.0
        %v514 = vand.u32 %v224, 4294901760
        %v515 = vsub.f32 %v224, %v514
        %516 = vmatmul.mubr.f32.gmra.mxu0 %v515
        %v517 = vpop.f32.mrf.mxu0
        %v518 = vadd.f32 %v423, %v517
        %v519 = vpop.f32.mrf.mxu0
        %520 = vmatprep.mubr.f32.mxu0 0.0
        %v521 = vand.u32 %v227, 4294901760
        %v522 = vsub.f32 %v227, %v521
        %523 = vmatmul.mubr.f32.gmra.mxu0 %v522
        %v524 = vpop.f32.mrf.mxu0
        %v525 = vadd.f32 %v429, %v524
        %v526 = vpop.f32.mrf.mxu0
        %527 = vmatprep.mubr.f32.mxu0 0.0
        %v528 = vand.u32 %v230, 4294901760
        %v529 = vsub.f32 %v230, %v528
        %530 = vmatmul.mubr.f32.gmra.mxu0 %v529
        %v531 = vpop.f32.mrf.mxu0
        %v532 = vadd.f32 %v435, %v531
        %v533 = vpop.f32.mrf.mxu0
        %534 = vdwg.mxu0
        %535 = vmatprep.subr.mxu0 0.0
        %536 = vmatpush1.msra.mxu0 0.0
        %537 = vmatprep.subr.mxu0 0.0
        %538 = vmatpush1.msra.mxu0 0.0
        %539 = vmatprep.subr.mxu0 0.0
        %540 = vmatpush1.msra.mxu0 0.0
        %541 = vmatprep.subr.mxu0 0.0
        %542 = vmatpush1.msra.mxu0 0.0
        %543 = vmatprep.subr.mxu0 0.0
        %544 = vmatpush1.msra.mxu0 0.0
        %545 = vmatprep.subr.mxu0 0.0
        %546 = vmatpush1.msra.mxu0 0.0
        %547 = vmatprep.subr.mxu0 0.0
        %548 = vmatpush1.msra.mxu0 0.0
        %549 = vmatprep.subr.mxu0 0.0
        %550 = vmatpush1.msra.mxu0 0.0
        %551 = vmatprep.subr.mxu0 0.0
        %552 = vmatpush1.msra.mxu0 0.0
        %553 = vmatprep.subr.mxu0 0.0
        %554 = vmatpush1.msra.mxu0 0.0
        %555 = vmatprep.subr.mxu0 0.0
        %556 = vmatpush1.msra.mxu0 0.0
        %557 = vmatprep.subr.mxu0 0.0
        %558 = vmatpush1.msra.mxu0 0.0
        %559 = vmatprep.subr.mxu0 0.0
        %560 = vmatpush1.msra.mxu0 0.0
        %561 = vmatprep.subr.mxu0 0.0
        %562 = vmatpush1.msra.mxu0 0.0
        %563 = vmatprep.subr.mxu0 0.0
        %v564 = vand.u32 %v218, 4294901760
        %565 = vmatpush1.msra.mxu0 %v564
        %566 = vmatprep.subr.mxu0 0.0
        %v567 = vand.u32 %v217, 4294901760
        %568 = vmatpush1.msra.mxu0 %v567
        %569 = vmatprep.subr.mxu0 0.0
        %570 = vmatpush2.msra.mxu0 0.0
        %571 = vmatprep.subr.mxu0 0.0
        %572 = vmatpush2.msra.mxu0 0.0
        %573 = vmatprep.subr.mxu0 0.0
        %574 = vmatpush2.msra.mxu0 0.0
        %575 = vmatprep.subr.mxu0 0.0
        %576 = vmatpush2.msra.mxu0 0.0
        %577 = vmatprep.subr.mxu0 0.0
        %578 = vmatpush2.msra.mxu0 0.0
        %579 = vmatprep.subr.mxu0 0.0
        %580 = vmatpush2.msra.mxu0 0.0
        %581 = vmatprep.subr.mxu0 0.0
        %582 = vmatpush2.msra.mxu0 0.0
        %583 = vmatprep.subr.mxu0 0.0
        %584 = vmatpush2.msra.mxu0 0.0
        %585 = vmatprep.subr.mxu0 0.0
        %586 = vmatpush2.msra.mxu0 0.0
        %587 = vmatprep.subr.mxu0 0.0
        %588 = vmatpush2.msra.mxu0 0.0
        %589 = vmatprep.subr.mxu0 0.0
        %590 = vmatpush2.msra.mxu0 0.0
        %591 = vmatprep.subr.mxu0 0.0
        %592 = vmatpush2.msra.mxu0 0.0
        %593 = vmatprep.subr.mxu0 0.0
        %594 = vmatpush2.msra.mxu0 0.0
        %595 = vmatprep.subr.mxu0 0.0
        %596 = vmatpush2.msra.mxu0 0.0
        %597 = vmatprep.subr.mxu0 0.0
        %598 = vmatpush2.msra.mxu0 0.0
        %599 = vmatprep.subr.mxu0 0.0
        %600 = vmatpush2.msra.mxu0 0.0
        %601 = vmatprep.mubr.f32.mxu0 0.0
        %v602 = vand.u32 %v221, 4294901760
        %v603 = vsub.f32 %v221, %v602
        %v604 = vand.u32 %v603, 4294901760
        %605 = vmatmul.mubr.f32.gmra.mxu0 %v604
        %v606 = vpop.f32.mrf.mxu0
        %v607 = vadd.f32 %v511, %v606
        %v608 = vpop.f32.mrf.mxu0
        %609 = vmatprep.mubr.f32.mxu0 0.0
        %v610 = vand.u32 %v224, 4294901760
        %v611 = vsub.f32 %v224, %v610
        %v612 = vand.u32 %v611, 4294901760
        %613 = vmatmul.mubr.f32.gmra.mxu0 %v612
        %v614 = vpop.f32.mrf.mxu0
        %v615 = vadd.f32 %v518, %v614
        %v616 = vpop.f32.mrf.mxu0
        %617 = vmatprep.mubr.f32.mxu0 0.0
        %v618 = vand.u32 %v227, 4294901760
        %v619 = vsub.f32 %v227, %v618
        %v620 = vand.u32 %v619, 4294901760
        %621 = vmatmul.mubr.f32.gmra.mxu0 %v620
        %v622 = vpop.f32.mrf.mxu0
        %v623 = vadd.f32 %v525, %v622
        %v624 = vpop.f32.mrf.mxu0
        %625 = vmatprep.mubr.f32.mxu0 0.0
        %v626 = vand.u32 %v230, 4294901760
        %v627 = vsub.f32 %v230, %v626
        %v628 = vand.u32 %v627, 4294901760
        %629 = vmatmul.mubr.f32.gmra.mxu0 %v628
        %v630 = vpop.f32.mrf.mxu0
        %v631 = vadd.f32 %v532, %v630
        %v632 = vpop.f32.mrf.mxu0
        %633 = vdwg.mxu0
        %634 = vmatprep.subr.mxu0 0.0
        %635 = vmatpush1.msra.mxu0 0.0
        %636 = vmatprep.subr.mxu0 0.0
        %637 = vmatpush1.msra.mxu0 0.0
        %638 = vmatprep.subr.mxu0 0.0
        %639 = vmatpush1.msra.mxu0 0.0
        %640 = vmatprep.subr.mxu0 0.0
        %641 = vmatpush1.msra.mxu0 0.0
        %642 = vmatprep.subr.mxu0 0.0
        %643 = vmatpush1.msra.mxu0 0.0
        %644 = vmatprep.subr.mxu0 0.0
        %645 = vmatpush1.msra.mxu0 0.0
        %646 = vmatprep.subr.mxu0 0.0
        %647 = vmatpush1.msra.mxu0 0.0
        %648 = vmatprep.subr.mxu0 0.0
        %649 = vmatpush1.msra.mxu0 0.0
        %650 = vmatprep.subr.mxu0 0.0
        %651 = vmatpush1.msra.mxu0 0.0
        %652 = vmatprep.subr.mxu0 0.0
        %653 = vmatpush1.msra.mxu0 0.0
        %654 = vmatprep.subr.mxu0 0.0
        %655 = vmatpush1.msra.mxu0 0.0
        %656 = vmatprep.subr.mxu0 0.0
        %657 = vmatpush1.msra.mxu0 0.0
        %658 = vmatprep.subr.mxu0 0.0
        %659 = vmatpush1.msra.mxu0 0.0
        %660 = vmatprep.subr.mxu0 0.0
        %661 = vmatpush1.msra.mxu0 0.0
        %662 = vmatprep.subr.mxu0 0.0
        %v663 = vand.u32 %v218, 4294901760
        %v664 = vsub.f32 %v218, %v663
        %v665 = vand.u32 %v664, 4294901760
        %666 = vmatpush1.msra.mxu0 %v665
        %667 = vmatprep.subr.mxu0 0.0
        %v668 = vand.u32 %v217, 4294901760
        %v669 = vsub.f32 %v217, %v668
        %v670 = vand.u32 %v669, 4294901760
        %671 = vmatpush1.msra.mxu0 %v670
        %672 = vmatprep.subr.mxu0 0.0
        %673 = vmatpush2.msra.mxu0 0.0
        %674 = vmatprep.subr.mxu0 0.0
        %675 = vmatpush2.msra.mxu0 0.0
        %676 = vmatprep.subr.mxu0 0.0
        %677 = vmatpush2.msra.mxu0 0.0
        %678 = vmatprep.subr.mxu0 0.0
        %679 = vmatpush2.msra.mxu0 0.0
        %680 = vmatprep.subr.mxu0 0.0
        %681 = vmatpush2.msra.mxu0 0.0
        %682 = vmatprep.subr.mxu0 0.0
        %683 = vmatpush2.msra.mxu0 0.0
        %684 = vmatprep.subr.mxu0 0.0
        %685 = vmatpush2.msra.mxu0 0.0
        %686 = vmatprep.subr.mxu0 0.0
        %687 = vmatpush2.msra.mxu0 0.0
        %688 = vmatprep.subr.mxu0 0.0
        %689 = vmatpush2.msra.mxu0 0.0
        %690 = vmatprep.subr.mxu0 0.0
        %691 = vmatpush2.msra.mxu0 0.0
        %692 = vmatprep.subr.mxu0 0.0
        %693 = vmatpush2.msra.mxu0 0.0
        %694 = vmatprep.subr.mxu0 0.0
        %695 = vmatpush2.msra.mxu0 0.0
        %696 = vmatprep.subr.mxu0 0.0
        %697 = vmatpush2.msra.mxu0 0.0
        %698 = vmatprep.subr.mxu0 0.0
        %699 = vmatpush2.msra.mxu0 0.0
        %700 = vmatprep.subr.mxu0 0.0
        %701 = vmatpush2.msra.mxu0 0.0
        %702 = vmatprep.subr.mxu0 0.0
        %703 = vmatpush2.msra.mxu0 0.0
        %704 = vmatprep.mubr.f32.mxu0 0.0
        %v705 = vand.u32 %v221, 4294901760
        %706 = vmatmul.mubr.f32.gmra.mxu0 %v705
        %v707 = vpop.f32.mrf.mxu0
        %v708 = vadd.f32 %v607, %v707
        %v709 = vpop.f32.mrf.mxu0
        %710 = vmatprep.mubr.f32.mxu0 0.0
        %v711 = vand.u32 %v224, 4294901760
        %712 = vmatmul.mubr.f32.gmra.mxu0 %v711
        %v713 = vpop.f32.mrf.mxu0
        %v714 = vadd.f32 %v615, %v713
        %v715 = vpop.f32.mrf.mxu0
        %716 = vmatprep.mubr.f32.mxu0 0.0
        %v717 = vand.u32 %v227, 4294901760
        %718 = vmatmul.mubr.f32.gmra.mxu0 %v717
        %v719 = vpop.f32.mrf.mxu0
        %v720 = vadd.f32 %v623, %v719
        %v721 = vpop.f32.mrf.mxu0
        %722 = vmatprep.mubr.f32.mxu0 0.0
        %v723 = vand.u32 %v230, 4294901760
        %724 = vmatmul.mubr.f32.gmra.mxu0 %v723
        %v725 = vpop.f32.mrf.mxu0
        %v726 = vadd.f32 %v631, %v725
        %v727 = vpop.f32.mrf.mxu0
        %728 = vdwg.mxu0
        %729 = vmatprep.subr.mxu0 0.0
        %730 = vmatpush1.msra.mxu0 0.0
        %731 = vmatprep.subr.mxu0 0.0
        %732 = vmatpush1.msra.mxu0 0.0
        %733 = vmatprep.subr.mxu0 0.0
        %734 = vmatpush1.msra.mxu0 0.0
        %735 = vmatprep.subr.mxu0 0.0
        %736 = vmatpush1.msra.mxu0 0.0
        %737 = vmatprep.subr.mxu0 0.0
        %738 = vmatpush1.msra.mxu0 0.0
        %739 = vmatprep.subr.mxu0 0.0
        %740 = vmatpush1.msra.mxu0 0.0
        %741 = vmatprep.subr.mxu0 0.0
        %742 = vmatpush1.msra.mxu0 0.0
        %743 = vmatprep.subr.mxu0 0.0
        %744 = vmatpush1.msra.mxu0 0.0
        %745 = vmatprep.subr.mxu0 0.0
        %746 = vmatpush1.msra.mxu0 0.0
        %747 = vmatprep.subr.mxu0 0.0
        %748 = vmatpush1.msra.mxu0 0.0
        %749 = vmatprep.subr.mxu0 0.0
        %750 = vmatpush1.msra.mxu0 0.0
        %751 = vmatprep.subr.mxu0 0.0
        %752 = vmatpush1.msra.mxu0 0.0
        %753 = vmatprep.subr.mxu0 0.0
        %754 = vmatpush1.msra.mxu0 0.0
        %755 = vmatprep.subr.mxu0 0.0
        %756 = vmatpush1.msra.mxu0 0.0
        %757 = vmatprep.subr.mxu0 0.0
        %v758 = vand.u32 %v218, 4294901760
        %759 = vmatpush1.msra.mxu0 %v758
        %760 = vmatprep.subr.mxu0 0.0
        %v761 = vand.u32 %v217, 4294901760
        %762 = vmatpush1.msra.mxu0 %v761
        %763 = vmatprep.subr.mxu0 0.0
        %764 = vmatpush2.msra.mxu0 0.0
        %765 = vmatprep.subr.mxu0 0.0
        %766 = vmatpush2.msra.mxu0 0.0
        %767 = vmatprep.subr.mxu0 0.0
        %768 = vmatpush2.msra.mxu0 0.0
        %769 = vmatprep.subr.mxu0 0.0
        %770 = vmatpush2.msra.mxu0 0.0
        %771 = vmatprep.subr.mxu0 0.0
        %772 = vmatpush2.msra.mxu0 0.0
        %773 = vmatprep.subr.mxu0 0.0
        %774 = vmatpush2.msra.mxu0 0.0
        %775 = vmatprep.subr.mxu0 0.0
        %776 = vmatpush2.msra.mxu0 0.0
        %777 = vmatprep.subr.mxu0 0.0
        %778 = vmatpush2.msra.mxu0 0.0
        %779 = vmatprep.subr.mxu0 0.0
        %780 = vmatpush2.msra.mxu0 0.0
        %781 = vmatprep.subr.mxu0 0.0
        %782 = vmatpush2.msra.mxu0 0.0
        %783 = vmatprep.subr.mxu0 0.0
        %784 = vmatpush2.msra.mxu0 0.0
        %785 = vmatprep.subr.mxu0 0.0
        %786 = vmatpush2.msra.mxu0 0.0
        %787 = vmatprep.subr.mxu0 0.0
        %788 = vmatpush2.msra.mxu0 0.0
        %789 = vmatprep.subr.mxu0 0.0
        %790 = vmatpush2.msra.mxu0 0.0
        %791 = vmatprep.subr.mxu0 0.0
        %792 = vmatpush2.msra.mxu0 0.0
        %793 = vmatprep.subr.mxu0 0.0
        %794 = vmatpush2.msra.mxu0 0.0
        %795 = vmatprep.mubr.f32.mxu0 0.0
        %v796 = vand.u32 %v221, 4294901760
        %797 = vmatmul.mubr.f32.gmra.mxu0 %v796
        %v798 = vpop.f32.mrf.mxu0
        %v799 = vadd.f32 %v708, %v798
        %v800 = vpop.f32.mrf.mxu0
        %801 = vmatprep.mubr.f32.mxu0 0.0
        %v802 = vand.u32 %v224, 4294901760
        %803 = vmatmul.mubr.f32.gmra.mxu0 %v802
        %v804 = vpop.f32.mrf.mxu0
        %v805 = vadd.f32 %v714, %v804
        %v806 = vpop.f32.mrf.mxu0
        %807 = vmatprep.mubr.f32.mxu0 0.0
        %v808 = vand.u32 %v227, 4294901760
        %809 = vmatmul.mubr.f32.gmra.mxu0 %v808
        %v810 = vpop.f32.mrf.mxu0
        %v811 = vadd.f32 %v720, %v810
        %v812 = vpop.f32.mrf.mxu0
        %813 = vmatprep.mubr.f32.mxu0 0.0
        %v814 = vand.u32 %v230, 4294901760
        %815 = vmatmul.mubr.f32.gmra.mxu0 %v814
        %v816 = vpop.f32.mrf.mxu0
        %v817 = vadd.f32 %v726, %v816
        %v818 = vpop.f32.mrf.mxu0
        %819 = vdwg.mxu0
        %v821 = vcombine.high %v799, %v799
        %v823 = vunpack.c.l.s4 1966171168
        %v824 = vunpack.c.0.s8 %v823
        %v825 = vlaneseq
        %v826 = vshrl.u32 %v825, 7
        %v827 = vsub.s32 %v824, %v826
        %v828 = vrot.slane %v799, %v827
        %v830 = vunpack.c.l.s4 1966171168
        %v831 = vunpack.c.0.s8 %v830
        %v832 = vlaneseq
        %v833 = vshrl.u32 %v832, 7
        %v834 = vsub.s32 %v831, %v833
        %v835 = vrot.slane %v821, %v834
        %v836 = vcombine.high %v828, %v828
        %v837 = vcombine.high %v835, %v835
        %v839 = vunpack.c.l.s4 1966171168
        %v840 = vunpack.c.0.s8 %v839
        %v841 = vlaneseq
        %v842 = vshrl.u32 %v841, 7
        %v843 = vsub.s32 %v840, %v842
        %v844 = vrot.slane %v828, %v843
        %v846 = vunpack.c.l.s4 1966171168
        %v847 = vunpack.c.0.s8 %v846
        %v848 = vlaneseq
        %v849 = vshrl.u32 %v848, 7
        %v850 = vsub.s32 %v847, %v849
        %v851 = vrot.slane %v835, %v850
        %v853 = vunpack.c.l.s4 1966171168
        %v854 = vunpack.c.0.s8 %v853
        %v855 = vlaneseq
        %v856 = vshrl.u32 %v855, 7
        %v857 = vsub.s32 %v854, %v856
        %v858 = vrot.slane %v836, %v857
        %v860 = vunpack.c.l.s4 1966171168
        %v861 = vunpack.c.0.s8 %v860
        %v862 = vlaneseq
        %v863 = vshrl.u32 %v862, 7
        %v864 = vsub.s32 %v861, %v863
        %v865 = vrot.slane %v837, %v864
        %v866 = vcombine.high %v844, %v844
        %v867 = vcombine.high %v851, %v851
        %v868 = vcombine.high %v858, %v858
        %v869 = vcombine.high %v865, %v865
        %v870 = vld [vmem:[#allocation2] sm:$0xf]
        %v871 = vld [vmem:[#allocation2 + $0x4] sm:$0xf]
        %v872 = vld [vmem:[#allocation2 + $0x8] sm:$0xf]
        %v873 = vld [vmem:[#allocation2 + $0xc] sm:$0xf]
        %v874 = vld [vmem:[#allocation2 + $0x10] sm:$0xf]
        %v875 = vld [vmem:[#allocation2 + $0x14] sm:$0xf]
        %v876 = vld [vmem:[#allocation2 + $0x18] sm:$0xf]
        %v877 = vld [vmem:[#allocation2 + $0x1c] sm:$0xf]
        %v878 = vlaneseq
        %v879 = vshrl.u32 %v878, 7
        %v880 = vsub.s32 0, %v879
        %v881 = vrot.slane %v844, %v880
        %v882 = vlaneseq
        %v883 = vshrl.u32 %v882, 7
        %v884 = vsub.s32 0, %v883
        %v885 = vrot.slane %v858, %v884
        %v886 = vlaneseq
        %v887 = vshrl.u32 %v886, 7
        %v888 = vsub.s32 0, %v887
        %v889 = vrot.slane %v866, %v888
        %v890 = vlaneseq
        %v891 = vshrl.u32 %v890, 7
        %v892 = vsub.s32 0, %v891
        %v893 = vrot.slane %v868, %v892
        %v894 = vlaneseq
        %v895 = vshrl.u32 %v894, 7
        %v896 = vsub.s32 0, %v895
        %v897 = vrot.slane %v851, %v896
        %v898 = vlaneseq
        %v899 = vshrl.u32 %v898, 7
        %v900 = vsub.s32 0, %v899
        %v901 = vrot.slane %v865, %v900
        %v902 = vlaneseq
        %v903 = vshrl.u32 %v902, 7
        %v904 = vsub.s32 0, %v903
        %v905 = vrot.slane %v867, %v904
        %v906 = vlaneseq
        %v907 = vshrl.u32 %v906, 7
        %v908 = vsub.s32 0, %v907
        %v909 = vrot.slane %v869, %v908
        %v918 = vmul.f32 %v881, %v870
        %v919 = vmul.f32 %v885, %v871
        %v920 = vmul.f32 %v889, %v872
        %v921 = vmul.f32 %v893, %v873
        %v922 = vmul.f32 %v897, %v874
        %v923 = vmul.f32 %v901, %v875
        %v924 = vmul.f32 %v905, %v876
        %v925 = vmul.f32 %v909, %v877
        %v927 = vcombine.high %v805, %v805
        %v929 = vunpack.c.l.s4 1966171168
        %v930 = vunpack.c.0.s8 %v929
        %v931 = vlaneseq
        %v932 = vshrl.u32 %v931, 7
        %v933 = vsub.s32 %v930, %v932
        %v934 = vrot.slane %v805, %v933
        %v936 = vunpack.c.l.s4 1966171168
        %v937 = vunpack.c.0.s8 %v936
        %v938 = vlaneseq
        %v939 = vshrl.u32 %v938, 7
        %v940 = vsub.s32 %v937, %v939
        %v941 = vrot.slane %v927, %v940
        %v942 = vcombine.high %v934, %v934
        %v943 = vcombine.high %v941, %v941
        %v945 = vunpack.c.l.s4 1966171168
        %v946 = vunpack.c.0.s8 %v945
        %v947 = vlaneseq
        %v948 = vshrl.u32 %v947, 7
        %v949 = vsub.s32 %v946, %v948
        %v950 = vrot.slane %v934, %v949
        %v952 = vunpack.c.l.s4 1966171168
        %v953 = vunpack.c.0.s8 %v952
        %v954 = vlaneseq
        %v955 = vshrl.u32 %v954, 7
        %v956 = vsub.s32 %v953, %v955
        %v957 = vrot.slane %v941, %v956
        %v959 = vunpack.c.l.s4 1966171168
        %v960 = vunpack.c.0.s8 %v959
        %v961 = vlaneseq
        %v962 = vshrl.u32 %v961, 7
        %v963 = vsub.s32 %v960, %v962
        %v964 = vrot.slane %v942, %v963
        %v966 = vunpack.c.l.s4 1966171168
        %v967 = vunpack.c.0.s8 %v966
        %v968 = vlaneseq
        %v969 = vshrl.u32 %v968, 7
        %v970 = vsub.s32 %v967, %v969
        %v971 = vrot.slane %v943, %v970
        %v972 = vcombine.high %v950, %v950
        %v973 = vcombine.high %v957, %v957
        %v974 = vcombine.high %v964, %v964
        %v975 = vcombine.high %v971, %v971
        %s976 = scalar_lea.vmem [#allocation2], 32
        %v977 = vld [vmem:[%s976] sm:$0xf]
        %v978 = vld [vmem:[%s976 + $0x4] sm:$0xf]
        %v979 = vld [vmem:[%s976 + $0x8] sm:$0xf]
        %v980 = vld [vmem:[%s976 + $0xc] sm:$0xf]
        %v981 = vld [vmem:[%s976 + $0x10] sm:$0xf]
        %v982 = vld [vmem:[%s976 + $0x14] sm:$0xf]
        %v983 = vld [vmem:[%s976 + $0x18] sm:$0xf]
        %v984 = vld [vmem:[%s976 + $0x1c] sm:$0xf]
        %v985 = vlaneseq
        %v986 = vshrl.u32 %v985, 7
        %v987 = vsub.s32 0, %v986
        %v988 = vrot.slane %v950, %v987
        %v989 = vlaneseq
        %v990 = vshrl.u32 %v989, 7
        %v991 = vsub.s32 0, %v990
        %v992 = vrot.slane %v964, %v991
        %v993 = vlaneseq
        %v994 = vshrl.u32 %v993, 7
        %v995 = vsub.s32 0, %v994
        %v996 = vrot.slane %v972, %v995
        %v997 = vlaneseq
        %v998 = vshrl.u32 %v997, 7
        %v999 = vsub.s32 0, %v998
        %v1000 = vrot.slane %v974, %v999
        %v1001 = vlaneseq
        %v1002 = vshrl.u32 %v1001, 7
        %v1003 = vsub.s32 0, %v1002
        %v1004 = vrot.slane %v957, %v1003
        %v1005 = vlaneseq
        %v1006 = vshrl.u32 %v1005, 7
        %v1007 = vsub.s32 0, %v1006
        %v1008 = vrot.slane %v971, %v1007
        %v1009 = vlaneseq
        %v1010 = vshrl.u32 %v1009, 7
        %v1011 = vsub.s32 0, %v1010
        %v1012 = vrot.slane %v973, %v1011
        %v1013 = vlaneseq
        %v1014 = vshrl.u32 %v1013, 7
        %v1015 = vsub.s32 0, %v1014
        %v1016 = vrot.slane %v975, %v1015
        %v1025 = vmul.f32 %v988, %v977
        %v1026 = vmul.f32 %v992, %v978
        %v1027 = vmul.f32 %v996, %v979
        %v1028 = vmul.f32 %v1000, %v980
        %v1029 = vmul.f32 %v1004, %v981
        %v1030 = vmul.f32 %v1008, %v982
        %v1031 = vmul.f32 %v1012, %v983
        %v1032 = vmul.f32 %v1016, %v984
        %v1033 = vadd.f32 %v918, %v1025
        %v1034 = vadd.f32 %v919, %v1026
        %v1035 = vadd.f32 %v920, %v1027
        %v1036 = vadd.f32 %v921, %v1028
        %v1037 = vadd.f32 %v922, %v1029
        %v1038 = vadd.f32 %v923, %v1030
        %v1039 = vadd.f32 %v924, %v1031
        %v1040 = vadd.f32 %v925, %v1032
        %v1042 = vcombine.high %v811, %v811
        %v1044 = vunpack.c.l.s4 1966171168
        %v1045 = vunpack.c.0.s8 %v1044
        %v1046 = vlaneseq
        %v1047 = vshrl.u32 %v1046, 7
        %v1048 = vsub.s32 %v1045, %v1047
        %v1049 = vrot.slane %v811, %v1048
        %v1051 = vunpack.c.l.s4 1966171168
        %v1052 = vunpack.c.0.s8 %v1051
        %v1053 = vlaneseq
        %v1054 = vshrl.u32 %v1053, 7
        %v1055 = vsub.s32 %v1052, %v1054
        %v1056 = vrot.slane %v1042, %v1055
        %v1057 = vcombine.high %v1049, %v1049
        %v1058 = vcombine.high %v1056, %v1056
        %v1060 = vunpack.c.l.s4 1966171168
        %v1061 = vunpack.c.0.s8 %v1060
        %v1062 = vlaneseq
        %v1063 = vshrl.u32 %v1062, 7
        %v1064 = vsub.s32 %v1061, %v1063
        %v1065 = vrot.slane %v1049, %v1064
        %v1067 = vunpack.c.l.s4 1966171168
        %v1068 = vunpack.c.0.s8 %v1067
        %v1069 = vlaneseq
        %v1070 = vshrl.u32 %v1069, 7
        %v1071 = vsub.s32 %v1068, %v1070
        %v1072 = vrot.slane %v1056, %v1071
        %v1074 = vunpack.c.l.s4 1966171168
        %v1075 = vunpack.c.0.s8 %v1074
        %v1076 = vlaneseq
        %v1077 = vshrl.u32 %v1076, 7
        %v1078 = vsub.s32 %v1075, %v1077
        %v1079 = vrot.slane %v1057, %v1078
        %v1081 = vunpack.c.l.s4 1966171168
        %v1082 = vunpack.c.0.s8 %v1081
        %v1083 = vlaneseq
        %v1084 = vshrl.u32 %v1083, 7
        %v1085 = vsub.s32 %v1082, %v1084
        %v1086 = vrot.slane %v1058, %v1085
        %v1087 = vcombine.high %v1065, %v1065
        %v1088 = vcombine.high %v1072, %v1072
        %v1089 = vcombine.high %v1079, %v1079
        %v1090 = vcombine.high %v1086, %v1086
        %s1091 = scalar_lea.vmem [#allocation2], 64
        %v1092 = vld [vmem:[%s1091] sm:$0xf]
        %v1093 = vld [vmem:[%s1091 + $0x4] sm:$0xf]
        %v1094 = vld [vmem:[%s1091 + $0x8] sm:$0xf]
        %v1095 = vld [vmem:[%s1091 + $0xc] sm:$0xf]
        %v1096 = vld [vmem:[%s1091 + $0x10] sm:$0xf]
        %v1097 = vld [vmem:[%s1091 + $0x14] sm:$0xf]
        %v1098 = vld [vmem:[%s1091 + $0x18] sm:$0xf]
        %v1099 = vld [vmem:[%s1091 + $0x1c] sm:$0xf]
        %v1100 = vlaneseq
        %v1101 = vshrl.u32 %v1100, 7
        %v1102 = vsub.s32 0, %v1101
        %v1103 = vrot.slane %v1065, %v1102
        %v1104 = vlaneseq
        %v1105 = vshrl.u32 %v1104, 7
        %v1106 = vsub.s32 0, %v1105
        %v1107 = vrot.slane %v1079, %v1106
        %v1108 = vlaneseq
        %v1109 = vshrl.u32 %v1108, 7
        %v1110 = vsub.s32 0, %v1109
        %v1111 = vrot.slane %v1087, %v1110
        %v1112 = vlaneseq
        %v1113 = vshrl.u32 %v1112, 7
        %v1114 = vsub.s32 0, %v1113
        %v1115 = vrot.slane %v1089, %v1114
        %v1116 = vlaneseq
        %v1117 = vshrl.u32 %v1116, 7
        %v1118 = vsub.s32 0, %v1117
        %v1119 = vrot.slane %v1072, %v1118
        %v1120 = vlaneseq
        %v1121 = vshrl.u32 %v1120, 7
        %v1122 = vsub.s32 0, %v1121
        %v1123 = vrot.slane %v1086, %v1122
        %v1124 = vlaneseq
        %v1125 = vshrl.u32 %v1124, 7
        %v1126 = vsub.s32 0, %v1125
        %v1127 = vrot.slane %v1088, %v1126
        %v1128 = vlaneseq
        %v1129 = vshrl.u32 %v1128, 7
        %v1130 = vsub.s32 0, %v1129
        %v1131 = vrot.slane %v1090, %v1130
        %v1140 = vmul.f32 %v1103, %v1092
        %v1141 = vmul.f32 %v1107, %v1093
        %v1142 = vmul.f32 %v1111, %v1094
        %v1143 = vmul.f32 %v1115, %v1095
        %v1144 = vmul.f32 %v1119, %v1096
        %v1145 = vmul.f32 %v1123, %v1097
        %v1146 = vmul.f32 %v1127, %v1098
        %v1147 = vmul.f32 %v1131, %v1099
        %v1148 = vadd.f32 %v1033, %v1140
        %v1149 = vadd.f32 %v1034, %v1141
        %v1150 = vadd.f32 %v1035, %v1142
        %v1151 = vadd.f32 %v1036, %v1143
        %v1152 = vadd.f32 %v1037, %v1144
        %v1153 = vadd.f32 %v1038, %v1145
        %v1154 = vadd.f32 %v1039, %v1146
        %v1155 = vadd.f32 %v1040, %v1147
        %v1157 = vcombine.high %v817, %v817
        %v1159 = vunpack.c.l.s4 1966171168
        %v1160 = vunpack.c.0.s8 %v1159
        %v1161 = vlaneseq
        %v1162 = vshrl.u32 %v1161, 7
        %v1163 = vsub.s32 %v1160, %v1162
        %v1164 = vrot.slane %v817, %v1163
        %v1166 = vunpack.c.l.s4 1966171168
        %v1167 = vunpack.c.0.s8 %v1166
        %v1168 = vlaneseq
        %v1169 = vshrl.u32 %v1168, 7
        %v1170 = vsub.s32 %v1167, %v1169
        %v1171 = vrot.slane %v1157, %v1170
        %v1172 = vcombine.high %v1164, %v1164
        %v1173 = vcombine.high %v1171, %v1171
        %v1175 = vunpack.c.l.s4 1966171168
        %v1176 = vunpack.c.0.s8 %v1175
        %v1177 = vlaneseq
        %v1178 = vshrl.u32 %v1177, 7
        %v1179 = vsub.s32 %v1176, %v1178
        %v1180 = vrot.slane %v1164, %v1179
        %v1182 = vunpack.c.l.s4 1966171168
        %v1183 = vunpack.c.0.s8 %v1182
        %v1184 = vlaneseq
        %v1185 = vshrl.u32 %v1184, 7
        %v1186 = vsub.s32 %v1183, %v1185
        %v1187 = vrot.slane %v1171, %v1186
        %v1189 = vunpack.c.l.s4 1966171168
        %v1190 = vunpack.c.0.s8 %v1189
        %v1191 = vlaneseq
        %v1192 = vshrl.u32 %v1191, 7
        %v1193 = vsub.s32 %v1190, %v1192
        %v1194 = vrot.slane %v1172, %v1193
        %v1196 = vunpack.c.l.s4 1966171168
        %v1197 = vunpack.c.0.s8 %v1196
        %v1198 = vlaneseq
        %v1199 = vshrl.u32 %v1198, 7
        %v1200 = vsub.s32 %v1197, %v1199
        %v1201 = vrot.slane %v1173, %v1200
        %v1202 = vcombine.high %v1180, %v1180
        %v1203 = vcombine.high %v1187, %v1187
        %v1204 = vcombine.high %v1194, %v1194
        %v1205 = vcombine.high %v1201, %v1201
        %s1206 = scalar_lea.vmem [#allocation2], 96
        %v1207 = vld [vmem:[%s1206] sm:$0xf]
        %v1208 = vld [vmem:[%s1206 + $0x4] sm:$0xf]
        %v1209 = vld [vmem:[%s1206 + $0x8] sm:$0xf]
        %v1210 = vld [vmem:[%s1206 + $0xc] sm:$0xf]
        %v1211 = vld [vmem:[%s1206 + $0x10] sm:$0xf]
        %v1212 = vld [vmem:[%s1206 + $0x14] sm:$0xf]
        %v1213 = vld [vmem:[%s1206 + $0x18] sm:$0xf]
        %v1214 = vld [vmem:[%s1206 + $0x1c] sm:$0xf]
        %v1215 = vlaneseq
        %v1216 = vshrl.u32 %v1215, 7
        %v1217 = vsub.s32 0, %v1216
        %v1218 = vrot.slane %v1180, %v1217
        %v1219 = vlaneseq
        %v1220 = vshrl.u32 %v1219, 7
        %v1221 = vsub.s32 0, %v1220
        %v1222 = vrot.slane %v1194, %v1221
        %v1223 = vlaneseq
        %v1224 = vshrl.u32 %v1223, 7
        %v1225 = vsub.s32 0, %v1224
        %v1226 = vrot.slane %v1202, %v1225
        %v1227 = vlaneseq
        %v1228 = vshrl.u32 %v1227, 7
        %v1229 = vsub.s32 0, %v1228
        %v1230 = vrot.slane %v1204, %v1229
        %v1231 = vlaneseq
        %v1232 = vshrl.u32 %v1231, 7
        %v1233 = vsub.s32 0, %v1232
        %v1234 = vrot.slane %v1187, %v1233
        %v1235 = vlaneseq
        %v1236 = vshrl.u32 %v1235, 7
        %v1237 = vsub.s32 0, %v1236
        %v1238 = vrot.slane %v1201, %v1237
        %v1239 = vlaneseq
        %v1240 = vshrl.u32 %v1239, 7
        %v1241 = vsub.s32 0, %v1240
        %v1242 = vrot.slane %v1203, %v1241
        %v1243 = vlaneseq
        %v1244 = vshrl.u32 %v1243, 7
        %v1245 = vsub.s32 0, %v1244
        %v1246 = vrot.slane %v1205, %v1245
        %v1255 = vmul.f32 %v1218, %v1207
        %v1256 = vmul.f32 %v1222, %v1208
        %v1257 = vmul.f32 %v1226, %v1209
        %v1258 = vmul.f32 %v1230, %v1210
        %v1259 = vmul.f32 %v1234, %v1211
        %v1260 = vmul.f32 %v1238, %v1212
        %v1261 = vmul.f32 %v1242, %v1213
        %v1262 = vmul.f32 %v1246, %v1214
        %v1263 = vadd.f32 %v1148, %v1255
        %v1264 = vadd.f32 %v1149, %v1256
        %v1265 = vadd.f32 %v1150, %v1257
        %v1266 = vadd.f32 %v1151, %v1258
        %v1267 = vadd.f32 %v1152, %v1259
        %v1268 = vadd.f32 %v1153, %v1260
        %v1269 = vadd.f32 %v1154, %v1261
        %v1270 = vadd.f32 %v1155, %v1262
        %v1271 = vld [vmem:[%s3] sm:$0xff]
        %v1272 = vld [vmem:[%s3 + $0x8] sm:$0xff]
        %v1274 = vsel %vm219, %v1263, 0
        %1276 = vmatprep.subr.mxu0 0.0
        %1277 = vmatpush1.msra.mxu0 0.0
        %1278 = vmatprep.subr.mxu0 0.0
        %1279 = vmatpush1.msra.mxu0 0.0
        %1280 = vmatprep.subr.mxu0 0.0
        %1281 = vmatpush1.msra.mxu0 0.0
        %1282 = vmatprep.subr.mxu0 0.0
        %1283 = vmatpush1.msra.mxu0 0.0
        %1284 = vmatprep.subr.mxu0 0.0
        %1285 = vmatpush1.msra.mxu0 0.0
        %1286 = vmatprep.subr.mxu0 0.0
        %1287 = vmatpush1.msra.mxu0 0.0
        %1288 = vmatprep.subr.mxu0 0.0
        %1289 = vmatpush1.msra.mxu0 0.0
        %1290 = vmatprep.subr.mxu0 0.0
        %1291 = vmatpush1.msra.mxu0 0.0
        %1292 = vmatprep.subr.mxu0 0.0
        %1293 = vmatpush1.msra.mxu0 0.0
        %1294 = vmatprep.subr.mxu0 0.0
        %1295 = vmatpush1.msra.mxu0 0.0
        %1296 = vmatprep.subr.mxu0 0.0
        %1297 = vmatpush1.msra.mxu0 0.0
        %1298 = vmatprep.subr.mxu0 0.0
        %1299 = vmatpush1.msra.mxu0 0.0
        %1300 = vmatprep.subr.mxu0 0.0
        %1301 = vmatpush1.msra.mxu0 0.0
        %1302 = vmatprep.subr.mxu0 0.0
        %1303 = vmatpush1.msra.mxu0 0.0
        %1304 = vmatprep.subr.mxu0 0.0
        %v1305 = vand.u32 %v1272, 4294901760
        %1306 = vmatpush1.msra.mxu0 %v1305
        %1307 = vmatprep.subr.mxu0 0.0
        %v1308 = vand.u32 %v1271, 4294901760
        %1309 = vmatpush1.msra.mxu0 %v1308
        %1310 = vmatprep.subr.mxu0 0.0
        %1311 = vmatpush2.msra.mxu0 0.0
        %1312 = vmatprep.subr.mxu0 0.0
        %1313 = vmatpush2.msra.mxu0 0.0
        %1314 = vmatprep.subr.mxu0 0.0
        %1315 = vmatpush2.msra.mxu0 0.0
        %1316 = vmatprep.subr.mxu0 0.0
        %1317 = vmatpush2.msra.mxu0 0.0
        %1318 = vmatprep.subr.mxu0 0.0
        %1319 = vmatpush2.msra.mxu0 0.0
        %1320 = vmatprep.subr.mxu0 0.0
        %1321 = vmatpush2.msra.mxu0 0.0
        %1322 = vmatprep.subr.mxu0 0.0
        %1323 = vmatpush2.msra.mxu0 0.0
        %1324 = vmatprep.subr.mxu0 0.0
        %1325 = vmatpush2.msra.mxu0 0.0
        %1326 = vmatprep.subr.mxu0 0.0
        %1327 = vmatpush2.msra.mxu0 0.0
        %1328 = vmatprep.subr.mxu0 0.0
        %1329 = vmatpush2.msra.mxu0 0.0
        %1330 = vmatprep.subr.mxu0 0.0
        %1331 = vmatpush2.msra.mxu0 0.0
        %1332 = vmatprep.subr.mxu0 0.0
        %1333 = vmatpush2.msra.mxu0 0.0
        %1334 = vmatprep.subr.mxu0 0.0
        %1335 = vmatpush2.msra.mxu0 0.0
        %1336 = vmatprep.subr.mxu0 0.0
        %1337 = vmatpush2.msra.mxu0 0.0
        %1338 = vmatprep.subr.mxu0 0.0
        %1339 = vmatpush2.msra.mxu0 0.0
        %1340 = vmatprep.subr.mxu0 0.0
        %1341 = vmatpush2.msra.mxu0 0.0
        %1342 = vmatprep.mubr.f32.mxu0 0.0
        %v1343 = vand.u32 %v1274, 4294901760
        %v1344 = vsub.f32 %v1274, %v1343
        %v1345 = vand.u32 %v1344, 4294901760
        %v1346 = vsub.f32 %v1344, %v1345
        %v1347 = vand.u32 %v1346, 4294901760
        %1348 = vmatmul.mubr.f32.gmra.mxu0 %v1347
        %v1349 = vpop.f32.mrf.mxu0
        %v1350 = vadd.f32 0.0, %v1349
        %v1351 = vpop.f32.mrf.mxu0
        %1352 = vdwg.mxu0
        %1353 = vmatprep.subr.mxu0 0.0
        %1354 = vmatpush1.msra.mxu0 0.0
        %1355 = vmatprep.subr.mxu0 0.0
        %1356 = vmatpush1.msra.mxu0 0.0
        %1357 = vmatprep.subr.mxu0 0.0
        %1358 = vmatpush1.msra.mxu0 0.0
        %1359 = vmatprep.subr.mxu0 0.0
        %1360 = vmatpush1.msra.mxu0 0.0
        %1361 = vmatprep.subr.mxu0 0.0
        %1362 = vmatpush1.msra.mxu0 0.0
        %1363 = vmatprep.subr.mxu0 0.0
        %1364 = vmatpush1.msra.mxu0 0.0
        %1365 = vmatprep.subr.mxu0 0.0
        %1366 = vmatpush1.msra.mxu0 0.0
        %1367 = vmatprep.subr.mxu0 0.0
        %1368 = vmatpush1.msra.mxu0 0.0
        %1369 = vmatprep.subr.mxu0 0.0
        %1370 = vmatpush1.msra.mxu0 0.0
        %1371 = vmatprep.subr.mxu0 0.0
        %1372 = vmatpush1.msra.mxu0 0.0
        %1373 = vmatprep.subr.mxu0 0.0
        %1374 = vmatpush1.msra.mxu0 0.0
        %1375 = vmatprep.subr.mxu0 0.0
        %1376 = vmatpush1.msra.mxu0 0.0
        %1377 = vmatprep.subr.mxu0 0.0
        %1378 = vmatpush1.msra.mxu0 0.0
        %1379 = vmatprep.subr.mxu0 0.0
        %1380 = vmatpush1.msra.mxu0 0.0
        %1381 = vmatprep.subr.mxu0 0.0
        %v1382 = vand.u32 %v1272, 4294901760
        %v1383 = vsub.f32 %v1272, %v1382
        %v1384 = vand.u32 %v1383, 4294901760
        %v1385 = vsub.f32 %v1383, %v1384
        %v1386 = vand.u32 %v1385, 4294901760
        %1387 = vmatpush1.msra.mxu0 %v1386
        %1388 = vmatprep.subr.mxu0 0.0
        %v1389 = vand.u32 %v1271, 4294901760
        %v1390 = vsub.f32 %v1271, %v1389
        %v1391 = vand.u32 %v1390, 4294901760
        %v1392 = vsub.f32 %v1390, %v1391
        %v1393 = vand.u32 %v1392, 4294901760
        %1394 = vmatpush1.msra.mxu0 %v1393
        %1395 = vmatprep.subr.mxu0 0.0
        %1396 = vmatpush2.msra.mxu0 0.0
        %1397 = vmatprep.subr.mxu0 0.0
        %1398 = vmatpush2.msra.mxu0 0.0
        %1399 = vmatprep.subr.mxu0 0.0
        %1400 = vmatpush2.msra.mxu0 0.0
        %1401 = vmatprep.subr.mxu0 0.0
        %1402 = vmatpush2.msra.mxu0 0.0
        %1403 = vmatprep.subr.mxu0 0.0
        %1404 = vmatpush2.msra.mxu0 0.0
        %1405 = vmatprep.subr.mxu0 0.0
        %1406 = vmatpush2.msra.mxu0 0.0
        %1407 = vmatprep.subr.mxu0 0.0
        %1408 = vmatpush2.msra.mxu0 0.0
        %1409 = vmatprep.subr.mxu0 0.0
        %1410 = vmatpush2.msra.mxu0 0.0
        %1411 = vmatprep.subr.mxu0 0.0
        %1412 = vmatpush2.msra.mxu0 0.0
        %1413 = vmatprep.subr.mxu0 0.0
        %1414 = vmatpush2.msra.mxu0 0.0
        %1415 = vmatprep.subr.mxu0 0.0
        %1416 = vmatpush2.msra.mxu0 0.0
        %1417 = vmatprep.subr.mxu0 0.0
        %1418 = vmatpush2.msra.mxu0 0.0
        %1419 = vmatprep.subr.mxu0 0.0
        %1420 = vmatpush2.msra.mxu0 0.0
        %1421 = vmatprep.subr.mxu0 0.0
        %1422 = vmatpush2.msra.mxu0 0.0
        %1423 = vmatprep.subr.mxu0 0.0
        %1424 = vmatpush2.msra.mxu0 0.0
        %1425 = vmatprep.subr.mxu0 0.0
        %1426 = vmatpush2.msra.mxu0 0.0
        %1427 = vmatprep.mubr.f32.mxu0 0.0
        %v1428 = vand.u32 %v1274, 4294901760
        %1429 = vmatmul.mubr.f32.gmra.mxu0 %v1428
        %v1430 = vpop.f32.mrf.mxu0
        %v1431 = vadd.f32 %v1350, %v1430
        %v1432 = vpop.f32.mrf.mxu0
        %1433 = vdwg.mxu0
        %1434 = vmatprep.subr.mxu0 0.0
        %1435 = vmatpush1.msra.mxu0 0.0
        %1436 = vmatprep.subr.mxu0 0.0
        %1437 = vmatpush1.msra.mxu0 0.0
        %1438 = vmatprep.subr.mxu0 0.0
        %1439 = vmatpush1.msra.mxu0 0.0
        %1440 = vmatprep.subr.mxu0 0.0
        %1441 = vmatpush1.msra.mxu0 0.0
        %1442 = vmatprep.subr.mxu0 0.0
        %1443 = vmatpush1.msra.mxu0 0.0
        %1444 = vmatprep.subr.mxu0 0.0
        %1445 = vmatpush1.msra.mxu0 0.0
        %1446 = vmatprep.subr.mxu0 0.0
        %1447 = vmatpush1.msra.mxu0 0.0
        %1448 = vmatprep.subr.mxu0 0.0
        %1449 = vmatpush1.msra.mxu0 0.0
        %1450 = vmatprep.subr.mxu0 0.0
        %1451 = vmatpush1.msra.mxu0 0.0
        %1452 = vmatprep.subr.mxu0 0.0
        %1453 = vmatpush1.msra.mxu0 0.0
        %1454 = vmatprep.subr.mxu0 0.0
        %1455 = vmatpush1.msra.mxu0 0.0
        %1456 = vmatprep.subr.mxu0 0.0
        %1457 = vmatpush1.msra.mxu0 0.0
        %1458 = vmatprep.subr.mxu0 0.0
        %1459 = vmatpush1.msra.mxu0 0.0
        %1460 = vmatprep.subr.mxu0 0.0
        %1461 = vmatpush1.msra.mxu0 0.0
        %1462 = vmatprep.subr.mxu0 0.0
        %v1463 = vand.u32 %v1272, 4294901760
        %v1464 = vsub.f32 %v1272, %v1463
        %1465 = vmatpush1.msra.mxu0 %v1464
        %1466 = vmatprep.subr.mxu0 0.0
        %v1467 = vand.u32 %v1271, 4294901760
        %v1468 = vsub.f32 %v1271, %v1467
        %1469 = vmatpush1.msra.mxu0 %v1468
        %1470 = vmatprep.subr.mxu0 0.0
        %1471 = vmatpush2.msra.mxu0 0.0
        %1472 = vmatprep.subr.mxu0 0.0
        %1473 = vmatpush2.msra.mxu0 0.0
        %1474 = vmatprep.subr.mxu0 0.0
        %1475 = vmatpush2.msra.mxu0 0.0
        %1476 = vmatprep.subr.mxu0 0.0
        %1477 = vmatpush2.msra.mxu0 0.0
        %1478 = vmatprep.subr.mxu0 0.0
        %1479 = vmatpush2.msra.mxu0 0.0
        %1480 = vmatprep.subr.mxu0 0.0
        %1481 = vmatpush2.msra.mxu0 0.0
        %1482 = vmatprep.subr.mxu0 0.0
        %1483 = vmatpush2.msra.mxu0 0.0
        %1484 = vmatprep.subr.mxu0 0.0
        %1485 = vmatpush2.msra.mxu0 0.0
        %1486 = vmatprep.subr.mxu0 0.0
        %1487 = vmatpush2.msra.mxu0 0.0
        %1488 = vmatprep.subr.mxu0 0.0
        %1489 = vmatpush2.msra.mxu0 0.0
        %1490 = vmatprep.subr.mxu0 0.0
        %1491 = vmatpush2.msra.mxu0 0.0
        %1492 = vmatprep.subr.mxu0 0.0
        %1493 = vmatpush2.msra.mxu0 0.0
        %1494 = vmatprep.subr.mxu0 0.0
        %1495 = vmatpush2.msra.mxu0 0.0
        %1496 = vmatprep.subr.mxu0 0.0
        %1497 = vmatpush2.msra.mxu0 0.0
        %1498 = vmatprep.subr.mxu0 0.0
        %1499 = vmatpush2.msra.mxu0 0.0
        %1500 = vmatprep.subr.mxu0 0.0
        %1501 = vmatpush2.msra.mxu0 0.0
        %1502 = vmatprep.mubr.f32.mxu0 0.0
        %v1503 = vand.u32 %v1274, 4294901760
        %v1504 = vsub.f32 %v1274, %v1503
        %1505 = vmatmul.mubr.f32.gmra.mxu0 %v1504
        %v1506 = vpop.f32.mrf.mxu0
        %v1507 = vadd.f32 %v1431, %v1506
        %v1508 = vpop.f32.mrf.mxu0
        %1509 = vdwg.mxu0
        %1510 = vmatprep.subr.mxu0 0.0
        %1511 = vmatpush1.msra.mxu0 0.0
        %1512 = vmatprep.subr.mxu0 0.0
        %1513 = vmatpush1.msra.mxu0 0.0
        %1514 = vmatprep.subr.mxu0 0.0
        %1515 = vmatpush1.msra.mxu0 0.0
        %1516 = vmatprep.subr.mxu0 0.0
        %1517 = vmatpush1.msra.mxu0 0.0
        %1518 = vmatprep.subr.mxu0 0.0
        %1519 = vmatpush1.msra.mxu0 0.0
        %1520 = vmatprep.subr.mxu0 0.0
        %1521 = vmatpush1.msra.mxu0 0.0
        %1522 = vmatprep.subr.mxu0 0.0
        %1523 = vmatpush1.msra.mxu0 0.0
        %1524 = vmatprep.subr.mxu0 0.0
        %1525 = vmatpush1.msra.mxu0 0.0
        %1526 = vmatprep.subr.mxu0 0.0
        %1527 = vmatpush1.msra.mxu0 0.0
        %1528 = vmatprep.subr.mxu0 0.0
        %1529 = vmatpush1.msra.mxu0 0.0
        %1530 = vmatprep.subr.mxu0 0.0
        %1531 = vmatpush1.msra.mxu0 0.0
        %1532 = vmatprep.subr.mxu0 0.0
        %1533 = vmatpush1.msra.mxu0 0.0
        %1534 = vmatprep.subr.mxu0 0.0
        %1535 = vmatpush1.msra.mxu0 0.0
        %1536 = vmatprep.subr.mxu0 0.0
        %1537 = vmatpush1.msra.mxu0 0.0
        %1538 = vmatprep.subr.mxu0 0.0
        %v1539 = vand.u32 %v1272, 4294901760
        %1540 = vmatpush1.msra.mxu0 %v1539
        %1541 = vmatprep.subr.mxu0 0.0
        %v1542 = vand.u32 %v1271, 4294901760
        %1543 = vmatpush1.msra.mxu0 %v1542
        %1544 = vmatprep.subr.mxu0 0.0
        %1545 = vmatpush2.msra.mxu0 0.0
        %1546 = vmatprep.subr.mxu0 0.0
        %1547 = vmatpush2.msra.mxu0 0.0
        %1548 = vmatprep.subr.mxu0 0.0
        %1549 = vmatpush2.msra.mxu0 0.0
        %1550 = vmatprep.subr.mxu0 0.0
        %1551 = vmatpush2.msra.mxu0 0.0
        %1552 = vmatprep.subr.mxu0 0.0
        %1553 = vmatpush2.msra.mxu0 0.0
        %1554 = vmatprep.subr.mxu0 0.0
        %1555 = vmatpush2.msra.mxu0 0.0
        %1556 = vmatprep.subr.mxu0 0.0
        %1557 = vmatpush2.msra.mxu0 0.0
        %1558 = vmatprep.subr.mxu0 0.0
        %1559 = vmatpush2.msra.mxu0 0.0
        %1560 = vmatprep.subr.mxu0 0.0
        %1561 = vmatpush2.msra.mxu0 0.0
        %1562 = vmatprep.subr.mxu0 0.0
        %1563 = vmatpush2.msra.mxu0 0.0
        %1564 = vmatprep.subr.mxu0 0.0
        %1565 = vmatpush2.msra.mxu0 0.0
        %1566 = vmatprep.subr.mxu0 0.0
        %1567 = vmatpush2.msra.mxu0 0.0
        %1568 = vmatprep.subr.mxu0 0.0
        %1569 = vmatpush2.msra.mxu0 0.0
        %1570 = vmatprep.subr.mxu0 0.0
        %1571 = vmatpush2.msra.mxu0 0.0
        %1572 = vmatprep.subr.mxu0 0.0
        %1573 = vmatpush2.msra.mxu0 0.0
        %1574 = vmatprep.subr.mxu0 0.0
        %1575 = vmatpush2.msra.mxu0 0.0
        %1576 = vmatprep.mubr.f32.mxu0 0.0
        %v1577 = vand.u32 %v1274, 4294901760
        %v1578 = vsub.f32 %v1274, %v1577
        %v1579 = vand.u32 %v1578, 4294901760
        %1580 = vmatmul.mubr.f32.gmra.mxu0 %v1579
        %v1581 = vpop.f32.mrf.mxu0
        %v1582 = vadd.f32 %v1507, %v1581
        %v1583 = vpop.f32.mrf.mxu0
        %1584 = vdwg.mxu0
        %1585 = vmatprep.subr.mxu0 0.0
        %1586 = vmatpush1.msra.mxu0 0.0
        %1587 = vmatprep.subr.mxu0 0.0
        %1588 = vmatpush1.msra.mxu0 0.0
        %1589 = vmatprep.subr.mxu0 0.0
        %1590 = vmatpush1.msra.mxu0 0.0
        %1591 = vmatprep.subr.mxu0 0.0
        %1592 = vmatpush1.msra.mxu0 0.0
        %1593 = vmatprep.subr.mxu0 0.0
        %1594 = vmatpush1.msra.mxu0 0.0
        %1595 = vmatprep.subr.mxu0 0.0
        %1596 = vmatpush1.msra.mxu0 0.0
        %1597 = vmatprep.subr.mxu0 0.0
        %1598 = vmatpush1.msra.mxu0 0.0
        %1599 = vmatprep.subr.mxu0 0.0
        %1600 = vmatpush1.msra.mxu0 0.0
        %1601 = vmatprep.subr.mxu0 0.0
        %1602 = vmatpush1.msra.mxu0 0.0
        %1603 = vmatprep.subr.mxu0 0.0
        %1604 = vmatpush1.msra.mxu0 0.0
        %1605 = vmatprep.subr.mxu0 0.0
        %1606 = vmatpush1.msra.mxu0 0.0
        %1607 = vmatprep.subr.mxu0 0.0
        %1608 = vmatpush1.msra.mxu0 0.0
        %1609 = vmatprep.subr.mxu0 0.0
        %1610 = vmatpush1.msra.mxu0 0.0
        %1611 = vmatprep.subr.mxu0 0.0
        %1612 = vmatpush1.msra.mxu0 0.0
        %1613 = vmatprep.subr.mxu0 0.0
        %v1614 = vand.u32 %v1272, 4294901760
        %v1615 = vsub.f32 %v1272, %v1614
        %v1616 = vand.u32 %v1615, 4294901760
        %1617 = vmatpush1.msra.mxu0 %v1616
        %1618 = vmatprep.subr.mxu0 0.0
        %v1619 = vand.u32 %v1271, 4294901760
        %v1620 = vsub.f32 %v1271, %v1619
        %v1621 = vand.u32 %v1620, 4294901760
        %1622 = vmatpush1.msra.mxu0 %v1621
        %1623 = vmatprep.subr.mxu0 0.0
        %1624 = vmatpush2.msra.mxu0 0.0
        %1625 = vmatprep.subr.mxu0 0.0
        %1626 = vmatpush2.msra.mxu0 0.0
        %1627 = vmatprep.subr.mxu0 0.0
        %1628 = vmatpush2.msra.mxu0 0.0
        %1629 = vmatprep.subr.mxu0 0.0
        %1630 = vmatpush2.msra.mxu0 0.0
        %1631 = vmatprep.subr.mxu0 0.0
        %1632 = vmatpush2.msra.mxu0 0.0
        %1633 = vmatprep.subr.mxu0 0.0
        %1634 = vmatpush2.msra.mxu0 0.0
        %1635 = vmatprep.subr.mxu0 0.0
        %1636 = vmatpush2.msra.mxu0 0.0
        %1637 = vmatprep.subr.mxu0 0.0
        %1638 = vmatpush2.msra.mxu0 0.0
        %1639 = vmatprep.subr.mxu0 0.0
        %1640 = vmatpush2.msra.mxu0 0.0
        %1641 = vmatprep.subr.mxu0 0.0
        %1642 = vmatpush2.msra.mxu0 0.0
        %1643 = vmatprep.subr.mxu0 0.0
        %1644 = vmatpush2.msra.mxu0 0.0
        %1645 = vmatprep.subr.mxu0 0.0
        %1646 = vmatpush2.msra.mxu0 0.0
        %1647 = vmatprep.subr.mxu0 0.0
        %1648 = vmatpush2.msra.mxu0 0.0
        %1649 = vmatprep.subr.mxu0 0.0
        %1650 = vmatpush2.msra.mxu0 0.0
        %1651 = vmatprep.subr.mxu0 0.0
        %1652 = vmatpush2.msra.mxu0 0.0
        %1653 = vmatprep.subr.mxu0 0.0
        %1654 = vmatpush2.msra.mxu0 0.0
        %1655 = vmatprep.mubr.f32.mxu0 0.0
        %v1656 = vand.u32 %v1274, 4294901760
        %1657 = vmatmul.mubr.f32.gmra.mxu0 %v1656
        %v1658 = vpop.f32.mrf.mxu0
        %v1659 = vadd.f32 %v1582, %v1658
        %v1660 = vpop.f32.mrf.mxu0
        %1661 = vdwg.mxu0
        %1662 = vmatprep.subr.mxu0 0.0
        %1663 = vmatpush1.msra.mxu0 0.0
        %1664 = vmatprep.subr.mxu0 0.0
        %1665 = vmatpush1.msra.mxu0 0.0
        %1666 = vmatprep.subr.mxu0 0.0
        %1667 = vmatpush1.msra.mxu0 0.0
        %1668 = vmatprep.subr.mxu0 0.0
        %1669 = vmatpush1.msra.mxu0 0.0
        %1670 = vmatprep.subr.mxu0 0.0
        %1671 = vmatpush1.msra.mxu0 0.0
        %1672 = vmatprep.subr.mxu0 0.0
        %1673 = vmatpush1.msra.mxu0 0.0
        %1674 = vmatprep.subr.mxu0 0.0
        %1675 = vmatpush1.msra.mxu0 0.0
        %1676 = vmatprep.subr.mxu0 0.0
        %1677 = vmatpush1.msra.mxu0 0.0
        %1678 = vmatprep.subr.mxu0 0.0
        %1679 = vmatpush1.msra.mxu0 0.0
        %1680 = vmatprep.subr.mxu0 0.0
        %1681 = vmatpush1.msra.mxu0 0.0
        %1682 = vmatprep.subr.mxu0 0.0
        %1683 = vmatpush1.msra.mxu0 0.0
        %1684 = vmatprep.subr.mxu0 0.0
        %1685 = vmatpush1.msra.mxu0 0.0
        %1686 = vmatprep.subr.mxu0 0.0
        %1687 = vmatpush1.msra.mxu0 0.0
        %1688 = vmatprep.subr.mxu0 0.0
        %1689 = vmatpush1.msra.mxu0 0.0
        %1690 = vmatprep.subr.mxu0 0.0
        %v1691 = vand.u32 %v1272, 4294901760
        %1692 = vmatpush1.msra.mxu0 %v1691
        %1693 = vmatprep.subr.mxu0 0.0
        %v1694 = vand.u32 %v1271, 4294901760
        %1695 = vmatpush1.msra.mxu0 %v1694
        %1696 = vmatprep.subr.mxu0 0.0
        %1697 = vmatpush2.msra.mxu0 0.0
        %1698 = vmatprep.subr.mxu0 0.0
        %1699 = vmatpush2.msra.mxu0 0.0
        %1700 = vmatprep.subr.mxu0 0.0
        %1701 = vmatpush2.msra.mxu0 0.0
        %1702 = vmatprep.subr.mxu0 0.0
        %1703 = vmatpush2.msra.mxu0 0.0
        %1704 = vmatprep.subr.mxu0 0.0
        %1705 = vmatpush2.msra.mxu0 0.0
        %1706 = vmatprep.subr.mxu0 0.0
        %1707 = vmatpush2.msra.mxu0 0.0
        %1708 = vmatprep.subr.mxu0 0.0
        %1709 = vmatpush2.msra.mxu0 0.0
        %1710 = vmatprep.subr.mxu0 0.0
        %1711 = vmatpush2.msra.mxu0 0.0
        %1712 = vmatprep.subr.mxu0 0.0
        %1713 = vmatpush2.msra.mxu0 0.0
        %1714 = vmatprep.subr.mxu0 0.0
        %1715 = vmatpush2.msra.mxu0 0.0
        %1716 = vmatprep.subr.mxu0 0.0
        %1717 = vmatpush2.msra.mxu0 0.0
        %1718 = vmatprep.subr.mxu0 0.0
        %1719 = vmatpush2.msra.mxu0 0.0
        %1720 = vmatprep.subr.mxu0 0.0
        %1721 = vmatpush2.msra.mxu0 0.0
        %1722 = vmatprep.subr.mxu0 0.0
        %1723 = vmatpush2.msra.mxu0 0.0
        %1724 = vmatprep.subr.mxu0 0.0
        %1725 = vmatpush2.msra.mxu0 0.0
        %1726 = vmatprep.subr.mxu0 0.0
        %1727 = vmatpush2.msra.mxu0 0.0
        %1728 = vmatprep.mubr.f32.mxu0 0.0
        %v1729 = vand.u32 %v1274, 4294901760
        %1730 = vmatmul.mubr.f32.gmra.mxu0 %v1729
        %v1731 = vpop.f32.mrf.mxu0
        %v1732 = vadd.f32 %v1659, %v1731
        %v1733 = vpop.f32.mrf.mxu0
        %1734 = vdwg.mxu0
        %vm1735 = vcmask 125952
        %1736 = vst.msk [vmem:[%s212] sm:$0xf] %vm1735, %v1732
        %v1738 = vsel %vm219, %v1264, 0
        %1740 = vmatprep.subr.mxu0 0.0
        %1741 = vmatpush1.msra.mxu0 0.0
        %1742 = vmatprep.subr.mxu0 0.0
        %1743 = vmatpush1.msra.mxu0 0.0
        %1744 = vmatprep.subr.mxu0 0.0
        %1745 = vmatpush1.msra.mxu0 0.0
        %1746 = vmatprep.subr.mxu0 0.0
        %1747 = vmatpush1.msra.mxu0 0.0
        %1748 = vmatprep.subr.mxu0 0.0
        %1749 = vmatpush1.msra.mxu0 0.0
        %1750 = vmatprep.subr.mxu0 0.0
        %1751 = vmatpush1.msra.mxu0 0.0
        %1752 = vmatprep.subr.mxu0 0.0
        %1753 = vmatpush1.msra.mxu0 0.0
        %1754 = vmatprep.subr.mxu0 0.0
        %1755 = vmatpush1.msra.mxu0 0.0
        %1756 = vmatprep.subr.mxu0 0.0
        %1757 = vmatpush1.msra.mxu0 0.0
        %1758 = vmatprep.subr.mxu0 0.0
        %1759 = vmatpush1.msra.mxu0 0.0
        %1760 = vmatprep.subr.mxu0 0.0
        %1761 = vmatpush1.msra.mxu0 0.0
        %1762 = vmatprep.subr.mxu0 0.0
        %1763 = vmatpush1.msra.mxu0 0.0
        %1764 = vmatprep.subr.mxu0 0.0
        %1765 = vmatpush1.msra.mxu0 0.0
        %1766 = vmatprep.subr.mxu0 0.0
        %1767 = vmatpush1.msra.mxu0 0.0
        %1768 = vmatprep.subr.mxu0 0.0
        %v1769 = vand.u32 %v1272, 4294901760
        %1770 = vmatpush1.msra.mxu0 %v1769
        %1771 = vmatprep.subr.mxu0 0.0
        %v1772 = vand.u32 %v1271, 4294901760
        %1773 = vmatpush1.msra.mxu0 %v1772
        %1774 = vmatprep.subr.mxu0 0.0
        %1775 = vmatpush2.msra.mxu0 0.0
        %1776 = vmatprep.subr.mxu0 0.0
        %1777 = vmatpush2.msra.mxu0 0.0
        %1778 = vmatprep.subr.mxu0 0.0
        %1779 = vmatpush2.msra.mxu0 0.0
        %1780 = vmatprep.subr.mxu0 0.0
        %1781 = vmatpush2.msra.mxu0 0.0
        %1782 = vmatprep.subr.mxu0 0.0
        %1783 = vmatpush2.msra.mxu0 0.0
        %1784 = vmatprep.subr.mxu0 0.0
        %1785 = vmatpush2.msra.mxu0 0.0
        %1786 = vmatprep.subr.mxu0 0.0
        %1787 = vmatpush2.msra.mxu0 0.0
        %1788 = vmatprep.subr.mxu0 0.0
        %1789 = vmatpush2.msra.mxu0 0.0
        %1790 = vmatprep.subr.mxu0 0.0
        %1791 = vmatpush2.msra.mxu0 0.0
        %1792 = vmatprep.subr.mxu0 0.0
        %1793 = vmatpush2.msra.mxu0 0.0
        %1794 = vmatprep.subr.mxu0 0.0
        %1795 = vmatpush2.msra.mxu0 0.0
        %1796 = vmatprep.subr.mxu0 0.0
        %1797 = vmatpush2.msra.mxu0 0.0
        %1798 = vmatprep.subr.mxu0 0.0
        %1799 = vmatpush2.msra.mxu0 0.0
        %1800 = vmatprep.subr.mxu0 0.0
        %1801 = vmatpush2.msra.mxu0 0.0
        %1802 = vmatprep.subr.mxu0 0.0
        %1803 = vmatpush2.msra.mxu0 0.0
        %1804 = vmatprep.subr.mxu0 0.0
        %1805 = vmatpush2.msra.mxu0 0.0
        %1806 = vmatprep.mubr.f32.mxu0 0.0
        %v1807 = vand.u32 %v1738, 4294901760
        %v1808 = vsub.f32 %v1738, %v1807
        %v1809 = vand.u32 %v1808, 4294901760
        %v1810 = vsub.f32 %v1808, %v1809
        %v1811 = vand.u32 %v1810, 4294901760
        %1812 = vmatmul.mubr.f32.gmra.mxu0 %v1811
        %v1813 = vpop.f32.mrf.mxu0
        %v1814 = vadd.f32 0.0, %v1813
        %v1815 = vpop.f32.mrf.mxu0
        %1816 = vdwg.mxu0
        %1817 = vmatprep.subr.mxu0 0.0
        %1818 = vmatpush1.msra.mxu0 0.0
        %1819 = vmatprep.subr.mxu0 0.0
        %1820 = vmatpush1.msra.mxu0 0.0
        %1821 = vmatprep.subr.mxu0 0.0
        %1822 = vmatpush1.msra.mxu0 0.0
        %1823 = vmatprep.subr.mxu0 0.0
        %1824 = vmatpush1.msra.mxu0 0.0
        %1825 = vmatprep.subr.mxu0 0.0
        %1826 = vmatpush1.msra.mxu0 0.0
        %1827 = vmatprep.subr.mxu0 0.0
        %1828 = vmatpush1.msra.mxu0 0.0
        %1829 = vmatprep.subr.mxu0 0.0
        %1830 = vmatpush1.msra.mxu0 0.0
        %1831 = vmatprep.subr.mxu0 0.0
        %1832 = vmatpush1.msra.mxu0 0.0
        %1833 = vmatprep.subr.mxu0 0.0
        %1834 = vmatpush1.msra.mxu0 0.0
        %1835 = vmatprep.subr.mxu0 0.0
        %1836 = vmatpush1.msra.mxu0 0.0
        %1837 = vmatprep.subr.mxu0 0.0
        %1838 = vmatpush1.msra.mxu0 0.0
        %1839 = vmatprep.subr.mxu0 0.0
        %1840 = vmatpush1.msra.mxu0 0.0
        %1841 = vmatprep.subr.mxu0 0.0
        %1842 = vmatpush1.msra.mxu0 0.0
        %1843 = vmatprep.subr.mxu0 0.0
        %1844 = vmatpush1.msra.mxu0 0.0
        %1845 = vmatprep.subr.mxu0 0.0
        %v1846 = vand.u32 %v1272, 4294901760
        %v1847 = vsub.f32 %v1272, %v1846
        %v1848 = vand.u32 %v1847, 4294901760
        %v1849 = vsub.f32 %v1847, %v1848
        %v1850 = vand.u32 %v1849, 4294901760
        %1851 = vmatpush1.msra.mxu0 %v1850
        %1852 = vmatprep.subr.mxu0 0.0
        %v1853 = vand.u32 %v1271, 4294901760
        %v1854 = vsub.f32 %v1271, %v1853
        %v1855 = vand.u32 %v1854, 4294901760
        %v1856 = vsub.f32 %v1854, %v1855
        %v1857 = vand.u32 %v1856, 4294901760
        %1858 = vmatpush1.msra.mxu0 %v1857
        %1859 = vmatprep.subr.mxu0 0.0
        %1860 = vmatpush2.msra.mxu0 0.0
        %1861 = vmatprep.subr.mxu0 0.0
        %1862 = vmatpush2.msra.mxu0 0.0
        %1863 = vmatprep.subr.mxu0 0.0
        %1864 = vmatpush2.msra.mxu0 0.0
        %1865 = vmatprep.subr.mxu0 0.0
        %1866 = vmatpush2.msra.mxu0 0.0
        %1867 = vmatprep.subr.mxu0 0.0
        %1868 = vmatpush2.msra.mxu0 0.0
        %1869 = vmatprep.subr.mxu0 0.0
        %1870 = vmatpush2.msra.mxu0 0.0
        %1871 = vmatprep.subr.mxu0 0.0
        %1872 = vmatpush2.msra.mxu0 0.0
        %1873 = vmatprep.subr.mxu0 0.0
        %1874 = vmatpush2.msra.mxu0 0.0
        %1875 = vmatprep.subr.mxu0 0.0
        %1876 = vmatpush2.msra.mxu0 0.0
        %1877 = vmatprep.subr.mxu0 0.0
        %1878 = vmatpush2.msra.mxu0 0.0
        %1879 = vmatprep.subr.mxu0 0.0
        %1880 = vmatpush2.msra.mxu0 0.0
        %1881 = vmatprep.subr.mxu0 0.0
        %1882 = vmatpush2.msra.mxu0 0.0
        %1883 = vmatprep.subr.mxu0 0.0
        %1884 = vmatpush2.msra.mxu0 0.0
        %1885 = vmatprep.subr.mxu0 0.0
        %1886 = vmatpush2.msra.mxu0 0.0
        %1887 = vmatprep.subr.mxu0 0.0
        %1888 = vmatpush2.msra.mxu0 0.0
        %1889 = vmatprep.subr.mxu0 0.0
        %1890 = vmatpush2.msra.mxu0 0.0
        %1891 = vmatprep.mubr.f32.mxu0 0.0
        %v1892 = vand.u32 %v1738, 4294901760
        %1893 = vmatmul.mubr.f32.gmra.mxu0 %v1892
        %v1894 = vpop.f32.mrf.mxu0
        %v1895 = vadd.f32 %v1814, %v1894
        %v1896 = vpop.f32.mrf.mxu0
        %1897 = vdwg.mxu0
        %1898 = vmatprep.subr.mxu0 0.0
        %1899 = vmatpush1.msra.mxu0 0.0
        %1900 = vmatprep.subr.mxu0 0.0
        %1901 = vmatpush1.msra.mxu0 0.0
        %1902 = vmatprep.subr.mxu0 0.0
        %1903 = vmatpush1.msra.mxu0 0.0
        %1904 = vmatprep.subr.mxu0 0.0
        %1905 = vmatpush1.msra.mxu0 0.0
        %1906 = vmatprep.subr.mxu0 0.0
        %1907 = vmatpush1.msra.mxu0 0.0
        %1908 = vmatprep.subr.mxu0 0.0
        %1909 = vmatpush1.msra.mxu0 0.0
        %1910 = vmatprep.subr.mxu0 0.0
        %1911 = vmatpush1.msra.mxu0 0.0
        %1912 = vmatprep.subr.mxu0 0.0
        %1913 = vmatpush1.msra.mxu0 0.0
        %1914 = vmatprep.subr.mxu0 0.0
        %1915 = vmatpush1.msra.mxu0 0.0
        %1916 = vmatprep.subr.mxu0 0.0
        %1917 = vmatpush1.msra.mxu0 0.0
        %1918 = vmatprep.subr.mxu0 0.0
        %1919 = vmatpush1.msra.mxu0 0.0
        %1920 = vmatprep.subr.mxu0 0.0
        %1921 = vmatpush1.msra.mxu0 0.0
        %1922 = vmatprep.subr.mxu0 0.0
        %1923 = vmatpush1.msra.mxu0 0.0
        %1924 = vmatprep.subr.mxu0 0.0
        %1925 = vmatpush1.msra.mxu0 0.0
        %1926 = vmatprep.subr.mxu0 0.0
        %v1927 = vand.u32 %v1272, 4294901760
        %v1928 = vsub.f32 %v1272, %v1927
        %1929 = vmatpush1.msra.mxu0 %v1928
        %1930 = vmatprep.subr.mxu0 0.0
        %v1931 = vand.u32 %v1271, 4294901760
        %v1932 = vsub.f32 %v1271, %v1931
        %1933 = vmatpush1.msra.mxu0 %v1932
        %1934 = vmatprep.subr.mxu0 0.0
        %1935 = vmatpush2.msra.mxu0 0.0
        %1936 = vmatprep.subr.mxu0 0.0
        %1937 = vmatpush2.msra.mxu0 0.0
        %1938 = vmatprep.subr.mxu0 0.0
        %1939 = vmatpush2.msra.mxu0 0.0
        %1940 = vmatprep.subr.mxu0 0.0
        %1941 = vmatpush2.msra.mxu0 0.0
        %1942 = vmatprep.subr.mxu0 0.0
        %1943 = vmatpush2.msra.mxu0 0.0
        %1944 = vmatprep.subr.mxu0 0.0
        %1945 = vmatpush2.msra.mxu0 0.0
        %1946 = vmatprep.subr.mxu0 0.0
        %1947 = vmatpush2.msra.mxu0 0.0
        %1948 = vmatprep.subr.mxu0 0.0
        %1949 = vmatpush2.msra.mxu0 0.0
        %1950 = vmatprep.subr.mxu0 0.0
        %1951 = vmatpush2.msra.mxu0 0.0
        %1952 = vmatprep.subr.mxu0 0.0
        %1953 = vmatpush2.msra.mxu0 0.0
        %1954 = vmatprep.subr.mxu0 0.0
        %1955 = vmatpush2.msra.mxu0 0.0
        %1956 = vmatprep.subr.mxu0 0.0
        %1957 = vmatpush2.msra.mxu0 0.0
        %1958 = vmatprep.subr.mxu0 0.0
        %1959 = vmatpush2.msra.mxu0 0.0
        %1960 = vmatprep.subr.mxu0 0.0
        %1961 = vmatpush2.msra.mxu0 0.0
        %1962 = vmatprep.subr.mxu0 0.0
        %1963 = vmatpush2.msra.mxu0 0.0
        %1964 = vmatprep.subr.mxu0 0.0
        %1965 = vmatpush2.msra.mxu0 0.0
        %1966 = vmatprep.mubr.f32.mxu0 0.0
        %v1967 = vand.u32 %v1738, 4294901760
        %v1968 = vsub.f32 %v1738, %v1967
        %1969 = vmatmul.mubr.f32.gmra.mxu0 %v1968
        %v1970 = vpop.f32.mrf.mxu0
        %v1971 = vadd.f32 %v1895, %v1970
        %v1972 = vpop.f32.mrf.mxu0
        %1973 = vdwg.mxu0
        %1974 = vmatprep.subr.mxu0 0.0
        %1975 = vmatpush1.msra.mxu0 0.0
        %1976 = vmatprep.subr.mxu0 0.0
        %1977 = vmatpush1.msra.mxu0 0.0
        %1978 = vmatprep.subr.mxu0 0.0
        %1979 = vmatpush1.msra.mxu0 0.0
        %1980 = vmatprep.subr.mxu0 0.0
        %1981 = vmatpush1.msra.mxu0 0.0
        %1982 = vmatprep.subr.mxu0 0.0
        %1983 = vmatpush1.msra.mxu0 0.0
        %1984 = vmatprep.subr.mxu0 0.0
        %1985 = vmatpush1.msra.mxu0 0.0
        %1986 = vmatprep.subr.mxu0 0.0
        %1987 = vmatpush1.msra.mxu0 0.0
        %1988 = vmatprep.subr.mxu0 0.0
        %1989 = vmatpush1.msra.mxu0 0.0
        %1990 = vmatprep.subr.mxu0 0.0
        %1991 = vmatpush1.msra.mxu0 0.0
        %1992 = vmatprep.subr.mxu0 0.0
        %1993 = vmatpush1.msra.mxu0 0.0
        %1994 = vmatprep.subr.mxu0 0.0
        %1995 = vmatpush1.msra.mxu0 0.0
        %1996 = vmatprep.subr.mxu0 0.0
        %1997 = vmatpush1.msra.mxu0 0.0
        %1998 = vmatprep.subr.mxu0 0.0
        %1999 = vmatpush1.msra.mxu0 0.0
        %2000 = vmatprep.subr.mxu0 0.0
        %2001 = vmatpush1.msra.mxu0 0.0
        %2002 = vmatprep.subr.mxu0 0.0
        %v2003 = vand.u32 %v1272, 4294901760
        %2004 = vmatpush1.msra.mxu0 %v2003
        %2005 = vmatprep.subr.mxu0 0.0
        %v2006 = vand.u32 %v1271, 4294901760
        %2007 = vmatpush1.msra.mxu0 %v2006
        %2008 = vmatprep.subr.mxu0 0.0
        %2009 = vmatpush2.msra.mxu0 0.0
        %2010 = vmatprep.subr.mxu0 0.0
        %2011 = vmatpush2.msra.mxu0 0.0
        %2012 = vmatprep.subr.mxu0 0.0
        %2013 = vmatpush2.msra.mxu0 0.0
        %2014 = vmatprep.subr.mxu0 0.0
        %2015 = vmatpush2.msra.mxu0 0.0
        %2016 = vmatprep.subr.mxu0 0.0
        %2017 = vmatpush2.msra.mxu0 0.0
        %2018 = vmatprep.subr.mxu0 0.0
        %2019 = vmatpush2.msra.mxu0 0.0
        %2020 = vmatprep.subr.mxu0 0.0
        %2021 = vmatpush2.msra.mxu0 0.0
        %2022 = vmatprep.subr.mxu0 0.0
        %2023 = vmatpush2.msra.mxu0 0.0
        %2024 = vmatprep.subr.mxu0 0.0
        %2025 = vmatpush2.msra.mxu0 0.0
        %2026 = vmatprep.subr.mxu0 0.0
        %2027 = vmatpush2.msra.mxu0 0.0
        %2028 = vmatprep.subr.mxu0 0.0
        %2029 = vmatpush2.msra.mxu0 0.0
        %2030 = vmatprep.subr.mxu0 0.0
        %2031 = vmatpush2.msra.mxu0 0.0
        %2032 = vmatprep.subr.mxu0 0.0
        %2033 = vmatpush2.msra.mxu0 0.0
        %2034 = vmatprep.subr.mxu0 0.0
        %2035 = vmatpush2.msra.mxu0 0.0
        %2036 = vmatprep.subr.mxu0 0.0
        %2037 = vmatpush2.msra.mxu0 0.0
        %2038 = vmatprep.subr.mxu0 0.0
        %2039 = vmatpush2.msra.mxu0 0.0
        %2040 = vmatprep.mubr.f32.mxu0 0.0
        %v2041 = vand.u32 %v1738, 4294901760
        %v2042 = vsub.f32 %v1738, %v2041
        %v2043 = vand.u32 %v2042, 4294901760
        %2044 = vmatmul.mubr.f32.gmra.mxu0 %v2043
        %v2045 = vpop.f32.mrf.mxu0
        %v2046 = vadd.f32 %v1971, %v2045
        %v2047 = vpop.f32.mrf.mxu0
        %2048 = vdwg.mxu0
        %2049 = vmatprep.subr.mxu0 0.0
        %2050 = vmatpush1.msra.mxu0 0.0
        %2051 = vmatprep.subr.mxu0 0.0
        %2052 = vmatpush1.msra.mxu0 0.0
        %2053 = vmatprep.subr.mxu0 0.0
        %2054 = vmatpush1.msra.mxu0 0.0
        %2055 = vmatprep.subr.mxu0 0.0
        %2056 = vmatpush1.msra.mxu0 0.0
        %2057 = vmatprep.subr.mxu0 0.0
        %2058 = vmatpush1.msra.mxu0 0.0
        %2059 = vmatprep.subr.mxu0 0.0
        %2060 = vmatpush1.msra.mxu0 0.0
        %2061 = vmatprep.subr.mxu0 0.0
        %2062 = vmatpush1.msra.mxu0 0.0
        %2063 = vmatprep.subr.mxu0 0.0
        %2064 = vmatpush1.msra.mxu0 0.0
        %2065 = vmatprep.subr.mxu0 0.0
        %2066 = vmatpush1.msra.mxu0 0.0
        %2067 = vmatprep.subr.mxu0 0.0
        %2068 = vmatpush1.msra.mxu0 0.0
        %2069 = vmatprep.subr.mxu0 0.0
        %2070 = vmatpush1.msra.mxu0 0.0
        %2071 = vmatprep.subr.mxu0 0.0
        %2072 = vmatpush1.msra.mxu0 0.0
        %2073 = vmatprep.subr.mxu0 0.0
        %2074 = vmatpush1.msra.mxu0 0.0
        %2075 = vmatprep.subr.mxu0 0.0
        %2076 = vmatpush1.msra.mxu0 0.0
        %2077 = vmatprep.subr.mxu0 0.0
        %v2078 = vand.u32 %v1272, 4294901760
        %v2079 = vsub.f32 %v1272, %v2078
        %v2080 = vand.u32 %v2079, 4294901760
        %2081 = vmatpush1.msra.mxu0 %v2080
        %2082 = vmatprep.subr.mxu0 0.0
        %v2083 = vand.u32 %v1271, 4294901760
        %v2084 = vsub.f32 %v1271, %v2083
        %v2085 = vand.u32 %v2084, 4294901760
        %2086 = vmatpush1.msra.mxu0 %v2085
        %2087 = vmatprep.subr.mxu0 0.0
        %2088 = vmatpush2.msra.mxu0 0.0
        %2089 = vmatprep.subr.mxu0 0.0
        %2090 = vmatpush2.msra.mxu0 0.0
        %2091 = vmatprep.subr.mxu0 0.0
        %2092 = vmatpush2.msra.mxu0 0.0
        %2093 = vmatprep.subr.mxu0 0.0
        %2094 = vmatpush2.msra.mxu0 0.0
        %2095 = vmatprep.subr.mxu0 0.0
        %2096 = vmatpush2.msra.mxu0 0.0
        %2097 = vmatprep.subr.mxu0 0.0
        %2098 = vmatpush2.msra.mxu0 0.0
        %2099 = vmatprep.subr.mxu0 0.0
        %2100 = vmatpush2.msra.mxu0 0.0
        %2101 = vmatprep.subr.mxu0 0.0
        %2102 = vmatpush2.msra.mxu0 0.0
        %2103 = vmatprep.subr.mxu0 0.0
        %2104 = vmatpush2.msra.mxu0 0.0
        %2105 = vmatprep.subr.mxu0 0.0
        %2106 = vmatpush2.msra.mxu0 0.0
        %2107 = vmatprep.subr.mxu0 0.0
        %2108 = vmatpush2.msra.mxu0 0.0
        %2109 = vmatprep.subr.mxu0 0.0
        %2110 = vmatpush2.msra.mxu0 0.0
        %2111 = vmatprep.subr.mxu0 0.0
        %2112 = vmatpush2.msra.mxu0 0.0
        %2113 = vmatprep.subr.mxu0 0.0
        %2114 = vmatpush2.msra.mxu0 0.0
        %2115 = vmatprep.subr.mxu0 0.0
        %2116 = vmatpush2.msra.mxu0 0.0
        %2117 = vmatprep.subr.mxu0 0.0
        %2118 = vmatpush2.msra.mxu0 0.0
        %2119 = vmatprep.mubr.f32.mxu0 0.0
        %v2120 = vand.u32 %v1738, 4294901760
        %2121 = vmatmul.mubr.f32.gmra.mxu0 %v2120
        %v2122 = vpop.f32.mrf.mxu0
        %v2123 = vadd.f32 %v2046, %v2122
        %v2124 = vpop.f32.mrf.mxu0
        %2125 = vdwg.mxu0
        %2126 = vmatprep.subr.mxu0 0.0
        %2127 = vmatpush1.msra.mxu0 0.0
        %2128 = vmatprep.subr.mxu0 0.0
        %2129 = vmatpush1.msra.mxu0 0.0
        %2130 = vmatprep.subr.mxu0 0.0
        %2131 = vmatpush1.msra.mxu0 0.0
        %2132 = vmatprep.subr.mxu0 0.0
        %2133 = vmatpush1.msra.mxu0 0.0
        %2134 = vmatprep.subr.mxu0 0.0
        %2135 = vmatpush1.msra.mxu0 0.0
        %2136 = vmatprep.subr.mxu0 0.0
        %2137 = vmatpush1.msra.mxu0 0.0
        %2138 = vmatprep.subr.mxu0 0.0
        %2139 = vmatpush1.msra.mxu0 0.0
        %2140 = vmatprep.subr.mxu0 0.0
        %2141 = vmatpush1.msra.mxu0 0.0
        %2142 = vmatprep.subr.mxu0 0.0
        %2143 = vmatpush1.msra.mxu0 0.0
        %2144 = vmatprep.subr.mxu0 0.0
        %2145 = vmatpush1.msra.mxu0 0.0
        %2146 = vmatprep.subr.mxu0 0.0
        %2147 = vmatpush1.msra.mxu0 0.0
        %2148 = vmatprep.subr.mxu0 0.0
        %2149 = vmatpush1.msra.mxu0 0.0
        %2150 = vmatprep.subr.mxu0 0.0
        %2151 = vmatpush1.msra.mxu0 0.0
        %2152 = vmatprep.subr.mxu0 0.0
        %2153 = vmatpush1.msra.mxu0 0.0
        %2154 = vmatprep.subr.mxu0 0.0
        %v2155 = vand.u32 %v1272, 4294901760
        %2156 = vmatpush1.msra.mxu0 %v2155
        %2157 = vmatprep.subr.mxu0 0.0
        %v2158 = vand.u32 %v1271, 4294901760
        %2159 = vmatpush1.msra.mxu0 %v2158
        %2160 = vmatprep.subr.mxu0 0.0
        %2161 = vmatpush2.msra.mxu0 0.0
        %2162 = vmatprep.subr.mxu0 0.0
        %2163 = vmatpush2.msra.mxu0 0.0
        %2164 = vmatprep.subr.mxu0 0.0
        %2165 = vmatpush2.msra.mxu0 0.0
        %2166 = vmatprep.subr.mxu0 0.0
        %2167 = vmatpush2.msra.mxu0 0.0
        %2168 = vmatprep.subr.mxu0 0.0
        %2169 = vmatpush2.msra.mxu0 0.0
        %2170 = vmatprep.subr.mxu0 0.0
        %2171 = vmatpush2.msra.mxu0 0.0
        %2172 = vmatprep.subr.mxu0 0.0
        %2173 = vmatpush2.msra.mxu0 0.0
        %2174 = vmatprep.subr.mxu0 0.0
        %2175 = vmatpush2.msra.mxu0 0.0
        %2176 = vmatprep.subr.mxu0 0.0
        %2177 = vmatpush2.msra.mxu0 0.0
        %2178 = vmatprep.subr.mxu0 0.0
        %2179 = vmatpush2.msra.mxu0 0.0
        %2180 = vmatprep.subr.mxu0 0.0
        %2181 = vmatpush2.msra.mxu0 0.0
        %2182 = vmatprep.subr.mxu0 0.0
        %2183 = vmatpush2.msra.mxu0 0.0
        %2184 = vmatprep.subr.mxu0 0.0
        %2185 = vmatpush2.msra.mxu0 0.0
        %2186 = vmatprep.subr.mxu0 0.0
        %2187 = vmatpush2.msra.mxu0 0.0
        %2188 = vmatprep.subr.mxu0 0.0
        %2189 = vmatpush2.msra.mxu0 0.0
        %2190 = vmatprep.subr.mxu0 0.0
        %2191 = vmatpush2.msra.mxu0 0.0
        %2192 = vmatprep.mubr.f32.mxu0 0.0
        %v2193 = vand.u32 %v1738, 4294901760
        %2194 = vmatmul.mubr.f32.gmra.mxu0 %v2193
        %v2195 = vpop.f32.mrf.mxu0
        %v2196 = vadd.f32 %v2123, %v2195
        %v2197 = vpop.f32.mrf.mxu0
        %2198 = vdwg.mxu0
        %2199 = vst.msk [vmem:[%s212 + $0x4] sm:$0xf] %vm1735, %v2196
        %v2201 = vsel %vm219, %v1265, 0
        %2203 = vmatprep.subr.mxu0 0.0
        %2204 = vmatpush1.msra.mxu0 0.0
        %2205 = vmatprep.subr.mxu0 0.0
        %2206 = vmatpush1.msra.mxu0 0.0
        %2207 = vmatprep.subr.mxu0 0.0
        %2208 = vmatpush1.msra.mxu0 0.0
        %2209 = vmatprep.subr.mxu0 0.0
        %2210 = vmatpush1.msra.mxu0 0.0
        %2211 = vmatprep.subr.mxu0 0.0
        %2212 = vmatpush1.msra.mxu0 0.0
        %2213 = vmatprep.subr.mxu0 0.0
        %2214 = vmatpush1.msra.mxu0 0.0
        %2215 = vmatprep.subr.mxu0 0.0
        %2216 = vmatpush1.msra.mxu0 0.0
        %2217 = vmatprep.subr.mxu0 0.0
        %2218 = vmatpush1.msra.mxu0 0.0
        %2219 = vmatprep.subr.mxu0 0.0
        %2220 = vmatpush1.msra.mxu0 0.0
        %2221 = vmatprep.subr.mxu0 0.0
        %2222 = vmatpush1.msra.mxu0 0.0
        %2223 = vmatprep.subr.mxu0 0.0
        %2224 = vmatpush1.msra.mxu0 0.0
        %2225 = vmatprep.subr.mxu0 0.0
        %2226 = vmatpush1.msra.mxu0 0.0
        %2227 = vmatprep.subr.mxu0 0.0
        %2228 = vmatpush1.msra.mxu0 0.0
        %2229 = vmatprep.subr.mxu0 0.0
        %2230 = vmatpush1.msra.mxu0 0.0
        %2231 = vmatprep.subr.mxu0 0.0
        %v2232 = vand.u32 %v1272, 4294901760
        %2233 = vmatpush1.msra.mxu0 %v2232
        %2234 = vmatprep.subr.mxu0 0.0
        %v2235 = vand.u32 %v1271, 4294901760
        %2236 = vmatpush1.msra.mxu0 %v2235
        %2237 = vmatprep.subr.mxu0 0.0
        %2238 = vmatpush2.msra.mxu0 0.0
        %2239 = vmatprep.subr.mxu0 0.0
        %2240 = vmatpush2.msra.mxu0 0.0
        %2241 = vmatprep.subr.mxu0 0.0
        %2242 = vmatpush2.msra.mxu0 0.0
        %2243 = vmatprep.subr.mxu0 0.0
        %2244 = vmatpush2.msra.mxu0 0.0
        %2245 = vmatprep.subr.mxu0 0.0
        %2246 = vmatpush2.msra.mxu0 0.0
        %2247 = vmatprep.subr.mxu0 0.0
        %2248 = vmatpush2.msra.mxu0 0.0
        %2249 = vmatprep.subr.mxu0 0.0
        %2250 = vmatpush2.msra.mxu0 0.0
        %2251 = vmatprep.subr.mxu0 0.0
        %2252 = vmatpush2.msra.mxu0 0.0
        %2253 = vmatprep.subr.mxu0 0.0
        %2254 = vmatpush2.msra.mxu0 0.0
        %2255 = vmatprep.subr.mxu0 0.0
        %2256 = vmatpush2.msra.mxu0 0.0
        %2257 = vmatprep.subr.mxu0 0.0
        %2258 = vmatpush2.msra.mxu0 0.0
        %2259 = vmatprep.subr.mxu0 0.0
        %2260 = vmatpush2.msra.mxu0 0.0
        %2261 = vmatprep.subr.mxu0 0.0
        %2262 = vmatpush2.msra.mxu0 0.0
        %2263 = vmatprep.subr.mxu0 0.0
        %2264 = vmatpush2.msra.mxu0 0.0
        %2265 = vmatprep.subr.mxu0 0.0
        %2266 = vmatpush2.msra.mxu0 0.0
        %2267 = vmatprep.subr.mxu0 0.0
        %2268 = vmatpush2.msra.mxu0 0.0
        %2269 = vmatprep.mubr.f32.mxu0 0.0
        %v2270 = vand.u32 %v2201, 4294901760
        %v2271 = vsub.f32 %v2201, %v2270
        %v2272 = vand.u32 %v2271, 4294901760
        %v2273 = vsub.f32 %v2271, %v2272
        %v2274 = vand.u32 %v2273, 4294901760
        %2275 = vmatmul.mubr.f32.gmra.mxu0 %v2274
        %v2276 = vpop.f32.mrf.mxu0
        %v2277 = vadd.f32 0.0, %v2276
        %v2278 = vpop.f32.mrf.mxu0
        %2279 = vdwg.mxu0
        %2280 = vmatprep.subr.mxu0 0.0
        %2281 = vmatpush1.msra.mxu0 0.0
        %2282 = vmatprep.subr.mxu0 0.0
        %2283 = vmatpush1.msra.mxu0 0.0
        %2284 = vmatprep.subr.mxu0 0.0
        %2285 = vmatpush1.msra.mxu0 0.0
        %2286 = vmatprep.subr.mxu0 0.0
        %2287 = vmatpush1.msra.mxu0 0.0
        %2288 = vmatprep.subr.mxu0 0.0
        %2289 = vmatpush1.msra.mxu0 0.0
        %2290 = vmatprep.subr.mxu0 0.0
        %2291 = vmatpush1.msra.mxu0 0.0
        %2292 = vmatprep.subr.mxu0 0.0
        %2293 = vmatpush1.msra.mxu0 0.0
        %2294 = vmatprep.subr.mxu0 0.0
        %2295 = vmatpush1.msra.mxu0 0.0
        %2296 = vmatprep.subr.mxu0 0.0
        %2297 = vmatpush1.msra.mxu0 0.0
        %2298 = vmatprep.subr.mxu0 0.0
        %2299 = vmatpush1.msra.mxu0 0.0
        %2300 = vmatprep.subr.mxu0 0.0
        %2301 = vmatpush1.msra.mxu0 0.0
        %2302 = vmatprep.subr.mxu0 0.0
        %2303 = vmatpush1.msra.mxu0 0.0
        %2304 = vmatprep.subr.mxu0 0.0
        %2305 = vmatpush1.msra.mxu0 0.0
        %2306 = vmatprep.subr.mxu0 0.0
        %2307 = vmatpush1.msra.mxu0 0.0
        %2308 = vmatprep.subr.mxu0 0.0
        %v2309 = vand.u32 %v1272, 4294901760
        %v2310 = vsub.f32 %v1272, %v2309
        %v2311 = vand.u32 %v2310, 4294901760
        %v2312 = vsub.f32 %v2310, %v2311
        %v2313 = vand.u32 %v2312, 4294901760
        %2314 = vmatpush1.msra.mxu0 %v2313
        %2315 = vmatprep.subr.mxu0 0.0
        %v2316 = vand.u32 %v1271, 4294901760
        %v2317 = vsub.f32 %v1271, %v2316
        %v2318 = vand.u32 %v2317, 4294901760
        %v2319 = vsub.f32 %v2317, %v2318
        %v2320 = vand.u32 %v2319, 4294901760
        %2321 = vmatpush1.msra.mxu0 %v2320
        %2322 = vmatprep.subr.mxu0 0.0
        %2323 = vmatpush2.msra.mxu0 0.0
        %2324 = vmatprep.subr.mxu0 0.0
        %2325 = vmatpush2.msra.mxu0 0.0
        %2326 = vmatprep.subr.mxu0 0.0
        %2327 = vmatpush2.msra.mxu0 0.0
        %2328 = vmatprep.subr.mxu0 0.0
        %2329 = vmatpush2.msra.mxu0 0.0
        %2330 = vmatprep.subr.mxu0 0.0
        %2331 = vmatpush2.msra.mxu0 0.0
        %2332 = vmatprep.subr.mxu0 0.0
        %2333 = vmatpush2.msra.mxu0 0.0
        %2334 = vmatprep.subr.mxu0 0.0
        %2335 = vmatpush2.msra.mxu0 0.0
        %2336 = vmatprep.subr.mxu0 0.0
        %2337 = vmatpush2.msra.mxu0 0.0
        %2338 = vmatprep.subr.mxu0 0.0
        %2339 = vmatpush2.msra.mxu0 0.0
        %2340 = vmatprep.subr.mxu0 0.0
        %2341 = vmatpush2.msra.mxu0 0.0
        %2342 = vmatprep.subr.mxu0 0.0
        %2343 = vmatpush2.msra.mxu0 0.0
        %2344 = vmatprep.subr.mxu0 0.0
        %2345 = vmatpush2.msra.mxu0 0.0
        %2346 = vmatprep.subr.mxu0 0.0
        %2347 = vmatpush2.msra.mxu0 0.0
        %2348 = vmatprep.subr.mxu0 0.0
        %2349 = vmatpush2.msra.mxu0 0.0
        %2350 = vmatprep.subr.mxu0 0.0
        %2351 = vmatpush2.msra.mxu0 0.0
        %2352 = vmatprep.subr.mxu0 0.0
        %2353 = vmatpush2.msra.mxu0 0.0
        %2354 = vmatprep.mubr.f32.mxu0 0.0
        %v2355 = vand.u32 %v2201, 4294901760
        %2356 = vmatmul.mubr.f32.gmra.mxu0 %v2355
        %v2357 = vpop.f32.mrf.mxu0
        %v2358 = vadd.f32 %v2277, %v2357
        %v2359 = vpop.f32.mrf.mxu0
        %2360 = vdwg.mxu0
        %2361 = vmatprep.subr.mxu0 0.0
        %2362 = vmatpush1.msra.mxu0 0.0
        %2363 = vmatprep.subr.mxu0 0.0
        %2364 = vmatpush1.msra.mxu0 0.0
        %2365 = vmatprep.subr.mxu0 0.0
        %2366 = vmatpush1.msra.mxu0 0.0
        %2367 = vmatprep.subr.mxu0 0.0
        %2368 = vmatpush1.msra.mxu0 0.0
        %2369 = vmatprep.subr.mxu0 0.0
        %2370 = vmatpush1.msra.mxu0 0.0
        %2371 = vmatprep.subr.mxu0 0.0
        %2372 = vmatpush1.msra.mxu0 0.0
        %2373 = vmatprep.subr.mxu0 0.0
        %2374 = vmatpush1.msra.mxu0 0.0
        %2375 = vmatprep.subr.mxu0 0.0
        %2376 = vmatpush1.msra.mxu0 0.0
        %2377 = vmatprep.subr.mxu0 0.0
        %2378 = vmatpush1.msra.mxu0 0.0
        %2379 = vmatprep.subr.mxu0 0.0
        %2380 = vmatpush1.msra.mxu0 0.0
        %2381 = vmatprep.subr.mxu0 0.0
        %2382 = vmatpush1.msra.mxu0 0.0
        %2383 = vmatprep.subr.mxu0 0.0
        %2384 = vmatpush1.msra.mxu0 0.0
        %2385 = vmatprep.subr.mxu0 0.0
        %2386 = vmatpush1.msra.mxu0 0.0
        %2387 = vmatprep.subr.mxu0 0.0
        %2388 = vmatpush1.msra.mxu0 0.0
        %2389 = vmatprep.subr.mxu0 0.0
        %v2390 = vand.u32 %v1272, 4294901760
        %v2391 = vsub.f32 %v1272, %v2390
        %2392 = vmatpush1.msra.mxu0 %v2391
        %2393 = vmatprep.subr.mxu0 0.0
        %v2394 = vand.u32 %v1271, 4294901760
        %v2395 = vsub.f32 %v1271, %v2394
        %2396 = vmatpush1.msra.mxu0 %v2395
        %2397 = vmatprep.subr.mxu0 0.0
        %2398 = vmatpush2.msra.mxu0 0.0
        %2399 = vmatprep.subr.mxu0 0.0
        %2400 = vmatpush2.msra.mxu0 0.0
        %2401 = vmatprep.subr.mxu0 0.0
        %2402 = vmatpush2.msra.mxu0 0.0
        %2403 = vmatprep.subr.mxu0 0.0
        %2404 = vmatpush2.msra.mxu0 0.0
        %2405 = vmatprep.subr.mxu0 0.0
        %2406 = vmatpush2.msra.mxu0 0.0
        %2407 = vmatprep.subr.mxu0 0.0
        %2408 = vmatpush2.msra.mxu0 0.0
        %2409 = vmatprep.subr.mxu0 0.0
        %2410 = vmatpush2.msra.mxu0 0.0
        %2411 = vmatprep.subr.mxu0 0.0
        %2412 = vmatpush2.msra.mxu0 0.0
        %2413 = vmatprep.subr.mxu0 0.0
        %2414 = vmatpush2.msra.mxu0 0.0
        %2415 = vmatprep.subr.mxu0 0.0
        %2416 = vmatpush2.msra.mxu0 0.0
        %2417 = vmatprep.subr.mxu0 0.0
        %2418 = vmatpush2.msra.mxu0 0.0
        %2419 = vmatprep.subr.mxu0 0.0
        %2420 = vmatpush2.msra.mxu0 0.0
        %2421 = vmatprep.subr.mxu0 0.0
        %2422 = vmatpush2.msra.mxu0 0.0
        %2423 = vmatprep.subr.mxu0 0.0
        %2424 = vmatpush2.msra.mxu0 0.0
        %2425 = vmatprep.subr.mxu0 0.0
        %2426 = vmatpush2.msra.mxu0 0.0
        %2427 = vmatprep.subr.mxu0 0.0
        %2428 = vmatpush2.msra.mxu0 0.0
        %2429 = vmatprep.mubr.f32.mxu0 0.0
        %v2430 = vand.u32 %v2201, 4294901760
        %v2431 = vsub.f32 %v2201, %v2430
        %2432 = vmatmul.mubr.f32.gmra.mxu0 %v2431
        %v2433 = vpop.f32.mrf.mxu0
        %v2434 = vadd.f32 %v2358, %v2433
        %v2435 = vpop.f32.mrf.mxu0
        %2436 = vdwg.mxu0
        %2437 = vmatprep.subr.mxu0 0.0
        %2438 = vmatpush1.msra.mxu0 0.0
        %2439 = vmatprep.subr.mxu0 0.0
        %2440 = vmatpush1.msra.mxu0 0.0
        %2441 = vmatprep.subr.mxu0 0.0
        %2442 = vmatpush1.msra.mxu0 0.0
        %2443 = vmatprep.subr.mxu0 0.0
        %2444 = vmatpush1.msra.mxu0 0.0
        %2445 = vmatprep.subr.mxu0 0.0
        %2446 = vmatpush1.msra.mxu0 0.0
        %2447 = vmatprep.subr.mxu0 0.0
        %2448 = vmatpush1.msra.mxu0 0.0
        %2449 = vmatprep.subr.mxu0 0.0
        %2450 = vmatpush1.msra.mxu0 0.0
        %2451 = vmatprep.subr.mxu0 0.0
        %2452 = vmatpush1.msra.mxu0 0.0
        %2453 = vmatprep.subr.mxu0 0.0
        %2454 = vmatpush1.msra.mxu0 0.0
        %2455 = vmatprep.subr.mxu0 0.0
        %2456 = vmatpush1.msra.mxu0 0.0
        %2457 = vmatprep.subr.mxu0 0.0
        %2458 = vmatpush1.msra.mxu0 0.0
        %2459 = vmatprep.subr.mxu0 0.0
        %2460 = vmatpush1.msra.mxu0 0.0
        %2461 = vmatprep.subr.mxu0 0.0
        %2462 = vmatpush1.msra.mxu0 0.0
        %2463 = vmatprep.subr.mxu0 0.0
        %2464 = vmatpush1.msra.mxu0 0.0
        %2465 = vmatprep.subr.mxu0 0.0
        %v2466 = vand.u32 %v1272, 4294901760
        %2467 = vmatpush1.msra.mxu0 %v2466
        %2468 = vmatprep.subr.mxu0 0.0
        %v2469 = vand.u32 %v1271, 4294901760
        %2470 = vmatpush1.msra.mxu0 %v2469
        %2471 = vmatprep.subr.mxu0 0.0
        %2472 = vmatpush2.msra.mxu0 0.0
        %2473 = vmatprep.subr.mxu0 0.0
        %2474 = vmatpush2.msra.mxu0 0.0
        %2475 = vmatprep.subr.mxu0 0.0
        %2476 = vmatpush2.msra.mxu0 0.0
        %2477 = vmatprep.subr.mxu0 0.0
        %2478 = vmatpush2.msra.mxu0 0.0
        %2479 = vmatprep.subr.mxu0 0.0
        %2480 = vmatpush2.msra.mxu0 0.0
        %2481 = vmatprep.subr.mxu0 0.0
        %2482 = vmatpush2.msra.mxu0 0.0
        %2483 = vmatprep.subr.mxu0 0.0
        %2484 = vmatpush2.msra.mxu0 0.0
        %2485 = vmatprep.subr.mxu0 0.0
        %2486 = vmatpush2.msra.mxu0 0.0
        %2487 = vmatprep.subr.mxu0 0.0
        %2488 = vmatpush2.msra.mxu0 0.0
        %2489 = vmatprep.subr.mxu0 0.0
        %2490 = vmatpush2.msra.mxu0 0.0
        %2491 = vmatprep.subr.mxu0 0.0
        %2492 = vmatpush2.msra.mxu0 0.0
        %2493 = vmatprep.subr.mxu0 0.0
        %2494 = vmatpush2.msra.mxu0 0.0
        %2495 = vmatprep.subr.mxu0 0.0
        %2496 = vmatpush2.msra.mxu0 0.0
        %2497 = vmatprep.subr.mxu0 0.0
        %2498 = vmatpush2.msra.mxu0 0.0
        %2499 = vmatprep.subr.mxu0 0.0
        %2500 = vmatpush2.msra.mxu0 0.0
        %2501 = vmatprep.subr.mxu0 0.0
        %2502 = vmatpush2.msra.mxu0 0.0
        %2503 = vmatprep.mubr.f32.mxu0 0.0
        %v2504 = vand.u32 %v2201, 4294901760
        %v2505 = vsub.f32 %v2201, %v2504
        %v2506 = vand.u32 %v2505, 4294901760
        %2507 = vmatmul.mubr.f32.gmra.mxu0 %v2506
        %v2508 = vpop.f32.mrf.mxu0
        %v2509 = vadd.f32 %v2434, %v2508
        %v2510 = vpop.f32.mrf.mxu0
        %2511 = vdwg.mxu0
        %2512 = vmatprep.subr.mxu0 0.0
        %2513 = vmatpush1.msra.mxu0 0.0
        %2514 = vmatprep.subr.mxu0 0.0
        %2515 = vmatpush1.msra.mxu0 0.0
        %2516 = vmatprep.subr.mxu0 0.0
        %2517 = vmatpush1.msra.mxu0 0.0
        %2518 = vmatprep.subr.mxu0 0.0
        %2519 = vmatpush1.msra.mxu0 0.0
        %2520 = vmatprep.subr.mxu0 0.0
        %2521 = vmatpush1.msra.mxu0 0.0
        %2522 = vmatprep.subr.mxu0 0.0
        %2523 = vmatpush1.msra.mxu0 0.0
        %2524 = vmatprep.subr.mxu0 0.0
        %2525 = vmatpush1.msra.mxu0 0.0
        %2526 = vmatprep.subr.mxu0 0.0
        %2527 = vmatpush1.msra.mxu0 0.0
        %2528 = vmatprep.subr.mxu0 0.0
        %2529 = vmatpush1.msra.mxu0 0.0
        %2530 = vmatprep.subr.mxu0 0.0
        %2531 = vmatpush1.msra.mxu0 0.0
        %2532 = vmatprep.subr.mxu0 0.0
        %2533 = vmatpush1.msra.mxu0 0.0
        %2534 = vmatprep.subr.mxu0 0.0
        %2535 = vmatpush1.msra.mxu0 0.0
        %2536 = vmatprep.subr.mxu0 0.0
        %2537 = vmatpush1.msra.mxu0 0.0
        %2538 = vmatprep.subr.mxu0 0.0
        %2539 = vmatpush1.msra.mxu0 0.0
        %2540 = vmatprep.subr.mxu0 0.0
        %v2541 = vand.u32 %v1272, 4294901760
        %v2542 = vsub.f32 %v1272, %v2541
        %v2543 = vand.u32 %v2542, 4294901760
        %2544 = vmatpush1.msra.mxu0 %v2543
        %2545 = vmatprep.subr.mxu0 0.0
        %v2546 = vand.u32 %v1271, 4294901760
        %v2547 = vsub.f32 %v1271, %v2546
        %v2548 = vand.u32 %v2547, 4294901760
        %2549 = vmatpush1.msra.mxu0 %v2548
        %2550 = vmatprep.subr.mxu0 0.0
        %2551 = vmatpush2.msra.mxu0 0.0
        %2552 = vmatprep.subr.mxu0 0.0
        %2553 = vmatpush2.msra.mxu0 0.0
        %2554 = vmatprep.subr.mxu0 0.0
        %2555 = vmatpush2.msra.mxu0 0.0
        %2556 = vmatprep.subr.mxu0 0.0
        %2557 = vmatpush2.msra.mxu0 0.0
        %2558 = vmatprep.subr.mxu0 0.0
        %2559 = vmatpush2.msra.mxu0 0.0
        %2560 = vmatprep.subr.mxu0 0.0
        %2561 = vmatpush2.msra.mxu0 0.0
        %2562 = vmatprep.subr.mxu0 0.0
        %2563 = vmatpush2.msra.mxu0 0.0
        %2564 = vmatprep.subr.mxu0 0.0
        %2565 = vmatpush2.msra.mxu0 0.0
        %2566 = vmatprep.subr.mxu0 0.0
        %2567 = vmatpush2.msra.mxu0 0.0
        %2568 = vmatprep.subr.mxu0 0.0
        %2569 = vmatpush2.msra.mxu0 0.0
        %2570 = vmatprep.subr.mxu0 0.0
        %2571 = vmatpush2.msra.mxu0 0.0
        %2572 = vmatprep.subr.mxu0 0.0
        %2573 = vmatpush2.msra.mxu0 0.0
        %2574 = vmatprep.subr.mxu0 0.0
        %2575 = vmatpush2.msra.mxu0 0.0
        %2576 = vmatprep.subr.mxu0 0.0
        %2577 = vmatpush2.msra.mxu0 0.0
        %2578 = vmatprep.subr.mxu0 0.0
        %2579 = vmatpush2.msra.mxu0 0.0
        %2580 = vmatprep.subr.mxu0 0.0
        %2581 = vmatpush2.msra.mxu0 0.0
        %2582 = vmatprep.mubr.f32.mxu0 0.0
        %v2583 = vand.u32 %v2201, 4294901760
        %2584 = vmatmul.mubr.f32.gmra.mxu0 %v2583
        %v2585 = vpop.f32.mrf.mxu0
        %v2586 = vadd.f32 %v2509, %v2585
        %v2587 = vpop.f32.mrf.mxu0
        %2588 = vdwg.mxu0
        %2589 = vmatprep.subr.mxu0 0.0
        %2590 = vmatpush1.msra.mxu0 0.0
        %2591 = vmatprep.subr.mxu0 0.0
        %2592 = vmatpush1.msra.mxu0 0.0
        %2593 = vmatprep.subr.mxu0 0.0
        %2594 = vmatpush1.msra.mxu0 0.0
        %2595 = vmatprep.subr.mxu0 0.0
        %2596 = vmatpush1.msra.mxu0 0.0
        %2597 = vmatprep.subr.mxu0 0.0
        %2598 = vmatpush1.msra.mxu0 0.0
        %2599 = vmatprep.subr.mxu0 0.0
        %2600 = vmatpush1.msra.mxu0 0.0
        %2601 = vmatprep.subr.mxu0 0.0
        %2602 = vmatpush1.msra.mxu0 0.0
        %2603 = vmatprep.subr.mxu0 0.0
        %2604 = vmatpush1.msra.mxu0 0.0
        %2605 = vmatprep.subr.mxu0 0.0
        %2606 = vmatpush1.msra.mxu0 0.0
        %2607 = vmatprep.subr.mxu0 0.0
        %2608 = vmatpush1.msra.mxu0 0.0
        %2609 = vmatprep.subr.mxu0 0.0
        %2610 = vmatpush1.msra.mxu0 0.0
        %2611 = vmatprep.subr.mxu0 0.0
        %2612 = vmatpush1.msra.mxu0 0.0
        %2613 = vmatprep.subr.mxu0 0.0
        %2614 = vmatpush1.msra.mxu0 0.0
        %2615 = vmatprep.subr.mxu0 0.0
        %2616 = vmatpush1.msra.mxu0 0.0
        %2617 = vmatprep.subr.mxu0 0.0
        %v2618 = vand.u32 %v1272, 4294901760
        %2619 = vmatpush1.msra.mxu0 %v2618
        %2620 = vmatprep.subr.mxu0 0.0
        %v2621 = vand.u32 %v1271, 4294901760
        %2622 = vmatpush1.msra.mxu0 %v2621
        %2623 = vmatprep.subr.mxu0 0.0
        %2624 = vmatpush2.msra.mxu0 0.0
        %2625 = vmatprep.subr.mxu0 0.0
        %2626 = vmatpush2.msra.mxu0 0.0
        %2627 = vmatprep.subr.mxu0 0.0
        %2628 = vmatpush2.msra.mxu0 0.0
        %2629 = vmatprep.subr.mxu0 0.0
        %2630 = vmatpush2.msra.mxu0 0.0
        %2631 = vmatprep.subr.mxu0 0.0
        %2632 = vmatpush2.msra.mxu0 0.0
        %2633 = vmatprep.subr.mxu0 0.0
        %2634 = vmatpush2.msra.mxu0 0.0
        %2635 = vmatprep.subr.mxu0 0.0
        %2636 = vmatpush2.msra.mxu0 0.0
        %2637 = vmatprep.subr.mxu0 0.0
        %2638 = vmatpush2.msra.mxu0 0.0
        %2639 = vmatprep.subr.mxu0 0.0
        %2640 = vmatpush2.msra.mxu0 0.0
        %2641 = vmatprep.subr.mxu0 0.0
        %2642 = vmatpush2.msra.mxu0 0.0
        %2643 = vmatprep.subr.mxu0 0.0
        %2644 = vmatpush2.msra.mxu0 0.0
        %2645 = vmatprep.subr.mxu0 0.0
        %2646 = vmatpush2.msra.mxu0 0.0
        %2647 = vmatprep.subr.mxu0 0.0
        %2648 = vmatpush2.msra.mxu0 0.0
        %2649 = vmatprep.subr.mxu0 0.0
        %2650 = vmatpush2.msra.mxu0 0.0
        %2651 = vmatprep.subr.mxu0 0.0
        %2652 = vmatpush2.msra.mxu0 0.0
        %2653 = vmatprep.subr.mxu0 0.0
        %2654 = vmatpush2.msra.mxu0 0.0
        %2655 = vmatprep.mubr.f32.mxu0 0.0
        %v2656 = vand.u32 %v2201, 4294901760
        %2657 = vmatmul.mubr.f32.gmra.mxu0 %v2656
        %v2658 = vpop.f32.mrf.mxu0
        %v2659 = vadd.f32 %v2586, %v2658
        %v2660 = vpop.f32.mrf.mxu0
        %2661 = vdwg.mxu0
        %2662 = vst.msk [vmem:[%s212 + $0x8] sm:$0xf] %vm1735, %v2659
        %v2664 = vsel %vm219, %v1266, 0
        %2666 = vmatprep.subr.mxu0 0.0
        %2667 = vmatpush1.msra.mxu0 0.0
        %2668 = vmatprep.subr.mxu0 0.0
        %2669 = vmatpush1.msra.mxu0 0.0
        %2670 = vmatprep.subr.mxu0 0.0
        %2671 = vmatpush1.msra.mxu0 0.0
        %2672 = vmatprep.subr.mxu0 0.0
        %2673 = vmatpush1.msra.mxu0 0.0
        %2674 = vmatprep.subr.mxu0 0.0
        %2675 = vmatpush1.msra.mxu0 0.0
        %2676 = vmatprep.subr.mxu0 0.0
        %2677 = vmatpush1.msra.mxu0 0.0
        %2678 = vmatprep.subr.mxu0 0.0
        %2679 = vmatpush1.msra.mxu0 0.0
        %2680 = vmatprep.subr.mxu0 0.0
        %2681 = vmatpush1.msra.mxu0 0.0
        %2682 = vmatprep.subr.mxu0 0.0
        %2683 = vmatpush1.msra.mxu0 0.0
        %2684 = vmatprep.subr.mxu0 0.0
        %2685 = vmatpush1.msra.mxu0 0.0
        %2686 = vmatprep.subr.mxu0 0.0
        %2687 = vmatpush1.msra.mxu0 0.0
        %2688 = vmatprep.subr.mxu0 0.0
        %2689 = vmatpush1.msra.mxu0 0.0
        %2690 = vmatprep.subr.mxu0 0.0
        %2691 = vmatpush1.msra.mxu0 0.0
        %2692 = vmatprep.subr.mxu0 0.0
        %2693 = vmatpush1.msra.mxu0 0.0
        %2694 = vmatprep.subr.mxu0 0.0
        %v2695 = vand.u32 %v1272, 4294901760
        %2696 = vmatpush1.msra.mxu0 %v2695
        %2697 = vmatprep.subr.mxu0 0.0
        %v2698 = vand.u32 %v1271, 4294901760
        %2699 = vmatpush1.msra.mxu0 %v2698
        %2700 = vmatprep.subr.mxu0 0.0
        %2701 = vmatpush2.msra.mxu0 0.0
        %2702 = vmatprep.subr.mxu0 0.0
        %2703 = vmatpush2.msra.mxu0 0.0
        %2704 = vmatprep.subr.mxu0 0.0
        %2705 = vmatpush2.msra.mxu0 0.0
        %2706 = vmatprep.subr.mxu0 0.0
        %2707 = vmatpush2.msra.mxu0 0.0
        %2708 = vmatprep.subr.mxu0 0.0
        %2709 = vmatpush2.msra.mxu0 0.0
        %2710 = vmatprep.subr.mxu0 0.0
        %2711 = vmatpush2.msra.mxu0 0.0
        %2712 = vmatprep.subr.mxu0 0.0
        %2713 = vmatpush2.msra.mxu0 0.0
        %2714 = vmatprep.subr.mxu0 0.0
        %2715 = vmatpush2.msra.mxu0 0.0
        %2716 = vmatprep.subr.mxu0 0.0
        %2717 = vmatpush2.msra.mxu0 0.0
        %2718 = vmatprep.subr.mxu0 0.0
        %2719 = vmatpush2.msra.mxu0 0.0
        %2720 = vmatprep.subr.mxu0 0.0
        %2721 = vmatpush2.msra.mxu0 0.0
        %2722 = vmatprep.subr.mxu0 0.0
        %2723 = vmatpush2.msra.mxu0 0.0
        %2724 = vmatprep.subr.mxu0 0.0
        %2725 = vmatpush2.msra.mxu0 0.0
        %2726 = vmatprep.subr.mxu0 0.0
        %2727 = vmatpush2.msra.mxu0 0.0
        %2728 = vmatprep.subr.mxu0 0.0
        %2729 = vmatpush2.msra.mxu0 0.0
        %2730 = vmatprep.subr.mxu0 0.0
        %2731 = vmatpush2.msra.mxu0 0.0
        %2732 = vmatprep.mubr.f32.mxu0 0.0
        %v2733 = vand.u32 %v2664, 4294901760
        %v2734 = vsub.f32 %v2664, %v2733
        %v2735 = vand.u32 %v2734, 4294901760
        %v2736 = vsub.f32 %v2734, %v2735
        %v2737 = vand.u32 %v2736, 4294901760
        %2738 = vmatmul.mubr.f32.gmra.mxu0 %v2737
        %v2739 = vpop.f32.mrf.mxu0
        %v2740 = vadd.f32 0.0, %v2739
        %v2741 = vpop.f32.mrf.mxu0
        %2742 = vdwg.mxu0
        %2743 = vmatprep.subr.mxu0 0.0
        %2744 = vmatpush1.msra.mxu0 0.0
        %2745 = vmatprep.subr.mxu0 0.0
        %2746 = vmatpush1.msra.mxu0 0.0
        %2747 = vmatprep.subr.mxu0 0.0
        %2748 = vmatpush1.msra.mxu0 0.0
        %2749 = vmatprep.subr.mxu0 0.0
        %2750 = vmatpush1.msra.mxu0 0.0
        %2751 = vmatprep.subr.mxu0 0.0
        %2752 = vmatpush1.msra.mxu0 0.0
        %2753 = vmatprep.subr.mxu0 0.0
        %2754 = vmatpush1.msra.mxu0 0.0
        %2755 = vmatprep.subr.mxu0 0.0
        %2756 = vmatpush1.msra.mxu0 0.0
        %2757 = vmatprep.subr.mxu0 0.0
        %2758 = vmatpush1.msra.mxu0 0.0
        %2759 = vmatprep.subr.mxu0 0.0
        %2760 = vmatpush1.msra.mxu0 0.0
        %2761 = vmatprep.subr.mxu0 0.0
        %2762 = vmatpush1.msra.mxu0 0.0
        %2763 = vmatprep.subr.mxu0 0.0
        %2764 = vmatpush1.msra.mxu0 0.0
        %2765 = vmatprep.subr.mxu0 0.0
        %2766 = vmatpush1.msra.mxu0 0.0
        %2767 = vmatprep.subr.mxu0 0.0
        %2768 = vmatpush1.msra.mxu0 0.0
        %2769 = vmatprep.subr.mxu0 0.0
        %2770 = vmatpush1.msra.mxu0 0.0
        %2771 = vmatprep.subr.mxu0 0.0
        %v2772 = vand.u32 %v1272, 4294901760
        %v2773 = vsub.f32 %v1272, %v2772
        %v2774 = vand.u32 %v2773, 4294901760
        %v2775 = vsub.f32 %v2773, %v2774
        %v2776 = vand.u32 %v2775, 4294901760
        %2777 = vmatpush1.msra.mxu0 %v2776
        %2778 = vmatprep.subr.mxu0 0.0
        %v2779 = vand.u32 %v1271, 4294901760
        %v2780 = vsub.f32 %v1271, %v2779
        %v2781 = vand.u32 %v2780, 4294901760
        %v2782 = vsub.f32 %v2780, %v2781
        %v2783 = vand.u32 %v2782, 4294901760
        %2784 = vmatpush1.msra.mxu0 %v2783
        %2785 = vmatprep.subr.mxu0 0.0
        %2786 = vmatpush2.msra.mxu0 0.0
        %2787 = vmatprep.subr.mxu0 0.0
        %2788 = vmatpush2.msra.mxu0 0.0
        %2789 = vmatprep.subr.mxu0 0.0
        %2790 = vmatpush2.msra.mxu0 0.0
        %2791 = vmatprep.subr.mxu0 0.0
        %2792 = vmatpush2.msra.mxu0 0.0
        %2793 = vmatprep.subr.mxu0 0.0
        %2794 = vmatpush2.msra.mxu0 0.0
        %2795 = vmatprep.subr.mxu0 0.0
        %2796 = vmatpush2.msra.mxu0 0.0
        %2797 = vmatprep.subr.mxu0 0.0
        %2798 = vmatpush2.msra.mxu0 0.0
        %2799 = vmatprep.subr.mxu0 0.0
        %2800 = vmatpush2.msra.mxu0 0.0
        %2801 = vmatprep.subr.mxu0 0.0
        %2802 = vmatpush2.msra.mxu0 0.0
        %2803 = vmatprep.subr.mxu0 0.0
        %2804 = vmatpush2.msra.mxu0 0.0
        %2805 = vmatprep.subr.mxu0 0.0
        %2806 = vmatpush2.msra.mxu0 0.0
        %2807 = vmatprep.subr.mxu0 0.0
        %2808 = vmatpush2.msra.mxu0 0.0
        %2809 = vmatprep.subr.mxu0 0.0
        %2810 = vmatpush2.msra.mxu0 0.0
        %2811 = vmatprep.subr.mxu0 0.0
        %2812 = vmatpush2.msra.mxu0 0.0
        %2813 = vmatprep.subr.mxu0 0.0
        %2814 = vmatpush2.msra.mxu0 0.0
        %2815 = vmatprep.subr.mxu0 0.0
        %2816 = vmatpush2.msra.mxu0 0.0
        %2817 = vmatprep.mubr.f32.mxu0 0.0
        %v2818 = vand.u32 %v2664, 4294901760
        %2819 = vmatmul.mubr.f32.gmra.mxu0 %v2818
        %v2820 = vpop.f32.mrf.mxu0
        %v2821 = vadd.f32 %v2740, %v2820
        %v2822 = vpop.f32.mrf.mxu0
        %2823 = vdwg.mxu0
        %2824 = vmatprep.subr.mxu0 0.0
        %2825 = vmatpush1.msra.mxu0 0.0
        %2826 = vmatprep.subr.mxu0 0.0
        %2827 = vmatpush1.msra.mxu0 0.0
        %2828 = vmatprep.subr.mxu0 0.0
        %2829 = vmatpush1.msra.mxu0 0.0
        %2830 = vmatprep.subr.mxu0 0.0
        %2831 = vmatpush1.msra.mxu0 0.0
        %2832 = vmatprep.subr.mxu0 0.0
        %2833 = vmatpush1.msra.mxu0 0.0
        %2834 = vmatprep.subr.mxu0 0.0
        %2835 = vmatpush1.msra.mxu0 0.0
        %2836 = vmatprep.subr.mxu0 0.0
        %2837 = vmatpush1.msra.mxu0 0.0
        %2838 = vmatprep.subr.mxu0 0.0
        %2839 = vmatpush1.msra.mxu0 0.0
        %2840 = vmatprep.subr.mxu0 0.0
        %2841 = vmatpush1.msra.mxu0 0.0
        %2842 = vmatprep.subr.mxu0 0.0
        %2843 = vmatpush1.msra.mxu0 0.0
        %2844 = vmatprep.subr.mxu0 0.0
        %2845 = vmatpush1.msra.mxu0 0.0
        %2846 = vmatprep.subr.mxu0 0.0
        %2847 = vmatpush1.msra.mxu0 0.0
        %2848 = vmatprep.subr.mxu0 0.0
        %2849 = vmatpush1.msra.mxu0 0.0
        %2850 = vmatprep.subr.mxu0 0.0
        %2851 = vmatpush1.msra.mxu0 0.0
        %2852 = vmatprep.subr.mxu0 0.0
        %v2853 = vand.u32 %v1272, 4294901760
        %v2854 = vsub.f32 %v1272, %v2853
        %2855 = vmatpush1.msra.mxu0 %v2854
        %2856 = vmatprep.subr.mxu0 0.0
        %v2857 = vand.u32 %v1271, 4294901760
        %v2858 = vsub.f32 %v1271, %v2857
        %2859 = vmatpush1.msra.mxu0 %v2858
        %2860 = vmatprep.subr.mxu0 0.0
        %2861 = vmatpush2.msra.mxu0 0.0
        %2862 = vmatprep.subr.mxu0 0.0
        %2863 = vmatpush2.msra.mxu0 0.0
        %2864 = vmatprep.subr.mxu0 0.0
        %2865 = vmatpush2.msra.mxu0 0.0
        %2866 = vmatprep.subr.mxu0 0.0
        %2867 = vmatpush2.msra.mxu0 0.0
        %2868 = vmatprep.subr.mxu0 0.0
        %2869 = vmatpush2.msra.mxu0 0.0
        %2870 = vmatprep.subr.mxu0 0.0
        %2871 = vmatpush2.msra.mxu0 0.0
        %2872 = vmatprep.subr.mxu0 0.0
        %2873 = vmatpush2.msra.mxu0 0.0
        %2874 = vmatprep.subr.mxu0 0.0
        %2875 = vmatpush2.msra.mxu0 0.0
        %2876 = vmatprep.subr.mxu0 0.0
        %2877 = vmatpush2.msra.mxu0 0.0
        %2878 = vmatprep.subr.mxu0 0.0
        %2879 = vmatpush2.msra.mxu0 0.0
        %2880 = vmatprep.subr.mxu0 0.0
        %2881 = vmatpush2.msra.mxu0 0.0
        %2882 = vmatprep.subr.mxu0 0.0
        %2883 = vmatpush2.msra.mxu0 0.0
        %2884 = vmatprep.subr.mxu0 0.0
        %2885 = vmatpush2.msra.mxu0 0.0
        %2886 = vmatprep.subr.mxu0 0.0
        %2887 = vmatpush2.msra.mxu0 0.0
        %2888 = vmatprep.subr.mxu0 0.0
        %2889 = vmatpush2.msra.mxu0 0.0
        %2890 = vmatprep.subr.mxu0 0.0
        %2891 = vmatpush2.msra.mxu0 0.0
        %2892 = vmatprep.mubr.f32.mxu0 0.0
        %v2893 = vand.u32 %v2664, 4294901760
        %v2894 = vsub.f32 %v2664, %v2893
        %2895 = vmatmul.mubr.f32.gmra.mxu0 %v2894
        %v2896 = vpop.f32.mrf.mxu0
        %v2897 = vadd.f32 %v2821, %v2896
        %v2898 = vpop.f32.mrf.mxu0
        %2899 = vdwg.mxu0
        %2900 = vmatprep.subr.mxu0 0.0
        %2901 = vmatpush1.msra.mxu0 0.0
        %2902 = vmatprep.subr.mxu0 0.0
        %2903 = vmatpush1.msra.mxu0 0.0
        %2904 = vmatprep.subr.mxu0 0.0
        %2905 = vmatpush1.msra.mxu0 0.0
        %2906 = vmatprep.subr.mxu0 0.0
        %2907 = vmatpush1.msra.mxu0 0.0
        %2908 = vmatprep.subr.mxu0 0.0
        %2909 = vmatpush1.msra.mxu0 0.0
        %2910 = vmatprep.subr.mxu0 0.0
        %2911 = vmatpush1.msra.mxu0 0.0
        %2912 = vmatprep.subr.mxu0 0.0
        %2913 = vmatpush1.msra.mxu0 0.0
        %2914 = vmatprep.subr.mxu0 0.0
        %2915 = vmatpush1.msra.mxu0 0.0
        %2916 = vmatprep.subr.mxu0 0.0
        %2917 = vmatpush1.msra.mxu0 0.0
        %2918 = vmatprep.subr.mxu0 0.0
        %2919 = vmatpush1.msra.mxu0 0.0
        %2920 = vmatprep.subr.mxu0 0.0
        %2921 = vmatpush1.msra.mxu0 0.0
        %2922 = vmatprep.subr.mxu0 0.0
        %2923 = vmatpush1.msra.mxu0 0.0
        %2924 = vmatprep.subr.mxu0 0.0
        %2925 = vmatpush1.msra.mxu0 0.0
        %2926 = vmatprep.subr.mxu0 0.0
        %2927 = vmatpush1.msra.mxu0 0.0
        %2928 = vmatprep.subr.mxu0 0.0
        %v2929 = vand.u32 %v1272, 4294901760
        %2930 = vmatpush1.msra.mxu0 %v2929
        %2931 = vmatprep.subr.mxu0 0.0
        %v2932 = vand.u32 %v1271, 4294901760
        %2933 = vmatpush1.msra.mxu0 %v2932
        %2934 = vmatprep.subr.mxu0 0.0
        %2935 = vmatpush2.msra.mxu0 0.0
        %2936 = vmatprep.subr.mxu0 0.0
        %2937 = vmatpush2.msra.mxu0 0.0
        %2938 = vmatprep.subr.mxu0 0.0
        %2939 = vmatpush2.msra.mxu0 0.0
        %2940 = vmatprep.subr.mxu0 0.0
        %2941 = vmatpush2.msra.mxu0 0.0
        %2942 = vmatprep.subr.mxu0 0.0
        %2943 = vmatpush2.msra.mxu0 0.0
        %2944 = vmatprep.subr.mxu0 0.0
        %2945 = vmatpush2.msra.mxu0 0.0
        %2946 = vmatprep.subr.mxu0 0.0
        %2947 = vmatpush2.msra.mxu0 0.0
        %2948 = vmatprep.subr.mxu0 0.0
        %2949 = vmatpush2.msra.mxu0 0.0
        %2950 = vmatprep.subr.mxu0 0.0
        %2951 = vmatpush2.msra.mxu0 0.0
        %2952 = vmatprep.subr.mxu0 0.0
        %2953 = vmatpush2.msra.mxu0 0.0
        %2954 = vmatprep.subr.mxu0 0.0
        %2955 = vmatpush2.msra.mxu0 0.0
        %2956 = vmatprep.subr.mxu0 0.0
        %2957 = vmatpush2.msra.mxu0 0.0
        %2958 = vmatprep.subr.mxu0 0.0
        %2959 = vmatpush2.msra.mxu0 0.0
        %2960 = vmatprep.subr.mxu0 0.0
        %2961 = vmatpush2.msra.mxu0 0.0
        %2962 = vmatprep.subr.mxu0 0.0
        %2963 = vmatpush2.msra.mxu0 0.0
        %2964 = vmatprep.subr.mxu0 0.0
        %2965 = vmatpush2.msra.mxu0 0.0
        %2966 = vmatprep.mubr.f32.mxu0 0.0
        %v2967 = vand.u32 %v2664, 4294901760
        %v2968 = vsub.f32 %v2664, %v2967
        %v2969 = vand.u32 %v2968, 4294901760
        %2970 = vmatmul.mubr.f32.gmra.mxu0 %v2969
        %v2971 = vpop.f32.mrf.mxu0
        %v2972 = vadd.f32 %v2897, %v2971
        %v2973 = vpop.f32.mrf.mxu0
        %2974 = vdwg.mxu0
        %2975 = vmatprep.subr.mxu0 0.0
        %2976 = vmatpush1.msra.mxu0 0.0
        %2977 = vmatprep.subr.mxu0 0.0
        %2978 = vmatpush1.msra.mxu0 0.0
        %2979 = vmatprep.subr.mxu0 0.0
        %2980 = vmatpush1.msra.mxu0 0.0
        %2981 = vmatprep.subr.mxu0 0.0
        %2982 = vmatpush1.msra.mxu0 0.0
        %2983 = vmatprep.subr.mxu0 0.0
        %2984 = vmatpush1.msra.mxu0 0.0
        %2985 = vmatprep.subr.mxu0 0.0
        %2986 = vmatpush1.msra.mxu0 0.0
        %2987 = vmatprep.subr.mxu0 0.0
        %2988 = vmatpush1.msra.mxu0 0.0
        %2989 = vmatprep.subr.mxu0 0.0
        %2990 = vmatpush1.msra.mxu0 0.0
        %2991 = vmatprep.subr.mxu0 0.0
        %2992 = vmatpush1.msra.mxu0 0.0
        %2993 = vmatprep.subr.mxu0 0.0
        %2994 = vmatpush1.msra.mxu0 0.0
        %2995 = vmatprep.subr.mxu0 0.0
        %2996 = vmatpush1.msra.mxu0 0.0
        %2997 = vmatprep.subr.mxu0 0.0
        %2998 = vmatpush1.msra.mxu0 0.0
        %2999 = vmatprep.subr.mxu0 0.0
        %3000 = vmatpush1.msra.mxu0 0.0
        %3001 = vmatprep.subr.mxu0 0.0
        %3002 = vmatpush1.msra.mxu0 0.0
        %3003 = vmatprep.subr.mxu0 0.0
        %v3004 = vand.u32 %v1272, 4294901760
        %v3005 = vsub.f32 %v1272, %v3004
        %v3006 = vand.u32 %v3005, 4294901760
        %3007 = vmatpush1.msra.mxu0 %v3006
        %3008 = vmatprep.subr.mxu0 0.0
        %v3009 = vand.u32 %v1271, 4294901760
        %v3010 = vsub.f32 %v1271, %v3009
        %v3011 = vand.u32 %v3010, 4294901760
        %3012 = vmatpush1.msra.mxu0 %v3011
        %3013 = vmatprep.subr.mxu0 0.0
        %3014 = vmatpush2.msra.mxu0 0.0
        %3015 = vmatprep.subr.mxu0 0.0
        %3016 = vmatpush2.msra.mxu0 0.0
        %3017 = vmatprep.subr.mxu0 0.0
        %3018 = vmatpush2.msra.mxu0 0.0
        %3019 = vmatprep.subr.mxu0 0.0
        %3020 = vmatpush2.msra.mxu0 0.0
        %3021 = vmatprep.subr.mxu0 0.0
        %3022 = vmatpush2.msra.mxu0 0.0
        %3023 = vmatprep.subr.mxu0 0.0
        %3024 = vmatpush2.msra.mxu0 0.0
        %3025 = vmatprep.subr.mxu0 0.0
        %3026 = vmatpush2.msra.mxu0 0.0
        %3027 = vmatprep.subr.mxu0 0.0
        %3028 = vmatpush2.msra.mxu0 0.0
        %3029 = vmatprep.subr.mxu0 0.0
        %3030 = vmatpush2.msra.mxu0 0.0
        %3031 = vmatprep.subr.mxu0 0.0
        %3032 = vmatpush2.msra.mxu0 0.0
        %3033 = vmatprep.subr.mxu0 0.0
        %3034 = vmatpush2.msra.mxu0 0.0
        %3035 = vmatprep.subr.mxu0 0.0
        %3036 = vmatpush2.msra.mxu0 0.0
        %3037 = vmatprep.subr.mxu0 0.0
        %3038 = vmatpush2.msra.mxu0 0.0
        %3039 = vmatprep.subr.mxu0 0.0
        %3040 = vmatpush2.msra.mxu0 0.0
        %3041 = vmatprep.subr.mxu0 0.0
        %3042 = vmatpush2.msra.mxu0 0.0
        %3043 = vmatprep.subr.mxu0 0.0
        %3044 = vmatpush2.msra.mxu0 0.0
        %3045 = vmatprep.mubr.f32.mxu0 0.0
        %v3046 = vand.u32 %v2664, 4294901760
        %3047 = vmatmul.mubr.f32.gmra.mxu0 %v3046
        %v3048 = vpop.f32.mrf.mxu0
        %v3049 = vadd.f32 %v2972, %v3048
        %v3050 = vpop.f32.mrf.mxu0
        %3051 = vdwg.mxu0
        %3052 = vmatprep.subr.mxu0 0.0
        %3053 = vmatpush1.msra.mxu0 0.0
        %3054 = vmatprep.subr.mxu0 0.0
        %3055 = vmatpush1.msra.mxu0 0.0
        %3056 = vmatprep.subr.mxu0 0.0
        %3057 = vmatpush1.msra.mxu0 0.0
        %3058 = vmatprep.subr.mxu0 0.0
        %3059 = vmatpush1.msra.mxu0 0.0
        %3060 = vmatprep.subr.mxu0 0.0
        %3061 = vmatpush1.msra.mxu0 0.0
        %3062 = vmatprep.subr.mxu0 0.0
        %3063 = vmatpush1.msra.mxu0 0.0
        %3064 = vmatprep.subr.mxu0 0.0
        %3065 = vmatpush1.msra.mxu0 0.0
        %3066 = vmatprep.subr.mxu0 0.0
        %3067 = vmatpush1.msra.mxu0 0.0
        %3068 = vmatprep.subr.mxu0 0.0
        %3069 = vmatpush1.msra.mxu0 0.0
        %3070 = vmatprep.subr.mxu0 0.0
        %3071 = vmatpush1.msra.mxu0 0.0
        %3072 = vmatprep.subr.mxu0 0.0
        %3073 = vmatpush1.msra.mxu0 0.0
        %3074 = vmatprep.subr.mxu0 0.0
        %3075 = vmatpush1.msra.mxu0 0.0
        %3076 = vmatprep.subr.mxu0 0.0
        %3077 = vmatpush1.msra.mxu0 0.0
        %3078 = vmatprep.subr.mxu0 0.0
        %3079 = vmatpush1.msra.mxu0 0.0
        %3080 = vmatprep.subr.mxu0 0.0
        %v3081 = vand.u32 %v1272, 4294901760
        %3082 = vmatpush1.msra.mxu0 %v3081
        %3083 = vmatprep.subr.mxu0 0.0
        %v3084 = vand.u32 %v1271, 4294901760
        %3085 = vmatpush1.msra.mxu0 %v3084
        %3086 = vmatprep.subr.mxu0 0.0
        %3087 = vmatpush2.msra.mxu0 0.0
        %3088 = vmatprep.subr.mxu0 0.0
        %3089 = vmatpush2.msra.mxu0 0.0
        %3090 = vmatprep.subr.mxu0 0.0
        %3091 = vmatpush2.msra.mxu0 0.0
        %3092 = vmatprep.subr.mxu0 0.0
        %3093 = vmatpush2.msra.mxu0 0.0
        %3094 = vmatprep.subr.mxu0 0.0
        %3095 = vmatpush2.msra.mxu0 0.0
        %3096 = vmatprep.subr.mxu0 0.0
        %3097 = vmatpush2.msra.mxu0 0.0
        %3098 = vmatprep.subr.mxu0 0.0
        %3099 = vmatpush2.msra.mxu0 0.0
        %3100 = vmatprep.subr.mxu0 0.0
        %3101 = vmatpush2.msra.mxu0 0.0
        %3102 = vmatprep.subr.mxu0 0.0
        %3103 = vmatpush2.msra.mxu0 0.0
        %3104 = vmatprep.subr.mxu0 0.0
        %3105 = vmatpush2.msra.mxu0 0.0
        %3106 = vmatprep.subr.mxu0 0.0
        %3107 = vmatpush2.msra.mxu0 0.0
        %3108 = vmatprep.subr.mxu0 0.0
        %3109 = vmatpush2.msra.mxu0 0.0
        %3110 = vmatprep.subr.mxu0 0.0
        %3111 = vmatpush2.msra.mxu0 0.0
        %3112 = vmatprep.subr.mxu0 0.0
        %3113 = vmatpush2.msra.mxu0 0.0
        %3114 = vmatprep.subr.mxu0 0.0
        %3115 = vmatpush2.msra.mxu0 0.0
        %3116 = vmatprep.subr.mxu0 0.0
        %3117 = vmatpush2.msra.mxu0 0.0
        %3118 = vmatprep.mubr.f32.mxu0 0.0
        %v3119 = vand.u32 %v2664, 4294901760
        %3120 = vmatmul.mubr.f32.gmra.mxu0 %v3119
        %v3121 = vpop.f32.mrf.mxu0
        %v3122 = vadd.f32 %v3049, %v3121
        %v3123 = vpop.f32.mrf.mxu0
        %3124 = vdwg.mxu0
        %3125 = vst.msk [vmem:[%s212 + $0xc] sm:$0xf] %vm1735, %v3122
        %v3127 = vsel %vm219, %v1267, 0
        %3129 = vmatprep.subr.mxu0 0.0
        %3130 = vmatpush1.msra.mxu0 0.0
        %3131 = vmatprep.subr.mxu0 0.0
        %3132 = vmatpush1.msra.mxu0 0.0
        %3133 = vmatprep.subr.mxu0 0.0
        %3134 = vmatpush1.msra.mxu0 0.0
        %3135 = vmatprep.subr.mxu0 0.0
        %3136 = vmatpush1.msra.mxu0 0.0
        %3137 = vmatprep.subr.mxu0 0.0
        %3138 = vmatpush1.msra.mxu0 0.0
        %3139 = vmatprep.subr.mxu0 0.0
        %3140 = vmatpush1.msra.mxu0 0.0
        %3141 = vmatprep.subr.mxu0 0.0
        %3142 = vmatpush1.msra.mxu0 0.0
        %3143 = vmatprep.subr.mxu0 0.0
        %3144 = vmatpush1.msra.mxu0 0.0
        %3145 = vmatprep.subr.mxu0 0.0
        %3146 = vmatpush1.msra.mxu0 0.0
        %3147 = vmatprep.subr.mxu0 0.0
        %3148 = vmatpush1.msra.mxu0 0.0
        %3149 = vmatprep.subr.mxu0 0.0
        %3150 = vmatpush1.msra.mxu0 0.0
        %3151 = vmatprep.subr.mxu0 0.0
        %3152 = vmatpush1.msra.mxu0 0.0
        %3153 = vmatprep.subr.mxu0 0.0
        %3154 = vmatpush1.msra.mxu0 0.0
        %3155 = vmatprep.subr.mxu0 0.0
        %3156 = vmatpush1.msra.mxu0 0.0
        %3157 = vmatprep.subr.mxu0 0.0
        %v3158 = vand.u32 %v1272, 4294901760
        %3159 = vmatpush1.msra.mxu0 %v3158
        %3160 = vmatprep.subr.mxu0 0.0
        %v3161 = vand.u32 %v1271, 4294901760
        %3162 = vmatpush1.msra.mxu0 %v3161
        %3163 = vmatprep.subr.mxu0 0.0
        %3164 = vmatpush2.msra.mxu0 0.0
        %3165 = vmatprep.subr.mxu0 0.0
        %3166 = vmatpush2.msra.mxu0 0.0
        %3167 = vmatprep.subr.mxu0 0.0
        %3168 = vmatpush2.msra.mxu0 0.0
        %3169 = vmatprep.subr.mxu0 0.0
        %3170 = vmatpush2.msra.mxu0 0.0
        %3171 = vmatprep.subr.mxu0 0.0
        %3172 = vmatpush2.msra.mxu0 0.0
        %3173 = vmatprep.subr.mxu0 0.0
        %3174 = vmatpush2.msra.mxu0 0.0
        %3175 = vmatprep.subr.mxu0 0.0
        %3176 = vmatpush2.msra.mxu0 0.0
        %3177 = vmatprep.subr.mxu0 0.0
        %3178 = vmatpush2.msra.mxu0 0.0
        %3179 = vmatprep.subr.mxu0 0.0
        %3180 = vmatpush2.msra.mxu0 0.0
        %3181 = vmatprep.subr.mxu0 0.0
        %3182 = vmatpush2.msra.mxu0 0.0
        %3183 = vmatprep.subr.mxu0 0.0
        %3184 = vmatpush2.msra.mxu0 0.0
        %3185 = vmatprep.subr.mxu0 0.0
        %3186 = vmatpush2.msra.mxu0 0.0
        %3187 = vmatprep.subr.mxu0 0.0
        %3188 = vmatpush2.msra.mxu0 0.0
        %3189 = vmatprep.subr.mxu0 0.0
        %3190 = vmatpush2.msra.mxu0 0.0
        %3191 = vmatprep.subr.mxu0 0.0
        %3192 = vmatpush2.msra.mxu0 0.0
        %3193 = vmatprep.subr.mxu0 0.0
        %3194 = vmatpush2.msra.mxu0 0.0
        %3195 = vmatprep.mubr.f32.mxu0 0.0
        %v3196 = vand.u32 %v3127, 4294901760
        %v3197 = vsub.f32 %v3127, %v3196
        %v3198 = vand.u32 %v3197, 4294901760
        %v3199 = vsub.f32 %v3197, %v3198
        %v3200 = vand.u32 %v3199, 4294901760
        %3201 = vmatmul.mubr.f32.gmra.mxu0 %v3200
        %v3202 = vpop.f32.mrf.mxu0
        %v3203 = vadd.f32 0.0, %v3202
        %v3204 = vpop.f32.mrf.mxu0
        %3205 = vdwg.mxu0
        %3206 = vmatprep.subr.mxu0 0.0
        %3207 = vmatpush1.msra.mxu0 0.0
        %3208 = vmatprep.subr.mxu0 0.0
        %3209 = vmatpush1.msra.mxu0 0.0
        %3210 = vmatprep.subr.mxu0 0.0
        %3211 = vmatpush1.msra.mxu0 0.0
        %3212 = vmatprep.subr.mxu0 0.0
        %3213 = vmatpush1.msra.mxu0 0.0
        %3214 = vmatprep.subr.mxu0 0.0
        %3215 = vmatpush1.msra.mxu0 0.0
        %3216 = vmatprep.subr.mxu0 0.0
        %3217 = vmatpush1.msra.mxu0 0.0
        %3218 = vmatprep.subr.mxu0 0.0
        %3219 = vmatpush1.msra.mxu0 0.0
        %3220 = vmatprep.subr.mxu0 0.0
        %3221 = vmatpush1.msra.mxu0 0.0
        %3222 = vmatprep.subr.mxu0 0.0
        %3223 = vmatpush1.msra.mxu0 0.0
        %3224 = vmatprep.subr.mxu0 0.0
        %3225 = vmatpush1.msra.mxu0 0.0
        %3226 = vmatprep.subr.mxu0 0.0
        %3227 = vmatpush1.msra.mxu0 0.0
        %3228 = vmatprep.subr.mxu0 0.0
        %3229 = vmatpush1.msra.mxu0 0.0
        %3230 = vmatprep.subr.mxu0 0.0
        %3231 = vmatpush1.msra.mxu0 0.0
        %3232 = vmatprep.subr.mxu0 0.0
        %3233 = vmatpush1.msra.mxu0 0.0
        %3234 = vmatprep.subr.mxu0 0.0
        %v3235 = vand.u32 %v1272, 4294901760
        %v3236 = vsub.f32 %v1272, %v3235
        %v3237 = vand.u32 %v3236, 4294901760
        %v3238 = vsub.f32 %v3236, %v3237
        %v3239 = vand.u32 %v3238, 4294901760
        %3240 = vmatpush1.msra.mxu0 %v3239
        %3241 = vmatprep.subr.mxu0 0.0
        %v3242 = vand.u32 %v1271, 4294901760
        %v3243 = vsub.f32 %v1271, %v3242
        %v3244 = vand.u32 %v3243, 4294901760
        %v3245 = vsub.f32 %v3243, %v3244
        %v3246 = vand.u32 %v3245, 4294901760
        %3247 = vmatpush1.msra.mxu0 %v3246
        %3248 = vmatprep.subr.mxu0 0.0
        %3249 = vmatpush2.msra.mxu0 0.0
        %3250 = vmatprep.subr.mxu0 0.0
        %3251 = vmatpush2.msra.mxu0 0.0
        %3252 = vmatprep.subr.mxu0 0.0
        %3253 = vmatpush2.msra.mxu0 0.0
        %3254 = vmatprep.subr.mxu0 0.0
        %3255 = vmatpush2.msra.mxu0 0.0
        %3256 = vmatprep.subr.mxu0 0.0
        %3257 = vmatpush2.msra.mxu0 0.0
        %3258 = vmatprep.subr.mxu0 0.0
        %3259 = vmatpush2.msra.mxu0 0.0
        %3260 = vmatprep.subr.mxu0 0.0
        %3261 = vmatpush2.msra.mxu0 0.0
        %3262 = vmatprep.subr.mxu0 0.0
        %3263 = vmatpush2.msra.mxu0 0.0
        %3264 = vmatprep.subr.mxu0 0.0
        %3265 = vmatpush2.msra.mxu0 0.0
        %3266 = vmatprep.subr.mxu0 0.0
        %3267 = vmatpush2.msra.mxu0 0.0
        %3268 = vmatprep.subr.mxu0 0.0
        %3269 = vmatpush2.msra.mxu0 0.0
        %3270 = vmatprep.subr.mxu0 0.0
        %3271 = vmatpush2.msra.mxu0 0.0
        %3272 = vmatprep.subr.mxu0 0.0
        %3273 = vmatpush2.msra.mxu0 0.0
        %3274 = vmatprep.subr.mxu0 0.0
        %3275 = vmatpush2.msra.mxu0 0.0
        %3276 = vmatprep.subr.mxu0 0.0
        %3277 = vmatpush2.msra.mxu0 0.0
        %3278 = vmatprep.subr.mxu0 0.0
        %3279 = vmatpush2.msra.mxu0 0.0
        %3280 = vmatprep.mubr.f32.mxu0 0.0
        %v3281 = vand.u32 %v3127, 4294901760
        %3282 = vmatmul.mubr.f32.gmra.mxu0 %v3281
        %v3283 = vpop.f32.mrf.mxu0
        %v3284 = vadd.f32 %v3203, %v3283
        %v3285 = vpop.f32.mrf.mxu0
        %3286 = vdwg.mxu0
        %3287 = vmatprep.subr.mxu0 0.0
        %3288 = vmatpush1.msra.mxu0 0.0
        %3289 = vmatprep.subr.mxu0 0.0
        %3290 = vmatpush1.msra.mxu0 0.0
        %3291 = vmatprep.subr.mxu0 0.0
        %3292 = vmatpush1.msra.mxu0 0.0
        %3293 = vmatprep.subr.mxu0 0.0
        %3294 = vmatpush1.msra.mxu0 0.0
        %3295 = vmatprep.subr.mxu0 0.0
        %3296 = vmatpush1.msra.mxu0 0.0
        %3297 = vmatprep.subr.mxu0 0.0
        %3298 = vmatpush1.msra.mxu0 0.0
        %3299 = vmatprep.subr.mxu0 0.0
        %3300 = vmatpush1.msra.mxu0 0.0
        %3301 = vmatprep.subr.mxu0 0.0
        %3302 = vmatpush1.msra.mxu0 0.0
        %3303 = vmatprep.subr.mxu0 0.0
        %3304 = vmatpush1.msra.mxu0 0.0
        %3305 = vmatprep.subr.mxu0 0.0
        %3306 = vmatpush1.msra.mxu0 0.0
        %3307 = vmatprep.subr.mxu0 0.0
        %3308 = vmatpush1.msra.mxu0 0.0
        %3309 = vmatprep.subr.mxu0 0.0
        %3310 = vmatpush1.msra.mxu0 0.0
        %3311 = vmatprep.subr.mxu0 0.0
        %3312 = vmatpush1.msra.mxu0 0.0
        %3313 = vmatprep.subr.mxu0 0.0
        %3314 = vmatpush1.msra.mxu0 0.0
        %3315 = vmatprep.subr.mxu0 0.0
        %v3316 = vand.u32 %v1272, 4294901760
        %v3317 = vsub.f32 %v1272, %v3316
        %3318 = vmatpush1.msra.mxu0 %v3317
        %3319 = vmatprep.subr.mxu0 0.0
        %v3320 = vand.u32 %v1271, 4294901760
        %v3321 = vsub.f32 %v1271, %v3320
        %3322 = vmatpush1.msra.mxu0 %v3321
        %3323 = vmatprep.subr.mxu0 0.0
        %3324 = vmatpush2.msra.mxu0 0.0
        %3325 = vmatprep.subr.mxu0 0.0
        %3326 = vmatpush2.msra.mxu0 0.0
        %3327 = vmatprep.subr.mxu0 0.0
        %3328 = vmatpush2.msra.mxu0 0.0
        %3329 = vmatprep.subr.mxu0 0.0
        %3330 = vmatpush2.msra.mxu0 0.0
        %3331 = vmatprep.subr.mxu0 0.0
        %3332 = vmatpush2.msra.mxu0 0.0
        %3333 = vmatprep.subr.mxu0 0.0
        %3334 = vmatpush2.msra.mxu0 0.0
        %3335 = vmatprep.subr.mxu0 0.0
        %3336 = vmatpush2.msra.mxu0 0.0
        %3337 = vmatprep.subr.mxu0 0.0
        %3338 = vmatpush2.msra.mxu0 0.0
        %3339 = vmatprep.subr.mxu0 0.0
        %3340 = vmatpush2.msra.mxu0 0.0
        %3341 = vmatprep.subr.mxu0 0.0
        %3342 = vmatpush2.msra.mxu0 0.0
        %3343 = vmatprep.subr.mxu0 0.0
        %3344 = vmatpush2.msra.mxu0 0.0
        %3345 = vmatprep.subr.mxu0 0.0
        %3346 = vmatpush2.msra.mxu0 0.0
        %3347 = vmatprep.subr.mxu0 0.0
        %3348 = vmatpush2.msra.mxu0 0.0
        %3349 = vmatprep.subr.mxu0 0.0
        %3350 = vmatpush2.msra.mxu0 0.0
        %3351 = vmatprep.subr.mxu0 0.0
        %3352 = vmatpush2.msra.mxu0 0.0
        %3353 = vmatprep.subr.mxu0 0.0
        %3354 = vmatpush2.msra.mxu0 0.0
        %3355 = vmatprep.mubr.f32.mxu0 0.0
        %v3356 = vand.u32 %v3127, 4294901760
        %v3357 = vsub.f32 %v3127, %v3356
        %3358 = vmatmul.mubr.f32.gmra.mxu0 %v3357
        %v3359 = vpop.f32.mrf.mxu0
        %v3360 = vadd.f32 %v3284, %v3359
        %v3361 = vpop.f32.mrf.mxu0
        %3362 = vdwg.mxu0
        %3363 = vmatprep.subr.mxu0 0.0
        %3364 = vmatpush1.msra.mxu0 0.0
        %3365 = vmatprep.subr.mxu0 0.0
        %3366 = vmatpush1.msra.mxu0 0.0
        %3367 = vmatprep.subr.mxu0 0.0
        %3368 = vmatpush1.msra.mxu0 0.0
        %3369 = vmatprep.subr.mxu0 0.0
        %3370 = vmatpush1.msra.mxu0 0.0
        %3371 = vmatprep.subr.mxu0 0.0
        %3372 = vmatpush1.msra.mxu0 0.0
        %3373 = vmatprep.subr.mxu0 0.0
        %3374 = vmatpush1.msra.mxu0 0.0
        %3375 = vmatprep.subr.mxu0 0.0
        %3376 = vmatpush1.msra.mxu0 0.0
        %3377 = vmatprep.subr.mxu0 0.0
        %3378 = vmatpush1.msra.mxu0 0.0
        %3379 = vmatprep.subr.mxu0 0.0
        %3380 = vmatpush1.msra.mxu0 0.0
        %3381 = vmatprep.subr.mxu0 0.0
        %3382 = vmatpush1.msra.mxu0 0.0
        %3383 = vmatprep.subr.mxu0 0.0
        %3384 = vmatpush1.msra.mxu0 0.0
        %3385 = vmatprep.subr.mxu0 0.0
        %3386 = vmatpush1.msra.mxu0 0.0
        %3387 = vmatprep.subr.mxu0 0.0
        %3388 = vmatpush1.msra.mxu0 0.0
        %3389 = vmatprep.subr.mxu0 0.0
        %3390 = vmatpush1.msra.mxu0 0.0
        %3391 = vmatprep.subr.mxu0 0.0
        %v3392 = vand.u32 %v1272, 4294901760
        %3393 = vmatpush1.msra.mxu0 %v3392
        %3394 = vmatprep.subr.mxu0 0.0
        %v3395 = vand.u32 %v1271, 4294901760
        %3396 = vmatpush1.msra.mxu0 %v3395
        %3397 = vmatprep.subr.mxu0 0.0
        %3398 = vmatpush2.msra.mxu0 0.0
        %3399 = vmatprep.subr.mxu0 0.0
        %3400 = vmatpush2.msra.mxu0 0.0
        %3401 = vmatprep.subr.mxu0 0.0
        %3402 = vmatpush2.msra.mxu0 0.0
        %3403 = vmatprep.subr.mxu0 0.0
        %3404 = vmatpush2.msra.mxu0 0.0
        %3405 = vmatprep.subr.mxu0 0.0
        %3406 = vmatpush2.msra.mxu0 0.0
        %3407 = vmatprep.subr.mxu0 0.0
        %3408 = vmatpush2.msra.mxu0 0.0
        %3409 = vmatprep.subr.mxu0 0.0
        %3410 = vmatpush2.msra.mxu0 0.0
        %3411 = vmatprep.subr.mxu0 0.0
        %3412 = vmatpush2.msra.mxu0 0.0
        %3413 = vmatprep.subr.mxu0 0.0
        %3414 = vmatpush2.msra.mxu0 0.0
        %3415 = vmatprep.subr.mxu0 0.0
        %3416 = vmatpush2.msra.mxu0 0.0
        %3417 = vmatprep.subr.mxu0 0.0
        %3418 = vmatpush2.msra.mxu0 0.0
        %3419 = vmatprep.subr.mxu0 0.0
        %3420 = vmatpush2.msra.mxu0 0.0
        %3421 = vmatprep.subr.mxu0 0.0
        %3422 = vmatpush2.msra.mxu0 0.0
        %3423 = vmatprep.subr.mxu0 0.0
        %3424 = vmatpush2.msra.mxu0 0.0
        %3425 = vmatprep.subr.mxu0 0.0
        %3426 = vmatpush2.msra.mxu0 0.0
        %3427 = vmatprep.subr.mxu0 0.0
        %3428 = vmatpush2.msra.mxu0 0.0
        %3429 = vmatprep.mubr.f32.mxu0 0.0
        %v3430 = vand.u32 %v3127, 4294901760
        %v3431 = vsub.f32 %v3127, %v3430
        %v3432 = vand.u32 %v3431, 4294901760
        %3433 = vmatmul.mubr.f32.gmra.mxu0 %v3432
        %v3434 = vpop.f32.mrf.mxu0
        %v3435 = vadd.f32 %v3360, %v3434
        %v3436 = vpop.f32.mrf.mxu0
        %3437 = vdwg.mxu0
        %3438 = vmatprep.subr.mxu0 0.0
        %3439 = vmatpush1.msra.mxu0 0.0
        %3440 = vmatprep.subr.mxu0 0.0
        %3441 = vmatpush1.msra.mxu0 0.0
        %3442 = vmatprep.subr.mxu0 0.0
        %3443 = vmatpush1.msra.mxu0 0.0
        %3444 = vmatprep.subr.mxu0 0.0
        %3445 = vmatpush1.msra.mxu0 0.0
        %3446 = vmatprep.subr.mxu0 0.0
        %3447 = vmatpush1.msra.mxu0 0.0
        %3448 = vmatprep.subr.mxu0 0.0
        %3449 = vmatpush1.msra.mxu0 0.0
        %3450 = vmatprep.subr.mxu0 0.0
        %3451 = vmatpush1.msra.mxu0 0.0
        %3452 = vmatprep.subr.mxu0 0.0
        %3453 = vmatpush1.msra.mxu0 0.0
        %3454 = vmatprep.subr.mxu0 0.0
        %3455 = vmatpush1.msra.mxu0 0.0
        %3456 = vmatprep.subr.mxu0 0.0
        %3457 = vmatpush1.msra.mxu0 0.0
        %3458 = vmatprep.subr.mxu0 0.0
        %3459 = vmatpush1.msra.mxu0 0.0
        %3460 = vmatprep.subr.mxu0 0.0
        %3461 = vmatpush1.msra.mxu0 0.0
        %3462 = vmatprep.subr.mxu0 0.0
        %3463 = vmatpush1.msra.mxu0 0.0
        %3464 = vmatprep.subr.mxu0 0.0
        %3465 = vmatpush1.msra.mxu0 0.0
        %3466 = vmatprep.subr.mxu0 0.0
        %v3467 = vand.u32 %v1272, 4294901760
        %v3468 = vsub.f32 %v1272, %v3467
        %v3469 = vand.u32 %v3468, 4294901760
        %3470 = vmatpush1.msra.mxu0 %v3469
        %3471 = vmatprep.subr.mxu0 0.0
        %v3472 = vand.u32 %v1271, 4294901760
        %v3473 = vsub.f32 %v1271, %v3472
        %v3474 = vand.u32 %v3473, 4294901760
        %3475 = vmatpush1.msra.mxu0 %v3474
        %3476 = vmatprep.subr.mxu0 0.0
        %3477 = vmatpush2.msra.mxu0 0.0
        %3478 = vmatprep.subr.mxu0 0.0
        %3479 = vmatpush2.msra.mxu0 0.0
        %3480 = vmatprep.subr.mxu0 0.0
        %3481 = vmatpush2.msra.mxu0 0.0
        %3482 = vmatprep.subr.mxu0 0.0
        %3483 = vmatpush2.msra.mxu0 0.0
        %3484 = vmatprep.subr.mxu0 0.0
        %3485 = vmatpush2.msra.mxu0 0.0
        %3486 = vmatprep.subr.mxu0 0.0
        %3487 = vmatpush2.msra.mxu0 0.0
        %3488 = vmatprep.subr.mxu0 0.0
        %3489 = vmatpush2.msra.mxu0 0.0
        %3490 = vmatprep.subr.mxu0 0.0
        %3491 = vmatpush2.msra.mxu0 0.0
        %3492 = vmatprep.subr.mxu0 0.0
        %3493 = vmatpush2.msra.mxu0 0.0
        %3494 = vmatprep.subr.mxu0 0.0
        %3495 = vmatpush2.msra.mxu0 0.0
        %3496 = vmatprep.subr.mxu0 0.0
        %3497 = vmatpush2.msra.mxu0 0.0
        %3498 = vmatprep.subr.mxu0 0.0
        %3499 = vmatpush2.msra.mxu0 0.0
        %3500 = vmatprep.subr.mxu0 0.0
        %3501 = vmatpush2.msra.mxu0 0.0
        %3502 = vmatprep.subr.mxu0 0.0
        %3503 = vmatpush2.msra.mxu0 0.0
        %3504 = vmatprep.subr.mxu0 0.0
        %3505 = vmatpush2.msra.mxu0 0.0
        %3506 = vmatprep.subr.mxu0 0.0
        %3507 = vmatpush2.msra.mxu0 0.0
        %3508 = vmatprep.mubr.f32.mxu0 0.0
        %v3509 = vand.u32 %v3127, 4294901760
        %3510 = vmatmul.mubr.f32.gmra.mxu0 %v3509
        %v3511 = vpop.f32.mrf.mxu0
        %v3512 = vadd.f32 %v3435, %v3511
        %v3513 = vpop.f32.mrf.mxu0
        %3514 = vdwg.mxu0
        %3515 = vmatprep.subr.mxu0 0.0
        %3516 = vmatpush1.msra.mxu0 0.0
        %3517 = vmatprep.subr.mxu0 0.0
        %3518 = vmatpush1.msra.mxu0 0.0
        %3519 = vmatprep.subr.mxu0 0.0
        %3520 = vmatpush1.msra.mxu0 0.0
        %3521 = vmatprep.subr.mxu0 0.0
        %3522 = vmatpush1.msra.mxu0 0.0
        %3523 = vmatprep.subr.mxu0 0.0
        %3524 = vmatpush1.msra.mxu0 0.0
        %3525 = vmatprep.subr.mxu0 0.0
        %3526 = vmatpush1.msra.mxu0 0.0
        %3527 = vmatprep.subr.mxu0 0.0
        %3528 = vmatpush1.msra.mxu0 0.0
        %3529 = vmatprep.subr.mxu0 0.0
        %3530 = vmatpush1.msra.mxu0 0.0
        %3531 = vmatprep.subr.mxu0 0.0
        %3532 = vmatpush1.msra.mxu0 0.0
        %3533 = vmatprep.subr.mxu0 0.0
        %3534 = vmatpush1.msra.mxu0 0.0
        %3535 = vmatprep.subr.mxu0 0.0
        %3536 = vmatpush1.msra.mxu0 0.0
        %3537 = vmatprep.subr.mxu0 0.0
        %3538 = vmatpush1.msra.mxu0 0.0
        %3539 = vmatprep.subr.mxu0 0.0
        %3540 = vmatpush1.msra.mxu0 0.0
        %3541 = vmatprep.subr.mxu0 0.0
        %3542 = vmatpush1.msra.mxu0 0.0
        %3543 = vmatprep.subr.mxu0 0.0
        %v3544 = vand.u32 %v1272, 4294901760
        %3545 = vmatpush1.msra.mxu0 %v3544
        %3546 = vmatprep.subr.mxu0 0.0
        %v3547 = vand.u32 %v1271, 4294901760
        %3548 = vmatpush1.msra.mxu0 %v3547
        %3549 = vmatprep.subr.mxu0 0.0
        %3550 = vmatpush2.msra.mxu0 0.0
        %3551 = vmatprep.subr.mxu0 0.0
        %3552 = vmatpush2.msra.mxu0 0.0
        %3553 = vmatprep.subr.mxu0 0.0
        %3554 = vmatpush2.msra.mxu0 0.0
        %3555 = vmatprep.subr.mxu0 0.0
        %3556 = vmatpush2.msra.mxu0 0.0
        %3557 = vmatprep.subr.mxu0 0.0
        %3558 = vmatpush2.msra.mxu0 0.0
        %3559 = vmatprep.subr.mxu0 0.0
        %3560 = vmatpush2.msra.mxu0 0.0
        %3561 = vmatprep.subr.mxu0 0.0
        %3562 = vmatpush2.msra.mxu0 0.0
        %3563 = vmatprep.subr.mxu0 0.0
        %3564 = vmatpush2.msra.mxu0 0.0
        %3565 = vmatprep.subr.mxu0 0.0
        %3566 = vmatpush2.msra.mxu0 0.0
        %3567 = vmatprep.subr.mxu0 0.0
        %3568 = vmatpush2.msra.mxu0 0.0
        %3569 = vmatprep.subr.mxu0 0.0
        %3570 = vmatpush2.msra.mxu0 0.0
        %3571 = vmatprep.subr.mxu0 0.0
        %3572 = vmatpush2.msra.mxu0 0.0
        %3573 = vmatprep.subr.mxu0 0.0
        %3574 = vmatpush2.msra.mxu0 0.0
        %3575 = vmatprep.subr.mxu0 0.0
        %3576 = vmatpush2.msra.mxu0 0.0
        %3577 = vmatprep.subr.mxu0 0.0
        %3578 = vmatpush2.msra.mxu0 0.0
        %3579 = vmatprep.subr.mxu0 0.0
        %3580 = vmatpush2.msra.mxu0 0.0
        %3581 = vmatprep.mubr.f32.mxu0 0.0
        %v3582 = vand.u32 %v3127, 4294901760
        %3583 = vmatmul.mubr.f32.gmra.mxu0 %v3582
        %v3584 = vpop.f32.mrf.mxu0
        %v3585 = vadd.f32 %v3512, %v3584
        %v3586 = vpop.f32.mrf.mxu0
        %3587 = vdwg.mxu0
        %3588 = vst.msk [vmem:[%s212 + $0x10] sm:$0xf] %vm1735, %v3585
        %v3590 = vsel %vm219, %v1268, 0
        %3592 = vmatprep.subr.mxu0 0.0
        %3593 = vmatpush1.msra.mxu0 0.0
        %3594 = vmatprep.subr.mxu0 0.0
        %3595 = vmatpush1.msra.mxu0 0.0
        %3596 = vmatprep.subr.mxu0 0.0
        %3597 = vmatpush1.msra.mxu0 0.0
        %3598 = vmatprep.subr.mxu0 0.0
        %3599 = vmatpush1.msra.mxu0 0.0
        %3600 = vmatprep.subr.mxu0 0.0
        %3601 = vmatpush1.msra.mxu0 0.0
        %3602 = vmatprep.subr.mxu0 0.0
        %3603 = vmatpush1.msra.mxu0 0.0
        %3604 = vmatprep.subr.mxu0 0.0
        %3605 = vmatpush1.msra.mxu0 0.0
        %3606 = vmatprep.subr.mxu0 0.0
        %3607 = vmatpush1.msra.mxu0 0.0
        %3608 = vmatprep.subr.mxu0 0.0
        %3609 = vmatpush1.msra.mxu0 0.0
        %3610 = vmatprep.subr.mxu0 0.0
        %3611 = vmatpush1.msra.mxu0 0.0
        %3612 = vmatprep.subr.mxu0 0.0
        %3613 = vmatpush1.msra.mxu0 0.0
        %3614 = vmatprep.subr.mxu0 0.0
        %3615 = vmatpush1.msra.mxu0 0.0
        %3616 = vmatprep.subr.mxu0 0.0
        %3617 = vmatpush1.msra.mxu0 0.0
        %3618 = vmatprep.subr.mxu0 0.0
        %3619 = vmatpush1.msra.mxu0 0.0
        %3620 = vmatprep.subr.mxu0 0.0
        %v3621 = vand.u32 %v1272, 4294901760
        %3622 = vmatpush1.msra.mxu0 %v3621
        %3623 = vmatprep.subr.mxu0 0.0
        %v3624 = vand.u32 %v1271, 4294901760
        %3625 = vmatpush1.msra.mxu0 %v3624
        %3626 = vmatprep.subr.mxu0 0.0
        %3627 = vmatpush2.msra.mxu0 0.0
        %3628 = vmatprep.subr.mxu0 0.0
        %3629 = vmatpush2.msra.mxu0 0.0
        %3630 = vmatprep.subr.mxu0 0.0
        %3631 = vmatpush2.msra.mxu0 0.0
        %3632 = vmatprep.subr.mxu0 0.0
        %3633 = vmatpush2.msra.mxu0 0.0
        %3634 = vmatprep.subr.mxu0 0.0
        %3635 = vmatpush2.msra.mxu0 0.0
        %3636 = vmatprep.subr.mxu0 0.0
        %3637 = vmatpush2.msra.mxu0 0.0
        %3638 = vmatprep.subr.mxu0 0.0
        %3639 = vmatpush2.msra.mxu0 0.0
        %3640 = vmatprep.subr.mxu0 0.0
        %3641 = vmatpush2.msra.mxu0 0.0
        %3642 = vmatprep.subr.mxu0 0.0
        %3643 = vmatpush2.msra.mxu0 0.0
        %3644 = vmatprep.subr.mxu0 0.0
        %3645 = vmatpush2.msra.mxu0 0.0
        %3646 = vmatprep.subr.mxu0 0.0
        %3647 = vmatpush2.msra.mxu0 0.0
        %3648 = vmatprep.subr.mxu0 0.0
        %3649 = vmatpush2.msra.mxu0 0.0
        %3650 = vmatprep.subr.mxu0 0.0
        %3651 = vmatpush2.msra.mxu0 0.0
        %3652 = vmatprep.subr.mxu0 0.0
        %3653 = vmatpush2.msra.mxu0 0.0
        %3654 = vmatprep.subr.mxu0 0.0
        %3655 = vmatpush2.msra.mxu0 0.0
        %3656 = vmatprep.subr.mxu0 0.0
        %3657 = vmatpush2.msra.mxu0 0.0
        %3658 = vmatprep.mubr.f32.mxu0 0.0
        %v3659 = vand.u32 %v3590, 4294901760
        %v3660 = vsub.f32 %v3590, %v3659
        %v3661 = vand.u32 %v3660, 4294901760
        %v3662 = vsub.f32 %v3660, %v3661
        %v3663 = vand.u32 %v3662, 4294901760
        %3664 = vmatmul.mubr.f32.gmra.mxu0 %v3663
        %v3665 = vpop.f32.mrf.mxu0
        %v3666 = vadd.f32 0.0, %v3665
        %v3667 = vpop.f32.mrf.mxu0
        %3668 = vdwg.mxu0
        %3669 = vmatprep.subr.mxu0 0.0
        %3670 = vmatpush1.msra.mxu0 0.0
        %3671 = vmatprep.subr.mxu0 0.0
        %3672 = vmatpush1.msra.mxu0 0.0
        %3673 = vmatprep.subr.mxu0 0.0
        %3674 = vmatpush1.msra.mxu0 0.0
        %3675 = vmatprep.subr.mxu0 0.0
        %3676 = vmatpush1.msra.mxu0 0.0
        %3677 = vmatprep.subr.mxu0 0.0
        %3678 = vmatpush1.msra.mxu0 0.0
        %3679 = vmatprep.subr.mxu0 0.0
        %3680 = vmatpush1.msra.mxu0 0.0
        %3681 = vmatprep.subr.mxu0 0.0
        %3682 = vmatpush1.msra.mxu0 0.0
        %3683 = vmatprep.subr.mxu0 0.0
        %3684 = vmatpush1.msra.mxu0 0.0
        %3685 = vmatprep.subr.mxu0 0.0
        %3686 = vmatpush1.msra.mxu0 0.0
        %3687 = vmatprep.subr.mxu0 0.0
        %3688 = vmatpush1.msra.mxu0 0.0
        %3689 = vmatprep.subr.mxu0 0.0
        %3690 = vmatpush1.msra.mxu0 0.0
        %3691 = vmatprep.subr.mxu0 0.0
        %3692 = vmatpush1.msra.mxu0 0.0
        %3693 = vmatprep.subr.mxu0 0.0
        %3694 = vmatpush1.msra.mxu0 0.0
        %3695 = vmatprep.subr.mxu0 0.0
        %3696 = vmatpush1.msra.mxu0 0.0
        %3697 = vmatprep.subr.mxu0 0.0
        %v3698 = vand.u32 %v1272, 4294901760
        %v3699 = vsub.f32 %v1272, %v3698
        %v3700 = vand.u32 %v3699, 4294901760
        %v3701 = vsub.f32 %v3699, %v3700
        %v3702 = vand.u32 %v3701, 4294901760
        %3703 = vmatpush1.msra.mxu0 %v3702
        %3704 = vmatprep.subr.mxu0 0.0
        %v3705 = vand.u32 %v1271, 4294901760
        %v3706 = vsub.f32 %v1271, %v3705
        %v3707 = vand.u32 %v3706, 4294901760
        %v3708 = vsub.f32 %v3706, %v3707
        %v3709 = vand.u32 %v3708, 4294901760
        %3710 = vmatpush1.msra.mxu0 %v3709
        %3711 = vmatprep.subr.mxu0 0.0
        %3712 = vmatpush2.msra.mxu0 0.0
        %3713 = vmatprep.subr.mxu0 0.0
        %3714 = vmatpush2.msra.mxu0 0.0
        %3715 = vmatprep.subr.mxu0 0.0
        %3716 = vmatpush2.msra.mxu0 0.0
        %3717 = vmatprep.subr.mxu0 0.0
        %3718 = vmatpush2.msra.mxu0 0.0
        %3719 = vmatprep.subr.mxu0 0.0
        %3720 = vmatpush2.msra.mxu0 0.0
        %3721 = vmatprep.subr.mxu0 0.0
        %3722 = vmatpush2.msra.mxu0 0.0
        %3723 = vmatprep.subr.mxu0 0.0
        %3724 = vmatpush2.msra.mxu0 0.0
        %3725 = vmatprep.subr.mxu0 0.0
        %3726 = vmatpush2.msra.mxu0 0.0
        %3727 = vmatprep.subr.mxu0 0.0
        %3728 = vmatpush2.msra.mxu0 0.0
        %3729 = vmatprep.subr.mxu0 0.0
        %3730 = vmatpush2.msra.mxu0 0.0
        %3731 = vmatprep.subr.mxu0 0.0
        %3732 = vmatpush2.msra.mxu0 0.0
        %3733 = vmatprep.subr.mxu0 0.0
        %3734 = vmatpush2.msra.mxu0 0.0
        %3735 = vmatprep.subr.mxu0 0.0
        %3736 = vmatpush2.msra.mxu0 0.0
        %3737 = vmatprep.subr.mxu0 0.0
        %3738 = vmatpush2.msra.mxu0 0.0
        %3739 = vmatprep.subr.mxu0 0.0
        %3740 = vmatpush2.msra.mxu0 0.0
        %3741 = vmatprep.subr.mxu0 0.0
        %3742 = vmatpush2.msra.mxu0 0.0
        %3743 = vmatprep.mubr.f32.mxu0 0.0
        %v3744 = vand.u32 %v3590, 4294901760
        %3745 = vmatmul.mubr.f32.gmra.mxu0 %v3744
        %v3746 = vpop.f32.mrf.mxu0
        %v3747 = vadd.f32 %v3666, %v3746
        %v3748 = vpop.f32.mrf.mxu0
        %3749 = vdwg.mxu0
        %3750 = vmatprep.subr.mxu0 0.0
        %3751 = vmatpush1.msra.mxu0 0.0
        %3752 = vmatprep.subr.mxu0 0.0
        %3753 = vmatpush1.msra.mxu0 0.0
        %3754 = vmatprep.subr.mxu0 0.0
        %3755 = vmatpush1.msra.mxu0 0.0
        %3756 = vmatprep.subr.mxu0 0.0
        %3757 = vmatpush1.msra.mxu0 0.0
        %3758 = vmatprep.subr.mxu0 0.0
        %3759 = vmatpush1.msra.mxu0 0.0
        %3760 = vmatprep.subr.mxu0 0.0
        %3761 = vmatpush1.msra.mxu0 0.0
        %3762 = vmatprep.subr.mxu0 0.0
        %3763 = vmatpush1.msra.mxu0 0.0
        %3764 = vmatprep.subr.mxu0 0.0
        %3765 = vmatpush1.msra.mxu0 0.0
        %3766 = vmatprep.subr.mxu0 0.0
        %3767 = vmatpush1.msra.mxu0 0.0
        %3768 = vmatprep.subr.mxu0 0.0
        %3769 = vmatpush1.msra.mxu0 0.0
        %3770 = vmatprep.subr.mxu0 0.0
        %3771 = vmatpush1.msra.mxu0 0.0
        %3772 = vmatprep.subr.mxu0 0.0
        %3773 = vmatpush1.msra.mxu0 0.0
        %3774 = vmatprep.subr.mxu0 0.0
        %3775 = vmatpush1.msra.mxu0 0.0
        %3776 = vmatprep.subr.mxu0 0.0
        %3777 = vmatpush1.msra.mxu0 0.0
        %3778 = vmatprep.subr.mxu0 0.0
        %v3779 = vand.u32 %v1272, 4294901760
        %v3780 = vsub.f32 %v1272, %v3779
        %3781 = vmatpush1.msra.mxu0 %v3780
        %3782 = vmatprep.subr.mxu0 0.0
        %v3783 = vand.u32 %v1271, 4294901760
        %v3784 = vsub.f32 %v1271, %v3783
        %3785 = vmatpush1.msra.mxu0 %v3784
        %3786 = vmatprep.subr.mxu0 0.0
        %3787 = vmatpush2.msra.mxu0 0.0
        %3788 = vmatprep.subr.mxu0 0.0
        %3789 = vmatpush2.msra.mxu0 0.0
        %3790 = vmatprep.subr.mxu0 0.0
        %3791 = vmatpush2.msra.mxu0 0.0
        %3792 = vmatprep.subr.mxu0 0.0
        %3793 = vmatpush2.msra.mxu0 0.0
        %3794 = vmatprep.subr.mxu0 0.0
        %3795 = vmatpush2.msra.mxu0 0.0
        %3796 = vmatprep.subr.mxu0 0.0
        %3797 = vmatpush2.msra.mxu0 0.0
        %3798 = vmatprep.subr.mxu0 0.0
        %3799 = vmatpush2.msra.mxu0 0.0
        %3800 = vmatprep.subr.mxu0 0.0
        %3801 = vmatpush2.msra.mxu0 0.0
        %3802 = vmatprep.subr.mxu0 0.0
        %3803 = vmatpush2.msra.mxu0 0.0
        %3804 = vmatprep.subr.mxu0 0.0
        %3805 = vmatpush2.msra.mxu0 0.0
        %3806 = vmatprep.subr.mxu0 0.0
        %3807 = vmatpush2.msra.mxu0 0.0
        %3808 = vmatprep.subr.mxu0 0.0
        %3809 = vmatpush2.msra.mxu0 0.0
        %3810 = vmatprep.subr.mxu0 0.0
        %3811 = vmatpush2.msra.mxu0 0.0
        %3812 = vmatprep.subr.mxu0 0.0
        %3813 = vmatpush2.msra.mxu0 0.0
        %3814 = vmatprep.subr.mxu0 0.0
        %3815 = vmatpush2.msra.mxu0 0.0
        %3816 = vmatprep.subr.mxu0 0.0
        %3817 = vmatpush2.msra.mxu0 0.0
        %3818 = vmatprep.mubr.f32.mxu0 0.0
        %v3819 = vand.u32 %v3590, 4294901760
        %v3820 = vsub.f32 %v3590, %v3819
        %3821 = vmatmul.mubr.f32.gmra.mxu0 %v3820
        %v3822 = vpop.f32.mrf.mxu0
        %v3823 = vadd.f32 %v3747, %v3822
        %v3824 = vpop.f32.mrf.mxu0
        %3825 = vdwg.mxu0
        %3826 = vmatprep.subr.mxu0 0.0
        %3827 = vmatpush1.msra.mxu0 0.0
        %3828 = vmatprep.subr.mxu0 0.0
        %3829 = vmatpush1.msra.mxu0 0.0
        %3830 = vmatprep.subr.mxu0 0.0
        %3831 = vmatpush1.msra.mxu0 0.0
        %3832 = vmatprep.subr.mxu0 0.0
        %3833 = vmatpush1.msra.mxu0 0.0
        %3834 = vmatprep.subr.mxu0 0.0
        %3835 = vmatpush1.msra.mxu0 0.0
        %3836 = vmatprep.subr.mxu0 0.0
        %3837 = vmatpush1.msra.mxu0 0.0
        %3838 = vmatprep.subr.mxu0 0.0
        %3839 = vmatpush1.msra.mxu0 0.0
        %3840 = vmatprep.subr.mxu0 0.0
        %3841 = vmatpush1.msra.mxu0 0.0
        %3842 = vmatprep.subr.mxu0 0.0
        %3843 = vmatpush1.msra.mxu0 0.0
        %3844 = vmatprep.subr.mxu0 0.0
        %3845 = vmatpush1.msra.mxu0 0.0
        %3846 = vmatprep.subr.mxu0 0.0
        %3847 = vmatpush1.msra.mxu0 0.0
        %3848 = vmatprep.subr.mxu0 0.0
        %3849 = vmatpush1.msra.mxu0 0.0
        %3850 = vmatprep.subr.mxu0 0.0
        %3851 = vmatpush1.msra.mxu0 0.0
        %3852 = vmatprep.subr.mxu0 0.0
        %3853 = vmatpush1.msra.mxu0 0.0
        %3854 = vmatprep.subr.mxu0 0.0
        %v3855 = vand.u32 %v1272, 4294901760
        %3856 = vmatpush1.msra.mxu0 %v3855
        %3857 = vmatprep.subr.mxu0 0.0
        %v3858 = vand.u32 %v1271, 4294901760
        %3859 = vmatpush1.msra.mxu0 %v3858
        %3860 = vmatprep.subr.mxu0 0.0
        %3861 = vmatpush2.msra.mxu0 0.0
        %3862 = vmatprep.subr.mxu0 0.0
        %3863 = vmatpush2.msra.mxu0 0.0
        %3864 = vmatprep.subr.mxu0 0.0
        %3865 = vmatpush2.msra.mxu0 0.0
        %3866 = vmatprep.subr.mxu0 0.0
        %3867 = vmatpush2.msra.mxu0 0.0
        %3868 = vmatprep.subr.mxu0 0.0
        %3869 = vmatpush2.msra.mxu0 0.0
        %3870 = vmatprep.subr.mxu0 0.0
        %3871 = vmatpush2.msra.mxu0 0.0
        %3872 = vmatprep.subr.mxu0 0.0
        %3873 = vmatpush2.msra.mxu0 0.0
        %3874 = vmatprep.subr.mxu0 0.0
        %3875 = vmatpush2.msra.mxu0 0.0
        %3876 = vmatprep.subr.mxu0 0.0
        %3877 = vmatpush2.msra.mxu0 0.0
        %3878 = vmatprep.subr.mxu0 0.0
        %3879 = vmatpush2.msra.mxu0 0.0
        %3880 = vmatprep.subr.mxu0 0.0
        %3881 = vmatpush2.msra.mxu0 0.0
        %3882 = vmatprep.subr.mxu0 0.0
        %3883 = vmatpush2.msra.mxu0 0.0
        %3884 = vmatprep.subr.mxu0 0.0
        %3885 = vmatpush2.msra.mxu0 0.0
        %3886 = vmatprep.subr.mxu0 0.0
        %3887 = vmatpush2.msra.mxu0 0.0
        %3888 = vmatprep.subr.mxu0 0.0
        %3889 = vmatpush2.msra.mxu0 0.0
        %3890 = vmatprep.subr.mxu0 0.0
        %3891 = vmatpush2.msra.mxu0 0.0
        %3892 = vmatprep.mubr.f32.mxu0 0.0
        %v3893 = vand.u32 %v3590, 4294901760
        %v3894 = vsub.f32 %v3590, %v3893
        %v3895 = vand.u32 %v3894, 4294901760
        %3896 = vmatmul.mubr.f32.gmra.mxu0 %v3895
        %v3897 = vpop.f32.mrf.mxu0
        %v3898 = vadd.f32 %v3823, %v3897
        %v3899 = vpop.f32.mrf.mxu0
        %3900 = vdwg.mxu0
        %3901 = vmatprep.subr.mxu0 0.0
        %3902 = vmatpush1.msra.mxu0 0.0
        %3903 = vmatprep.subr.mxu0 0.0
        %3904 = vmatpush1.msra.mxu0 0.0
        %3905 = vmatprep.subr.mxu0 0.0
        %3906 = vmatpush1.msra.mxu0 0.0
        %3907 = vmatprep.subr.mxu0 0.0
        %3908 = vmatpush1.msra.mxu0 0.0
        %3909 = vmatprep.subr.mxu0 0.0
        %3910 = vmatpush1.msra.mxu0 0.0
        %3911 = vmatprep.subr.mxu0 0.0
        %3912 = vmatpush1.msra.mxu0 0.0
        %3913 = vmatprep.subr.mxu0 0.0
        %3914 = vmatpush1.msra.mxu0 0.0
        %3915 = vmatprep.subr.mxu0 0.0
        %3916 = vmatpush1.msra.mxu0 0.0
        %3917 = vmatprep.subr.mxu0 0.0
        %3918 = vmatpush1.msra.mxu0 0.0
        %3919 = vmatprep.subr.mxu0 0.0
        %3920 = vmatpush1.msra.mxu0 0.0
        %3921 = vmatprep.subr.mxu0 0.0
        %3922 = vmatpush1.msra.mxu0 0.0
        %3923 = vmatprep.subr.mxu0 0.0
        %3924 = vmatpush1.msra.mxu0 0.0
        %3925 = vmatprep.subr.mxu0 0.0
        %3926 = vmatpush1.msra.mxu0 0.0
        %3927 = vmatprep.subr.mxu0 0.0
        %3928 = vmatpush1.msra.mxu0 0.0
        %3929 = vmatprep.subr.mxu0 0.0
        %v3930 = vand.u32 %v1272, 4294901760
        %v3931 = vsub.f32 %v1272, %v3930
        %v3932 = vand.u32 %v3931, 4294901760
        %3933 = vmatpush1.msra.mxu0 %v3932
        %3934 = vmatprep.subr.mxu0 0.0
        %v3935 = vand.u32 %v1271, 4294901760
        %v3936 = vsub.f32 %v1271, %v3935
        %v3937 = vand.u32 %v3936, 4294901760
        %3938 = vmatpush1.msra.mxu0 %v3937
        %3939 = vmatprep.subr.mxu0 0.0
        %3940 = vmatpush2.msra.mxu0 0.0
        %3941 = vmatprep.subr.mxu0 0.0
        %3942 = vmatpush2.msra.mxu0 0.0
        %3943 = vmatprep.subr.mxu0 0.0
        %3944 = vmatpush2.msra.mxu0 0.0
        %3945 = vmatprep.subr.mxu0 0.0
        %3946 = vmatpush2.msra.mxu0 0.0
        %3947 = vmatprep.subr.mxu0 0.0
        %3948 = vmatpush2.msra.mxu0 0.0
        %3949 = vmatprep.subr.mxu0 0.0
        %3950 = vmatpush2.msra.mxu0 0.0
        %3951 = vmatprep.subr.mxu0 0.0
        %3952 = vmatpush2.msra.mxu0 0.0
        %3953 = vmatprep.subr.mxu0 0.0
        %3954 = vmatpush2.msra.mxu0 0.0
        %3955 = vmatprep.subr.mxu0 0.0
        %3956 = vmatpush2.msra.mxu0 0.0
        %3957 = vmatprep.subr.mxu0 0.0
        %3958 = vmatpush2.msra.mxu0 0.0
        %3959 = vmatprep.subr.mxu0 0.0
        %3960 = vmatpush2.msra.mxu0 0.0
        %3961 = vmatprep.subr.mxu0 0.0
        %3962 = vmatpush2.msra.mxu0 0.0
        %3963 = vmatprep.subr.mxu0 0.0
        %3964 = vmatpush2.msra.mxu0 0.0
        %3965 = vmatprep.subr.mxu0 0.0
        %3966 = vmatpush2.msra.mxu0 0.0
        %3967 = vmatprep.subr.mxu0 0.0
        %3968 = vmatpush2.msra.mxu0 0.0
        %3969 = vmatprep.subr.mxu0 0.0
        %3970 = vmatpush2.msra.mxu0 0.0
        %3971 = vmatprep.mubr.f32.mxu0 0.0
        %v3972 = vand.u32 %v3590, 4294901760
        %3973 = vmatmul.mubr.f32.gmra.mxu0 %v3972
        %v3974 = vpop.f32.mrf.mxu0
        %v3975 = vadd.f32 %v3898, %v3974
        %v3976 = vpop.f32.mrf.mxu0
        %3977 = vdwg.mxu0
        %3978 = vmatprep.subr.mxu0 0.0
        %3979 = vmatpush1.msra.mxu0 0.0
        %3980 = vmatprep.subr.mxu0 0.0
        %3981 = vmatpush1.msra.mxu0 0.0
        %3982 = vmatprep.subr.mxu0 0.0
        %3983 = vmatpush1.msra.mxu0 0.0
        %3984 = vmatprep.subr.mxu0 0.0
        %3985 = vmatpush1.msra.mxu0 0.0
        %3986 = vmatprep.subr.mxu0 0.0
        %3987 = vmatpush1.msra.mxu0 0.0
        %3988 = vmatprep.subr.mxu0 0.0
        %3989 = vmatpush1.msra.mxu0 0.0
        %3990 = vmatprep.subr.mxu0 0.0
        %3991 = vmatpush1.msra.mxu0 0.0
        %3992 = vmatprep.subr.mxu0 0.0
        %3993 = vmatpush1.msra.mxu0 0.0
        %3994 = vmatprep.subr.mxu0 0.0
        %3995 = vmatpush1.msra.mxu0 0.0
        %3996 = vmatprep.subr.mxu0 0.0
        %3997 = vmatpush1.msra.mxu0 0.0
        %3998 = vmatprep.subr.mxu0 0.0
        %3999 = vmatpush1.msra.mxu0 0.0
        %4000 = vmatprep.subr.mxu0 0.0
        %4001 = vmatpush1.msra.mxu0 0.0
        %4002 = vmatprep.subr.mxu0 0.0
        %4003 = vmatpush1.msra.mxu0 0.0
        %4004 = vmatprep.subr.mxu0 0.0
        %4005 = vmatpush1.msra.mxu0 0.0
        %4006 = vmatprep.subr.mxu0 0.0
        %v4007 = vand.u32 %v1272, 4294901760
        %4008 = vmatpush1.msra.mxu0 %v4007
        %4009 = vmatprep.subr.mxu0 0.0
        %v4010 = vand.u32 %v1271, 4294901760
        %4011 = vmatpush1.msra.mxu0 %v4010
        %4012 = vmatprep.subr.mxu0 0.0
        %4013 = vmatpush2.msra.mxu0 0.0
        %4014 = vmatprep.subr.mxu0 0.0
        %4015 = vmatpush2.msra.mxu0 0.0
        %4016 = vmatprep.subr.mxu0 0.0
        %4017 = vmatpush2.msra.mxu0 0.0
        %4018 = vmatprep.subr.mxu0 0.0
        %4019 = vmatpush2.msra.mxu0 0.0
        %4020 = vmatprep.subr.mxu0 0.0
        %4021 = vmatpush2.msra.mxu0 0.0
        %4022 = vmatprep.subr.mxu0 0.0
        %4023 = vmatpush2.msra.mxu0 0.0
        %4024 = vmatprep.subr.mxu0 0.0
        %4025 = vmatpush2.msra.mxu0 0.0
        %4026 = vmatprep.subr.mxu0 0.0
        %4027 = vmatpush2.msra.mxu0 0.0
        %4028 = vmatprep.subr.mxu0 0.0
        %4029 = vmatpush2.msra.mxu0 0.0
        %4030 = vmatprep.subr.mxu0 0.0
        %4031 = vmatpush2.msra.mxu0 0.0
        %4032 = vmatprep.subr.mxu0 0.0
        %4033 = vmatpush2.msra.mxu0 0.0
        %4034 = vmatprep.subr.mxu0 0.0
        %4035 = vmatpush2.msra.mxu0 0.0
        %4036 = vmatprep.subr.mxu0 0.0
        %4037 = vmatpush2.msra.mxu0 0.0
        %4038 = vmatprep.subr.mxu0 0.0
        %4039 = vmatpush2.msra.mxu0 0.0
        %4040 = vmatprep.subr.mxu0 0.0
        %4041 = vmatpush2.msra.mxu0 0.0
        %4042 = vmatprep.subr.mxu0 0.0
        %4043 = vmatpush2.msra.mxu0 0.0
        %4044 = vmatprep.mubr.f32.mxu0 0.0
        %v4045 = vand.u32 %v3590, 4294901760
        %4046 = vmatmul.mubr.f32.gmra.mxu0 %v4045
        %v4047 = vpop.f32.mrf.mxu0
        %v4048 = vadd.f32 %v3975, %v4047
        %v4049 = vpop.f32.mrf.mxu0
        %4050 = vdwg.mxu0
        %4051 = vst.msk [vmem:[%s212 + $0x14] sm:$0xf] %vm1735, %v4048
        %v4053 = vsel %vm219, %v1269, 0
        %4055 = vmatprep.subr.mxu0 0.0
        %4056 = vmatpush1.msra.mxu0 0.0
        %4057 = vmatprep.subr.mxu0 0.0
        %4058 = vmatpush1.msra.mxu0 0.0
        %4059 = vmatprep.subr.mxu0 0.0
        %4060 = vmatpush1.msra.mxu0 0.0
        %4061 = vmatprep.subr.mxu0 0.0
        %4062 = vmatpush1.msra.mxu0 0.0
        %4063 = vmatprep.subr.mxu0 0.0
        %4064 = vmatpush1.msra.mxu0 0.0
        %4065 = vmatprep.subr.mxu0 0.0
        %4066 = vmatpush1.msra.mxu0 0.0
        %4067 = vmatprep.subr.mxu0 0.0
        %4068 = vmatpush1.msra.mxu0 0.0
        %4069 = vmatprep.subr.mxu0 0.0
        %4070 = vmatpush1.msra.mxu0 0.0
        %4071 = vmatprep.subr.mxu0 0.0
        %4072 = vmatpush1.msra.mxu0 0.0
        %4073 = vmatprep.subr.mxu0 0.0
        %4074 = vmatpush1.msra.mxu0 0.0
        %4075 = vmatprep.subr.mxu0 0.0
        %4076 = vmatpush1.msra.mxu0 0.0
        %4077 = vmatprep.subr.mxu0 0.0
        %4078 = vmatpush1.msra.mxu0 0.0
        %4079 = vmatprep.subr.mxu0 0.0
        %4080 = vmatpush1.msra.mxu0 0.0
        %4081 = vmatprep.subr.mxu0 0.0
        %4082 = vmatpush1.msra.mxu0 0.0
        %4083 = vmatprep.subr.mxu0 0.0
        %v4084 = vand.u32 %v1272, 4294901760
        %4085 = vmatpush1.msra.mxu0 %v4084
        %4086 = vmatprep.subr.mxu0 0.0
        %v4087 = vand.u32 %v1271, 4294901760
        %4088 = vmatpush1.msra.mxu0 %v4087
        %4089 = vmatprep.subr.mxu0 0.0
        %4090 = vmatpush2.msra.mxu0 0.0
        %4091 = vmatprep.subr.mxu0 0.0
        %4092 = vmatpush2.msra.mxu0 0.0
        %4093 = vmatprep.subr.mxu0 0.0
        %4094 = vmatpush2.msra.mxu0 0.0
        %4095 = vmatprep.subr.mxu0 0.0
        %4096 = vmatpush2.msra.mxu0 0.0
        %4097 = vmatprep.subr.mxu0 0.0
        %4098 = vmatpush2.msra.mxu0 0.0
        %4099 = vmatprep.subr.mxu0 0.0
        %4100 = vmatpush2.msra.mxu0 0.0
        %4101 = vmatprep.subr.mxu0 0.0
        %4102 = vmatpush2.msra.mxu0 0.0
        %4103 = vmatprep.subr.mxu0 0.0
        %4104 = vmatpush2.msra.mxu0 0.0
        %4105 = vmatprep.subr.mxu0 0.0
        %4106 = vmatpush2.msra.mxu0 0.0
        %4107 = vmatprep.subr.mxu0 0.0
        %4108 = vmatpush2.msra.mxu0 0.0
        %4109 = vmatprep.subr.mxu0 0.0
        %4110 = vmatpush2.msra.mxu0 0.0
        %4111 = vmatprep.subr.mxu0 0.0
        %4112 = vmatpush2.msra.mxu0 0.0
        %4113 = vmatprep.subr.mxu0 0.0
        %4114 = vmatpush2.msra.mxu0 0.0
        %4115 = vmatprep.subr.mxu0 0.0
        %4116 = vmatpush2.msra.mxu0 0.0
        %4117 = vmatprep.subr.mxu0 0.0
        %4118 = vmatpush2.msra.mxu0 0.0
        %4119 = vmatprep.subr.mxu0 0.0
        %4120 = vmatpush2.msra.mxu0 0.0
        %4121 = vmatprep.mubr.f32.mxu0 0.0
        %v4122 = vand.u32 %v4053, 4294901760
        %v4123 = vsub.f32 %v4053, %v4122
        %v4124 = vand.u32 %v4123, 4294901760
        %v4125 = vsub.f32 %v4123, %v4124
        %v4126 = vand.u32 %v4125, 4294901760
        %4127 = vmatmul.mubr.f32.gmra.mxu0 %v4126
        %v4128 = vpop.f32.mrf.mxu0
        %v4129 = vadd.f32 0.0, %v4128
        %v4130 = vpop.f32.mrf.mxu0
        %4131 = vdwg.mxu0
        %4132 = vmatprep.subr.mxu0 0.0
        %4133 = vmatpush1.msra.mxu0 0.0
        %4134 = vmatprep.subr.mxu0 0.0
        %4135 = vmatpush1.msra.mxu0 0.0
        %4136 = vmatprep.subr.mxu0 0.0
        %4137 = vmatpush1.msra.mxu0 0.0
        %4138 = vmatprep.subr.mxu0 0.0
        %4139 = vmatpush1.msra.mxu0 0.0
        %4140 = vmatprep.subr.mxu0 0.0
        %4141 = vmatpush1.msra.mxu0 0.0
        %4142 = vmatprep.subr.mxu0 0.0
        %4143 = vmatpush1.msra.mxu0 0.0
        %4144 = vmatprep.subr.mxu0 0.0
        %4145 = vmatpush1.msra.mxu0 0.0
        %4146 = vmatprep.subr.mxu0 0.0
        %4147 = vmatpush1.msra.mxu0 0.0
        %4148 = vmatprep.subr.mxu0 0.0
        %4149 = vmatpush1.msra.mxu0 0.0
        %4150 = vmatprep.subr.mxu0 0.0
        %4151 = vmatpush1.msra.mxu0 0.0
        %4152 = vmatprep.subr.mxu0 0.0
        %4153 = vmatpush1.msra.mxu0 0.0
        %4154 = vmatprep.subr.mxu0 0.0
        %4155 = vmatpush1.msra.mxu0 0.0
        %4156 = vmatprep.subr.mxu0 0.0
        %4157 = vmatpush1.msra.mxu0 0.0
        %4158 = vmatprep.subr.mxu0 0.0
        %4159 = vmatpush1.msra.mxu0 0.0
        %4160 = vmatprep.subr.mxu0 0.0
        %v4161 = vand.u32 %v1272, 4294901760
        %v4162 = vsub.f32 %v1272, %v4161
        %v4163 = vand.u32 %v4162, 4294901760
        %v4164 = vsub.f32 %v4162, %v4163
        %v4165 = vand.u32 %v4164, 4294901760
        %4166 = vmatpush1.msra.mxu0 %v4165
        %4167 = vmatprep.subr.mxu0 0.0
        %v4168 = vand.u32 %v1271, 4294901760
        %v4169 = vsub.f32 %v1271, %v4168
        %v4170 = vand.u32 %v4169, 4294901760
        %v4171 = vsub.f32 %v4169, %v4170
        %v4172 = vand.u32 %v4171, 4294901760
        %4173 = vmatpush1.msra.mxu0 %v4172
        %4174 = vmatprep.subr.mxu0 0.0
        %4175 = vmatpush2.msra.mxu0 0.0
        %4176 = vmatprep.subr.mxu0 0.0
        %4177 = vmatpush2.msra.mxu0 0.0
        %4178 = vmatprep.subr.mxu0 0.0
        %4179 = vmatpush2.msra.mxu0 0.0
        %4180 = vmatprep.subr.mxu0 0.0
        %4181 = vmatpush2.msra.mxu0 0.0
        %4182 = vmatprep.subr.mxu0 0.0
        %4183 = vmatpush2.msra.mxu0 0.0
        %4184 = vmatprep.subr.mxu0 0.0
        %4185 = vmatpush2.msra.mxu0 0.0
        %4186 = vmatprep.subr.mxu0 0.0
        %4187 = vmatpush2.msra.mxu0 0.0
        %4188 = vmatprep.subr.mxu0 0.0
        %4189 = vmatpush2.msra.mxu0 0.0
        %4190 = vmatprep.subr.mxu0 0.0
        %4191 = vmatpush2.msra.mxu0 0.0
        %4192 = vmatprep.subr.mxu0 0.0
        %4193 = vmatpush2.msra.mxu0 0.0
        %4194 = vmatprep.subr.mxu0 0.0
        %4195 = vmatpush2.msra.mxu0 0.0
        %4196 = vmatprep.subr.mxu0 0.0
        %4197 = vmatpush2.msra.mxu0 0.0
        %4198 = vmatprep.subr.mxu0 0.0
        %4199 = vmatpush2.msra.mxu0 0.0
        %4200 = vmatprep.subr.mxu0 0.0
        %4201 = vmatpush2.msra.mxu0 0.0
        %4202 = vmatprep.subr.mxu0 0.0
        %4203 = vmatpush2.msra.mxu0 0.0
        %4204 = vmatprep.subr.mxu0 0.0
        %4205 = vmatpush2.msra.mxu0 0.0
        %4206 = vmatprep.mubr.f32.mxu0 0.0
        %v4207 = vand.u32 %v4053, 4294901760
        %4208 = vmatmul.mubr.f32.gmra.mxu0 %v4207
        %v4209 = vpop.f32.mrf.mxu0
        %v4210 = vadd.f32 %v4129, %v4209
        %v4211 = vpop.f32.mrf.mxu0
        %4212 = vdwg.mxu0
        %4213 = vmatprep.subr.mxu0 0.0
        %4214 = vmatpush1.msra.mxu0 0.0
        %4215 = vmatprep.subr.mxu0 0.0
        %4216 = vmatpush1.msra.mxu0 0.0
        %4217 = vmatprep.subr.mxu0 0.0
        %4218 = vmatpush1.msra.mxu0 0.0
        %4219 = vmatprep.subr.mxu0 0.0
        %4220 = vmatpush1.msra.mxu0 0.0
        %4221 = vmatprep.subr.mxu0 0.0
        %4222 = vmatpush1.msra.mxu0 0.0
        %4223 = vmatprep.subr.mxu0 0.0
        %4224 = vmatpush1.msra.mxu0 0.0
        %4225 = vmatprep.subr.mxu0 0.0
        %4226 = vmatpush1.msra.mxu0 0.0
        %4227 = vmatprep.subr.mxu0 0.0
        %4228 = vmatpush1.msra.mxu0 0.0
        %4229 = vmatprep.subr.mxu0 0.0
        %4230 = vmatpush1.msra.mxu0 0.0
        %4231 = vmatprep.subr.mxu0 0.0
        %4232 = vmatpush1.msra.mxu0 0.0
        %4233 = vmatprep.subr.mxu0 0.0
        %4234 = vmatpush1.msra.mxu0 0.0
        %4235 = vmatprep.subr.mxu0 0.0
        %4236 = vmatpush1.msra.mxu0 0.0
        %4237 = vmatprep.subr.mxu0 0.0
        %4238 = vmatpush1.msra.mxu0 0.0
        %4239 = vmatprep.subr.mxu0 0.0
        %4240 = vmatpush1.msra.mxu0 0.0
        %4241 = vmatprep.subr.mxu0 0.0
        %v4242 = vand.u32 %v1272, 4294901760
        %v4243 = vsub.f32 %v1272, %v4242
        %4244 = vmatpush1.msra.mxu0 %v4243
        %4245 = vmatprep.subr.mxu0 0.0
        %v4246 = vand.u32 %v1271, 4294901760
        %v4247 = vsub.f32 %v1271, %v4246
        %4248 = vmatpush1.msra.mxu0 %v4247
        %4249 = vmatprep.subr.mxu0 0.0
        %4250 = vmatpush2.msra.mxu0 0.0
        %4251 = vmatprep.subr.mxu0 0.0
        %4252 = vmatpush2.msra.mxu0 0.0
        %4253 = vmatprep.subr.mxu0 0.0
        %4254 = vmatpush2.msra.mxu0 0.0
        %4255 = vmatprep.subr.mxu0 0.0
        %4256 = vmatpush2.msra.mxu0 0.0
        %4257 = vmatprep.subr.mxu0 0.0
        %4258 = vmatpush2.msra.mxu0 0.0
        %4259 = vmatprep.subr.mxu0 0.0
        %4260 = vmatpush2.msra.mxu0 0.0
        %4261 = vmatprep.subr.mxu0 0.0
        %4262 = vmatpush2.msra.mxu0 0.0
        %4263 = vmatprep.subr.mxu0 0.0
        %4264 = vmatpush2.msra.mxu0 0.0
        %4265 = vmatprep.subr.mxu0 0.0
        %4266 = vmatpush2.msra.mxu0 0.0
        %4267 = vmatprep.subr.mxu0 0.0
        %4268 = vmatpush2.msra.mxu0 0.0
        %4269 = vmatprep.subr.mxu0 0.0
        %4270 = vmatpush2.msra.mxu0 0.0
        %4271 = vmatprep.subr.mxu0 0.0
        %4272 = vmatpush2.msra.mxu0 0.0
        %4273 = vmatprep.subr.mxu0 0.0
        %4274 = vmatpush2.msra.mxu0 0.0
        %4275 = vmatprep.subr.mxu0 0.0
        %4276 = vmatpush2.msra.mxu0 0.0
        %4277 = vmatprep.subr.mxu0 0.0
        %4278 = vmatpush2.msra.mxu0 0.0
        %4279 = vmatprep.subr.mxu0 0.0
        %4280 = vmatpush2.msra.mxu0 0.0
        %4281 = vmatprep.mubr.f32.mxu0 0.0
        %v4282 = vand.u32 %v4053, 4294901760
        %v4283 = vsub.f32 %v4053, %v4282
        %4284 = vmatmul.mubr.f32.gmra.mxu0 %v4283
        %v4285 = vpop.f32.mrf.mxu0
        %v4286 = vadd.f32 %v4210, %v4285
        %v4287 = vpop.f32.mrf.mxu0
        %4288 = vdwg.mxu0
        %4289 = vmatprep.subr.mxu0 0.0
        %4290 = vmatpush1.msra.mxu0 0.0
        %4291 = vmatprep.subr.mxu0 0.0
        %4292 = vmatpush1.msra.mxu0 0.0
        %4293 = vmatprep.subr.mxu0 0.0
        %4294 = vmatpush1.msra.mxu0 0.0
        %4295 = vmatprep.subr.mxu0 0.0
        %4296 = vmatpush1.msra.mxu0 0.0
        %4297 = vmatprep.subr.mxu0 0.0
        %4298 = vmatpush1.msra.mxu0 0.0
        %4299 = vmatprep.subr.mxu0 0.0
        %4300 = vmatpush1.msra.mxu0 0.0
        %4301 = vmatprep.subr.mxu0 0.0
        %4302 = vmatpush1.msra.mxu0 0.0
        %4303 = vmatprep.subr.mxu0 0.0
        %4304 = vmatpush1.msra.mxu0 0.0
        %4305 = vmatprep.subr.mxu0 0.0
        %4306 = vmatpush1.msra.mxu0 0.0
        %4307 = vmatprep.subr.mxu0 0.0
        %4308 = vmatpush1.msra.mxu0 0.0
        %4309 = vmatprep.subr.mxu0 0.0
        %4310 = vmatpush1.msra.mxu0 0.0
        %4311 = vmatprep.subr.mxu0 0.0
        %4312 = vmatpush1.msra.mxu0 0.0
        %4313 = vmatprep.subr.mxu0 0.0
        %4314 = vmatpush1.msra.mxu0 0.0
        %4315 = vmatprep.subr.mxu0 0.0
        %4316 = vmatpush1.msra.mxu0 0.0
        %4317 = vmatprep.subr.mxu0 0.0
        %v4318 = vand.u32 %v1272, 4294901760
        %4319 = vmatpush1.msra.mxu0 %v4318
        %4320 = vmatprep.subr.mxu0 0.0
        %v4321 = vand.u32 %v1271, 4294901760
        %4322 = vmatpush1.msra.mxu0 %v4321
        %4323 = vmatprep.subr.mxu0 0.0
        %4324 = vmatpush2.msra.mxu0 0.0
        %4325 = vmatprep.subr.mxu0 0.0
        %4326 = vmatpush2.msra.mxu0 0.0
        %4327 = vmatprep.subr.mxu0 0.0
        %4328 = vmatpush2.msra.mxu0 0.0
        %4329 = vmatprep.subr.mxu0 0.0
        %4330 = vmatpush2.msra.mxu0 0.0
        %4331 = vmatprep.subr.mxu0 0.0
        %4332 = vmatpush2.msra.mxu0 0.0
        %4333 = vmatprep.subr.mxu0 0.0
        %4334 = vmatpush2.msra.mxu0 0.0
        %4335 = vmatprep.subr.mxu0 0.0
        %4336 = vmatpush2.msra.mxu0 0.0
        %4337 = vmatprep.subr.mxu0 0.0
        %4338 = vmatpush2.msra.mxu0 0.0
        %4339 = vmatprep.subr.mxu0 0.0
        %4340 = vmatpush2.msra.mxu0 0.0
        %4341 = vmatprep.subr.mxu0 0.0
        %4342 = vmatpush2.msra.mxu0 0.0
        %4343 = vmatprep.subr.mxu0 0.0
        %4344 = vmatpush2.msra.mxu0 0.0
        %4345 = vmatprep.subr.mxu0 0.0
        %4346 = vmatpush2.msra.mxu0 0.0
        %4347 = vmatprep.subr.mxu0 0.0
        %4348 = vmatpush2.msra.mxu0 0.0
        %4349 = vmatprep.subr.mxu0 0.0
        %4350 = vmatpush2.msra.mxu0 0.0
        %4351 = vmatprep.subr.mxu0 0.0
        %4352 = vmatpush2.msra.mxu0 0.0
        %4353 = vmatprep.subr.mxu0 0.0
        %4354 = vmatpush2.msra.mxu0 0.0
        %4355 = vmatprep.mubr.f32.mxu0 0.0
        %v4356 = vand.u32 %v4053, 4294901760
        %v4357 = vsub.f32 %v4053, %v4356
        %v4358 = vand.u32 %v4357, 4294901760
        %4359 = vmatmul.mubr.f32.gmra.mxu0 %v4358
        %v4360 = vpop.f32.mrf.mxu0
        %v4361 = vadd.f32 %v4286, %v4360
        %v4362 = vpop.f32.mrf.mxu0
        %4363 = vdwg.mxu0
        %4364 = vmatprep.subr.mxu0 0.0
        %4365 = vmatpush1.msra.mxu0 0.0
        %4366 = vmatprep.subr.mxu0 0.0
        %4367 = vmatpush1.msra.mxu0 0.0
        %4368 = vmatprep.subr.mxu0 0.0
        %4369 = vmatpush1.msra.mxu0 0.0
        %4370 = vmatprep.subr.mxu0 0.0
        %4371 = vmatpush1.msra.mxu0 0.0
        %4372 = vmatprep.subr.mxu0 0.0
        %4373 = vmatpush1.msra.mxu0 0.0
        %4374 = vmatprep.subr.mxu0 0.0
        %4375 = vmatpush1.msra.mxu0 0.0
        %4376 = vmatprep.subr.mxu0 0.0
        %4377 = vmatpush1.msra.mxu0 0.0
        %4378 = vmatprep.subr.mxu0 0.0
        %4379 = vmatpush1.msra.mxu0 0.0
        %4380 = vmatprep.subr.mxu0 0.0
        %4381 = vmatpush1.msra.mxu0 0.0
        %4382 = vmatprep.subr.mxu0 0.0
        %4383 = vmatpush1.msra.mxu0 0.0
        %4384 = vmatprep.subr.mxu0 0.0
        %4385 = vmatpush1.msra.mxu0 0.0
        %4386 = vmatprep.subr.mxu0 0.0
        %4387 = vmatpush1.msra.mxu0 0.0
        %4388 = vmatprep.subr.mxu0 0.0
        %4389 = vmatpush1.msra.mxu0 0.0
        %4390 = vmatprep.subr.mxu0 0.0
        %4391 = vmatpush1.msra.mxu0 0.0
        %4392 = vmatprep.subr.mxu0 0.0
        %v4393 = vand.u32 %v1272, 4294901760
        %v4394 = vsub.f32 %v1272, %v4393
        %v4395 = vand.u32 %v4394, 4294901760
        %4396 = vmatpush1.msra.mxu0 %v4395
        %4397 = vmatprep.subr.mxu0 0.0
        %v4398 = vand.u32 %v1271, 4294901760
        %v4399 = vsub.f32 %v1271, %v4398
        %v4400 = vand.u32 %v4399, 4294901760
        %4401 = vmatpush1.msra.mxu0 %v4400
        %4402 = vmatprep.subr.mxu0 0.0
        %4403 = vmatpush2.msra.mxu0 0.0
        %4404 = vmatprep.subr.mxu0 0.0
        %4405 = vmatpush2.msra.mxu0 0.0
        %4406 = vmatprep.subr.mxu0 0.0
        %4407 = vmatpush2.msra.mxu0 0.0
        %4408 = vmatprep.subr.mxu0 0.0
        %4409 = vmatpush2.msra.mxu0 0.0
        %4410 = vmatprep.subr.mxu0 0.0
        %4411 = vmatpush2.msra.mxu0 0.0
        %4412 = vmatprep.subr.mxu0 0.0
        %4413 = vmatpush2.msra.mxu0 0.0
        %4414 = vmatprep.subr.mxu0 0.0
        %4415 = vmatpush2.msra.mxu0 0.0
        %4416 = vmatprep.subr.mxu0 0.0
        %4417 = vmatpush2.msra.mxu0 0.0
        %4418 = vmatprep.subr.mxu0 0.0
        %4419 = vmatpush2.msra.mxu0 0.0
        %4420 = vmatprep.subr.mxu0 0.0
        %4421 = vmatpush2.msra.mxu0 0.0
        %4422 = vmatprep.subr.mxu0 0.0
        %4423 = vmatpush2.msra.mxu0 0.0
        %4424 = vmatprep.subr.mxu0 0.0
        %4425 = vmatpush2.msra.mxu0 0.0
        %4426 = vmatprep.subr.mxu0 0.0
        %4427 = vmatpush2.msra.mxu0 0.0
        %4428 = vmatprep.subr.mxu0 0.0
        %4429 = vmatpush2.msra.mxu0 0.0
        %4430 = vmatprep.subr.mxu0 0.0
        %4431 = vmatpush2.msra.mxu0 0.0
        %4432 = vmatprep.subr.mxu0 0.0
        %4433 = vmatpush2.msra.mxu0 0.0
        %4434 = vmatprep.mubr.f32.mxu0 0.0
        %v4435 = vand.u32 %v4053, 4294901760
        %4436 = vmatmul.mubr.f32.gmra.mxu0 %v4435
        %v4437 = vpop.f32.mrf.mxu0
        %v4438 = vadd.f32 %v4361, %v4437
        %v4439 = vpop.f32.mrf.mxu0
        %4440 = vdwg.mxu0
        %4441 = vmatprep.subr.mxu0 0.0
        %4442 = vmatpush1.msra.mxu0 0.0
        %4443 = vmatprep.subr.mxu0 0.0
        %4444 = vmatpush1.msra.mxu0 0.0
        %4445 = vmatprep.subr.mxu0 0.0
        %4446 = vmatpush1.msra.mxu0 0.0
        %4447 = vmatprep.subr.mxu0 0.0
        %4448 = vmatpush1.msra.mxu0 0.0
        %4449 = vmatprep.subr.mxu0 0.0
        %4450 = vmatpush1.msra.mxu0 0.0
        %4451 = vmatprep.subr.mxu0 0.0
        %4452 = vmatpush1.msra.mxu0 0.0
        %4453 = vmatprep.subr.mxu0 0.0
        %4454 = vmatpush1.msra.mxu0 0.0
        %4455 = vmatprep.subr.mxu0 0.0
        %4456 = vmatpush1.msra.mxu0 0.0
        %4457 = vmatprep.subr.mxu0 0.0
        %4458 = vmatpush1.msra.mxu0 0.0
        %4459 = vmatprep.subr.mxu0 0.0
        %4460 = vmatpush1.msra.mxu0 0.0
        %4461 = vmatprep.subr.mxu0 0.0
        %4462 = vmatpush1.msra.mxu0 0.0
        %4463 = vmatprep.subr.mxu0 0.0
        %4464 = vmatpush1.msra.mxu0 0.0
        %4465 = vmatprep.subr.mxu0 0.0
        %4466 = vmatpush1.msra.mxu0 0.0
        %4467 = vmatprep.subr.mxu0 0.0
        %4468 = vmatpush1.msra.mxu0 0.0
        %4469 = vmatprep.subr.mxu0 0.0
        %v4470 = vand.u32 %v1272, 4294901760
        %4471 = vmatpush1.msra.mxu0 %v4470
        %4472 = vmatprep.subr.mxu0 0.0
        %v4473 = vand.u32 %v1271, 4294901760
        %4474 = vmatpush1.msra.mxu0 %v4473
        %4475 = vmatprep.subr.mxu0 0.0
        %4476 = vmatpush2.msra.mxu0 0.0
        %4477 = vmatprep.subr.mxu0 0.0
        %4478 = vmatpush2.msra.mxu0 0.0
        %4479 = vmatprep.subr.mxu0 0.0
        %4480 = vmatpush2.msra.mxu0 0.0
        %4481 = vmatprep.subr.mxu0 0.0
        %4482 = vmatpush2.msra.mxu0 0.0
        %4483 = vmatprep.subr.mxu0 0.0
        %4484 = vmatpush2.msra.mxu0 0.0
        %4485 = vmatprep.subr.mxu0 0.0
        %4486 = vmatpush2.msra.mxu0 0.0
        %4487 = vmatprep.subr.mxu0 0.0
        %4488 = vmatpush2.msra.mxu0 0.0
        %4489 = vmatprep.subr.mxu0 0.0
        %4490 = vmatpush2.msra.mxu0 0.0
        %4491 = vmatprep.subr.mxu0 0.0
        %4492 = vmatpush2.msra.mxu0 0.0
        %4493 = vmatprep.subr.mxu0 0.0
        %4494 = vmatpush2.msra.mxu0 0.0
        %4495 = vmatprep.subr.mxu0 0.0
        %4496 = vmatpush2.msra.mxu0 0.0
        %4497 = vmatprep.subr.mxu0 0.0
        %4498 = vmatpush2.msra.mxu0 0.0
        %4499 = vmatprep.subr.mxu0 0.0
        %4500 = vmatpush2.msra.mxu0 0.0
        %4501 = vmatprep.subr.mxu0 0.0
        %4502 = vmatpush2.msra.mxu0 0.0
        %4503 = vmatprep.subr.mxu0 0.0
        %4504 = vmatpush2.msra.mxu0 0.0
        %4505 = vmatprep.subr.mxu0 0.0
        %4506 = vmatpush2.msra.mxu0 0.0
        %4507 = vmatprep.mubr.f32.mxu0 0.0
        %v4508 = vand.u32 %v4053, 4294901760
        %4509 = vmatmul.mubr.f32.gmra.mxu0 %v4508
        %v4510 = vpop.f32.mrf.mxu0
        %v4511 = vadd.f32 %v4438, %v4510
        %v4512 = vpop.f32.mrf.mxu0
        %4513 = vdwg.mxu0
        %4514 = vst.msk [vmem:[%s212 + $0x18] sm:$0xf] %vm1735, %v4511
        %v4516 = vsel %vm219, %v1270, 0
        %4518 = vmatprep.subr.mxu0 0.0
        %4519 = vmatpush1.msra.mxu0 0.0
        %4520 = vmatprep.subr.mxu0 0.0
        %4521 = vmatpush1.msra.mxu0 0.0
        %4522 = vmatprep.subr.mxu0 0.0
        %4523 = vmatpush1.msra.mxu0 0.0
        %4524 = vmatprep.subr.mxu0 0.0
        %4525 = vmatpush1.msra.mxu0 0.0
        %4526 = vmatprep.subr.mxu0 0.0
        %4527 = vmatpush1.msra.mxu0 0.0
        %4528 = vmatprep.subr.mxu0 0.0
        %4529 = vmatpush1.msra.mxu0 0.0
        %4530 = vmatprep.subr.mxu0 0.0
        %4531 = vmatpush1.msra.mxu0 0.0
        %4532 = vmatprep.subr.mxu0 0.0
        %4533 = vmatpush1.msra.mxu0 0.0
        %4534 = vmatprep.subr.mxu0 0.0
        %4535 = vmatpush1.msra.mxu0 0.0
        %4536 = vmatprep.subr.mxu0 0.0
        %4537 = vmatpush1.msra.mxu0 0.0
        %4538 = vmatprep.subr.mxu0 0.0
        %4539 = vmatpush1.msra.mxu0 0.0
        %4540 = vmatprep.subr.mxu0 0.0
        %4541 = vmatpush1.msra.mxu0 0.0
        %4542 = vmatprep.subr.mxu0 0.0
        %4543 = vmatpush1.msra.mxu0 0.0
        %4544 = vmatprep.subr.mxu0 0.0
        %4545 = vmatpush1.msra.mxu0 0.0
        %4546 = vmatprep.subr.mxu0 0.0
        %v4547 = vand.u32 %v1272, 4294901760
        %4548 = vmatpush1.msra.mxu0 %v4547
        %4549 = vmatprep.subr.mxu0 0.0
        %v4550 = vand.u32 %v1271, 4294901760
        %4551 = vmatpush1.msra.mxu0 %v4550
        %4552 = vmatprep.subr.mxu0 0.0
        %4553 = vmatpush2.msra.mxu0 0.0
        %4554 = vmatprep.subr.mxu0 0.0
        %4555 = vmatpush2.msra.mxu0 0.0
        %4556 = vmatprep.subr.mxu0 0.0
        %4557 = vmatpush2.msra.mxu0 0.0
        %4558 = vmatprep.subr.mxu0 0.0
        %4559 = vmatpush2.msra.mxu0 0.0
        %4560 = vmatprep.subr.mxu0 0.0
        %4561 = vmatpush2.msra.mxu0 0.0
        %4562 = vmatprep.subr.mxu0 0.0
        %4563 = vmatpush2.msra.mxu0 0.0
        %4564 = vmatprep.subr.mxu0 0.0
        %4565 = vmatpush2.msra.mxu0 0.0
        %4566 = vmatprep.subr.mxu0 0.0
        %4567 = vmatpush2.msra.mxu0 0.0
        %4568 = vmatprep.subr.mxu0 0.0
        %4569 = vmatpush2.msra.mxu0 0.0
        %4570 = vmatprep.subr.mxu0 0.0
        %4571 = vmatpush2.msra.mxu0 0.0
        %4572 = vmatprep.subr.mxu0 0.0
        %4573 = vmatpush2.msra.mxu0 0.0
        %4574 = vmatprep.subr.mxu0 0.0
        %4575 = vmatpush2.msra.mxu0 0.0
        %4576 = vmatprep.subr.mxu0 0.0
        %4577 = vmatpush2.msra.mxu0 0.0
        %4578 = vmatprep.subr.mxu0 0.0
        %4579 = vmatpush2.msra.mxu0 0.0
        %4580 = vmatprep.subr.mxu0 0.0
        %4581 = vmatpush2.msra.mxu0 0.0
        %4582 = vmatprep.subr.mxu0 0.0
        %4583 = vmatpush2.msra.mxu0 0.0
        %4584 = vmatprep.mubr.f32.mxu0 0.0
        %v4585 = vand.u32 %v4516, 4294901760
        %v4586 = vsub.f32 %v4516, %v4585
        %v4587 = vand.u32 %v4586, 4294901760
        %v4588 = vsub.f32 %v4586, %v4587
        %v4589 = vand.u32 %v4588, 4294901760
        %4590 = vmatmul.mubr.f32.gmra.mxu0 %v4589
        %v4591 = vpop.f32.mrf.mxu0
        %v4592 = vadd.f32 0.0, %v4591
        %v4593 = vpop.f32.mrf.mxu0
        %4594 = vdwg.mxu0
        %4595 = vmatprep.subr.mxu0 0.0
        %4596 = vmatpush1.msra.mxu0 0.0
        %4597 = vmatprep.subr.mxu0 0.0
        %4598 = vmatpush1.msra.mxu0 0.0
        %4599 = vmatprep.subr.mxu0 0.0
        %4600 = vmatpush1.msra.mxu0 0.0
        %4601 = vmatprep.subr.mxu0 0.0
        %4602 = vmatpush1.msra.mxu0 0.0
        %4603 = vmatprep.subr.mxu0 0.0
        %4604 = vmatpush1.msra.mxu0 0.0
        %4605 = vmatprep.subr.mxu0 0.0
        %4606 = vmatpush1.msra.mxu0 0.0
        %4607 = vmatprep.subr.mxu0 0.0
        %4608 = vmatpush1.msra.mxu0 0.0
        %4609 = vmatprep.subr.mxu0 0.0
        %4610 = vmatpush1.msra.mxu0 0.0
        %4611 = vmatprep.subr.mxu0 0.0
        %4612 = vmatpush1.msra.mxu0 0.0
        %4613 = vmatprep.subr.mxu0 0.0
        %4614 = vmatpush1.msra.mxu0 0.0
        %4615 = vmatprep.subr.mxu0 0.0
        %4616 = vmatpush1.msra.mxu0 0.0
        %4617 = vmatprep.subr.mxu0 0.0
        %4618 = vmatpush1.msra.mxu0 0.0
        %4619 = vmatprep.subr.mxu0 0.0
        %4620 = vmatpush1.msra.mxu0 0.0
        %4621 = vmatprep.subr.mxu0 0.0
        %4622 = vmatpush1.msra.mxu0 0.0
        %4623 = vmatprep.subr.mxu0 0.0
        %v4624 = vand.u32 %v1272, 4294901760
        %v4625 = vsub.f32 %v1272, %v4624
        %v4626 = vand.u32 %v4625, 4294901760
        %v4627 = vsub.f32 %v4625, %v4626
        %v4628 = vand.u32 %v4627, 4294901760
        %4629 = vmatpush1.msra.mxu0 %v4628
        %4630 = vmatprep.subr.mxu0 0.0
        %v4631 = vand.u32 %v1271, 4294901760
        %v4632 = vsub.f32 %v1271, %v4631
        %v4633 = vand.u32 %v4632, 4294901760
        %v4634 = vsub.f32 %v4632, %v4633
        %v4635 = vand.u32 %v4634, 4294901760
        %4636 = vmatpush1.msra.mxu0 %v4635
        %4637 = vmatprep.subr.mxu0 0.0
        %4638 = vmatpush2.msra.mxu0 0.0
        %4639 = vmatprep.subr.mxu0 0.0
        %4640 = vmatpush2.msra.mxu0 0.0
        %4641 = vmatprep.subr.mxu0 0.0
        %4642 = vmatpush2.msra.mxu0 0.0
        %4643 = vmatprep.subr.mxu0 0.0
        %4644 = vmatpush2.msra.mxu0 0.0
        %4645 = vmatprep.subr.mxu0 0.0
        %4646 = vmatpush2.msra.mxu0 0.0
        %4647 = vmatprep.subr.mxu0 0.0
        %4648 = vmatpush2.msra.mxu0 0.0
        %4649 = vmatprep.subr.mxu0 0.0
        %4650 = vmatpush2.msra.mxu0 0.0
        %4651 = vmatprep.subr.mxu0 0.0
        %4652 = vmatpush2.msra.mxu0 0.0
        %4653 = vmatprep.subr.mxu0 0.0
        %4654 = vmatpush2.msra.mxu0 0.0
        %4655 = vmatprep.subr.mxu0 0.0
        %4656 = vmatpush2.msra.mxu0 0.0
        %4657 = vmatprep.subr.mxu0 0.0
        %4658 = vmatpush2.msra.mxu0 0.0
        %4659 = vmatprep.subr.mxu0 0.0
        %4660 = vmatpush2.msra.mxu0 0.0
        %4661 = vmatprep.subr.mxu0 0.0
        %4662 = vmatpush2.msra.mxu0 0.0
        %4663 = vmatprep.subr.mxu0 0.0
        %4664 = vmatpush2.msra.mxu0 0.0
        %4665 = vmatprep.subr.mxu0 0.0
        %4666 = vmatpush2.msra.mxu0 0.0
        %4667 = vmatprep.subr.mxu0 0.0
        %4668 = vmatpush2.msra.mxu0 0.0
        %4669 = vmatprep.mubr.f32.mxu0 0.0
        %v4670 = vand.u32 %v4516, 4294901760
        %4671 = vmatmul.mubr.f32.gmra.mxu0 %v4670
        %v4672 = vpop.f32.mrf.mxu0
        %v4673 = vadd.f32 %v4592, %v4672
        %v4674 = vpop.f32.mrf.mxu0
        %4675 = vdwg.mxu0
        %4676 = vmatprep.subr.mxu0 0.0
        %4677 = vmatpush1.msra.mxu0 0.0
        %4678 = vmatprep.subr.mxu0 0.0
        %4679 = vmatpush1.msra.mxu0 0.0
        %4680 = vmatprep.subr.mxu0 0.0
        %4681 = vmatpush1.msra.mxu0 0.0
        %4682 = vmatprep.subr.mxu0 0.0
        %4683 = vmatpush1.msra.mxu0 0.0
        %4684 = vmatprep.subr.mxu0 0.0
        %4685 = vmatpush1.msra.mxu0 0.0
        %4686 = vmatprep.subr.mxu0 0.0
        %4687 = vmatpush1.msra.mxu0 0.0
        %4688 = vmatprep.subr.mxu0 0.0
        %4689 = vmatpush1.msra.mxu0 0.0
        %4690 = vmatprep.subr.mxu0 0.0
        %4691 = vmatpush1.msra.mxu0 0.0
        %4692 = vmatprep.subr.mxu0 0.0
        %4693 = vmatpush1.msra.mxu0 0.0
        %4694 = vmatprep.subr.mxu0 0.0
        %4695 = vmatpush1.msra.mxu0 0.0
        %4696 = vmatprep.subr.mxu0 0.0
        %4697 = vmatpush1.msra.mxu0 0.0
        %4698 = vmatprep.subr.mxu0 0.0
        %4699 = vmatpush1.msra.mxu0 0.0
        %4700 = vmatprep.subr.mxu0 0.0
        %4701 = vmatpush1.msra.mxu0 0.0
        %4702 = vmatprep.subr.mxu0 0.0
        %4703 = vmatpush1.msra.mxu0 0.0
        %4704 = vmatprep.subr.mxu0 0.0
        %v4705 = vand.u32 %v1272, 4294901760
        %v4706 = vsub.f32 %v1272, %v4705
        %4707 = vmatpush1.msra.mxu0 %v4706
        %4708 = vmatprep.subr.mxu0 0.0
        %v4709 = vand.u32 %v1271, 4294901760
        %v4710 = vsub.f32 %v1271, %v4709
        %4711 = vmatpush1.msra.mxu0 %v4710
        %4712 = vmatprep.subr.mxu0 0.0
        %4713 = vmatpush2.msra.mxu0 0.0
        %4714 = vmatprep.subr.mxu0 0.0
        %4715 = vmatpush2.msra.mxu0 0.0
        %4716 = vmatprep.subr.mxu0 0.0
        %4717 = vmatpush2.msra.mxu0 0.0
        %4718 = vmatprep.subr.mxu0 0.0
        %4719 = vmatpush2.msra.mxu0 0.0
        %4720 = vmatprep.subr.mxu0 0.0
        %4721 = vmatpush2.msra.mxu0 0.0
        %4722 = vmatprep.subr.mxu0 0.0
        %4723 = vmatpush2.msra.mxu0 0.0
        %4724 = vmatprep.subr.mxu0 0.0
        %4725 = vmatpush2.msra.mxu0 0.0
        %4726 = vmatprep.subr.mxu0 0.0
        %4727 = vmatpush2.msra.mxu0 0.0
        %4728 = vmatprep.subr.mxu0 0.0
        %4729 = vmatpush2.msra.mxu0 0.0
        %4730 = vmatprep.subr.mxu0 0.0
        %4731 = vmatpush2.msra.mxu0 0.0
        %4732 = vmatprep.subr.mxu0 0.0
        %4733 = vmatpush2.msra.mxu0 0.0
        %4734 = vmatprep.subr.mxu0 0.0
        %4735 = vmatpush2.msra.mxu0 0.0
        %4736 = vmatprep.subr.mxu0 0.0
        %4737 = vmatpush2.msra.mxu0 0.0
        %4738 = vmatprep.subr.mxu0 0.0
        %4739 = vmatpush2.msra.mxu0 0.0
        %4740 = vmatprep.subr.mxu0 0.0
        %4741 = vmatpush2.msra.mxu0 0.0
        %4742 = vmatprep.subr.mxu0 0.0
        %4743 = vmatpush2.msra.mxu0 0.0
        %4744 = vmatprep.mubr.f32.mxu0 0.0
        %v4745 = vand.u32 %v4516, 4294901760
        %v4746 = vsub.f32 %v4516, %v4745
        %4747 = vmatmul.mubr.f32.gmra.mxu0 %v4746
        %v4748 = vpop.f32.mrf.mxu0
        %v4749 = vadd.f32 %v4673, %v4748
        %v4750 = vpop.f32.mrf.mxu0
        %4751 = vdwg.mxu0
        %4752 = vmatprep.subr.mxu0 0.0
        %4753 = vmatpush1.msra.mxu0 0.0
        %4754 = vmatprep.subr.mxu0 0.0
        %4755 = vmatpush1.msra.mxu0 0.0
        %4756 = vmatprep.subr.mxu0 0.0
        %4757 = vmatpush1.msra.mxu0 0.0
        %4758 = vmatprep.subr.mxu0 0.0
        %4759 = vmatpush1.msra.mxu0 0.0
        %4760 = vmatprep.subr.mxu0 0.0
        %4761 = vmatpush1.msra.mxu0 0.0
        %4762 = vmatprep.subr.mxu0 0.0
        %4763 = vmatpush1.msra.mxu0 0.0
        %4764 = vmatprep.subr.mxu0 0.0
        %4765 = vmatpush1.msra.mxu0 0.0
        %4766 = vmatprep.subr.mxu0 0.0
        %4767 = vmatpush1.msra.mxu0 0.0
        %4768 = vmatprep.subr.mxu0 0.0
        %4769 = vmatpush1.msra.mxu0 0.0
        %4770 = vmatprep.subr.mxu0 0.0
        %4771 = vmatpush1.msra.mxu0 0.0
        %4772 = vmatprep.subr.mxu0 0.0
        %4773 = vmatpush1.msra.mxu0 0.0
        %4774 = vmatprep.subr.mxu0 0.0
        %4775 = vmatpush1.msra.mxu0 0.0
        %4776 = vmatprep.subr.mxu0 0.0
        %4777 = vmatpush1.msra.mxu0 0.0
        %4778 = vmatprep.subr.mxu0 0.0
        %4779 = vmatpush1.msra.mxu0 0.0
        %4780 = vmatprep.subr.mxu0 0.0
        %v4781 = vand.u32 %v1272, 4294901760
        %4782 = vmatpush1.msra.mxu0 %v4781
        %4783 = vmatprep.subr.mxu0 0.0
        %v4784 = vand.u32 %v1271, 4294901760
        %4785 = vmatpush1.msra.mxu0 %v4784
        %4786 = vmatprep.subr.mxu0 0.0
        %4787 = vmatpush2.msra.mxu0 0.0
        %4788 = vmatprep.subr.mxu0 0.0
        %4789 = vmatpush2.msra.mxu0 0.0
        %4790 = vmatprep.subr.mxu0 0.0
        %4791 = vmatpush2.msra.mxu0 0.0
        %4792 = vmatprep.subr.mxu0 0.0
        %4793 = vmatpush2.msra.mxu0 0.0
        %4794 = vmatprep.subr.mxu0 0.0
        %4795 = vmatpush2.msra.mxu0 0.0
        %4796 = vmatprep.subr.mxu0 0.0
        %4797 = vmatpush2.msra.mxu0 0.0
        %4798 = vmatprep.subr.mxu0 0.0
        %4799 = vmatpush2.msra.mxu0 0.0
        %4800 = vmatprep.subr.mxu0 0.0
        %4801 = vmatpush2.msra.mxu0 0.0
        %4802 = vmatprep.subr.mxu0 0.0
        %4803 = vmatpush2.msra.mxu0 0.0
        %4804 = vmatprep.subr.mxu0 0.0
        %4805 = vmatpush2.msra.mxu0 0.0
        %4806 = vmatprep.subr.mxu0 0.0
        %4807 = vmatpush2.msra.mxu0 0.0
        %4808 = vmatprep.subr.mxu0 0.0
        %4809 = vmatpush2.msra.mxu0 0.0
        %4810 = vmatprep.subr.mxu0 0.0
        %4811 = vmatpush2.msra.mxu0 0.0
        %4812 = vmatprep.subr.mxu0 0.0
        %4813 = vmatpush2.msra.mxu0 0.0
        %4814 = vmatprep.subr.mxu0 0.0
        %4815 = vmatpush2.msra.mxu0 0.0
        %4816 = vmatprep.subr.mxu0 0.0
        %4817 = vmatpush2.msra.mxu0 0.0
        %4818 = vmatprep.mubr.f32.mxu0 0.0
        %v4819 = vand.u32 %v4516, 4294901760
        %v4820 = vsub.f32 %v4516, %v4819
        %v4821 = vand.u32 %v4820, 4294901760
        %4822 = vmatmul.mubr.f32.gmra.mxu0 %v4821
        %v4823 = vpop.f32.mrf.mxu0
        %v4824 = vadd.f32 %v4749, %v4823
        %v4825 = vpop.f32.mrf.mxu0
        %4826 = vdwg.mxu0
        %4827 = vmatprep.subr.mxu0 0.0
        %4828 = vmatpush1.msra.mxu0 0.0
        %4829 = vmatprep.subr.mxu0 0.0
        %4830 = vmatpush1.msra.mxu0 0.0
        %4831 = vmatprep.subr.mxu0 0.0
        %4832 = vmatpush1.msra.mxu0 0.0
        %4833 = vmatprep.subr.mxu0 0.0
        %4834 = vmatpush1.msra.mxu0 0.0
        %4835 = vmatprep.subr.mxu0 0.0
        %4836 = vmatpush1.msra.mxu0 0.0
        %4837 = vmatprep.subr.mxu0 0.0
        %4838 = vmatpush1.msra.mxu0 0.0
        %4839 = vmatprep.subr.mxu0 0.0
        %4840 = vmatpush1.msra.mxu0 0.0
        %4841 = vmatprep.subr.mxu0 0.0
        %4842 = vmatpush1.msra.mxu0 0.0
        %4843 = vmatprep.subr.mxu0 0.0
        %4844 = vmatpush1.msra.mxu0 0.0
        %4845 = vmatprep.subr.mxu0 0.0
        %4846 = vmatpush1.msra.mxu0 0.0
        %4847 = vmatprep.subr.mxu0 0.0
        %4848 = vmatpush1.msra.mxu0 0.0
        %4849 = vmatprep.subr.mxu0 0.0
        %4850 = vmatpush1.msra.mxu0 0.0
        %4851 = vmatprep.subr.mxu0 0.0
        %4852 = vmatpush1.msra.mxu0 0.0
        %4853 = vmatprep.subr.mxu0 0.0
        %4854 = vmatpush1.msra.mxu0 0.0
        %4855 = vmatprep.subr.mxu0 0.0
        %v4856 = vand.u32 %v1272, 4294901760
        %v4857 = vsub.f32 %v1272, %v4856
        %v4858 = vand.u32 %v4857, 4294901760
        %4859 = vmatpush1.msra.mxu0 %v4858
        %4860 = vmatprep.subr.mxu0 0.0
        %v4861 = vand.u32 %v1271, 4294901760
        %v4862 = vsub.f32 %v1271, %v4861
        %v4863 = vand.u32 %v4862, 4294901760
        %4864 = vmatpush1.msra.mxu0 %v4863
        %4865 = vmatprep.subr.mxu0 0.0
        %4866 = vmatpush2.msra.mxu0 0.0
        %4867 = vmatprep.subr.mxu0 0.0
        %4868 = vmatpush2.msra.mxu0 0.0
        %4869 = vmatprep.subr.mxu0 0.0
        %4870 = vmatpush2.msra.mxu0 0.0
        %4871 = vmatprep.subr.mxu0 0.0
        %4872 = vmatpush2.msra.mxu0 0.0
        %4873 = vmatprep.subr.mxu0 0.0
        %4874 = vmatpush2.msra.mxu0 0.0
        %4875 = vmatprep.subr.mxu0 0.0
        %4876 = vmatpush2.msra.mxu0 0.0
        %4877 = vmatprep.subr.mxu0 0.0
        %4878 = vmatpush2.msra.mxu0 0.0
        %4879 = vmatprep.subr.mxu0 0.0
        %4880 = vmatpush2.msra.mxu0 0.0
        %4881 = vmatprep.subr.mxu0 0.0
        %4882 = vmatpush2.msra.mxu0 0.0
        %4883 = vmatprep.subr.mxu0 0.0
        %4884 = vmatpush2.msra.mxu0 0.0
        %4885 = vmatprep.subr.mxu0 0.0
        %4886 = vmatpush2.msra.mxu0 0.0
        %4887 = vmatprep.subr.mxu0 0.0
        %4888 = vmatpush2.msra.mxu0 0.0
        %4889 = vmatprep.subr.mxu0 0.0
        %4890 = vmatpush2.msra.mxu0 0.0
        %4891 = vmatprep.subr.mxu0 0.0
        %4892 = vmatpush2.msra.mxu0 0.0
        %4893 = vmatprep.subr.mxu0 0.0
        %4894 = vmatpush2.msra.mxu0 0.0
        %4895 = vmatprep.subr.mxu0 0.0
        %4896 = vmatpush2.msra.mxu0 0.0
        %4897 = vmatprep.mubr.f32.mxu0 0.0
        %v4898 = vand.u32 %v4516, 4294901760
        %4899 = vmatmul.mubr.f32.gmra.mxu0 %v4898
        %v4900 = vpop.f32.mrf.mxu0
        %v4901 = vadd.f32 %v4824, %v4900
        %v4902 = vpop.f32.mrf.mxu0
        %4903 = vdwg.mxu0
        %4904 = vmatprep.subr.mxu0 0.0
        %4905 = vmatpush1.msra.mxu0 0.0
        %4906 = vmatprep.subr.mxu0 0.0
        %4907 = vmatpush1.msra.mxu0 0.0
        %4908 = vmatprep.subr.mxu0 0.0
        %4909 = vmatpush1.msra.mxu0 0.0
        %4910 = vmatprep.subr.mxu0 0.0
        %4911 = vmatpush1.msra.mxu0 0.0
        %4912 = vmatprep.subr.mxu0 0.0
        %4913 = vmatpush1.msra.mxu0 0.0
        %4914 = vmatprep.subr.mxu0 0.0
        %4915 = vmatpush1.msra.mxu0 0.0
        %4916 = vmatprep.subr.mxu0 0.0
        %4917 = vmatpush1.msra.mxu0 0.0
        %4918 = vmatprep.subr.mxu0 0.0
        %4919 = vmatpush1.msra.mxu0 0.0
        %4920 = vmatprep.subr.mxu0 0.0
        %4921 = vmatpush1.msra.mxu0 0.0
        %4922 = vmatprep.subr.mxu0 0.0
        %4923 = vmatpush1.msra.mxu0 0.0
        %4924 = vmatprep.subr.mxu0 0.0
        %4925 = vmatpush1.msra.mxu0 0.0
        %4926 = vmatprep.subr.mxu0 0.0
        %4927 = vmatpush1.msra.mxu0 0.0
        %4928 = vmatprep.subr.mxu0 0.0
        %4929 = vmatpush1.msra.mxu0 0.0
        %4930 = vmatprep.subr.mxu0 0.0
        %4931 = vmatpush1.msra.mxu0 0.0
        %4932 = vmatprep.subr.mxu0 0.0
        %v4933 = vand.u32 %v1272, 4294901760
        %4934 = vmatpush1.msra.mxu0 %v4933
        %4935 = vmatprep.subr.mxu0 0.0
        %v4936 = vand.u32 %v1271, 4294901760
        %4937 = vmatpush1.msra.mxu0 %v4936
        %4938 = vmatprep.subr.mxu0 0.0
        %4939 = vmatpush2.msra.mxu0 0.0
        %4940 = vmatprep.subr.mxu0 0.0
        %4941 = vmatpush2.msra.mxu0 0.0
        %4942 = vmatprep.subr.mxu0 0.0
        %4943 = vmatpush2.msra.mxu0 0.0
        %4944 = vmatprep.subr.mxu0 0.0
        %4945 = vmatpush2.msra.mxu0 0.0
        %4946 = vmatprep.subr.mxu0 0.0
        %4947 = vmatpush2.msra.mxu0 0.0
        %4948 = vmatprep.subr.mxu0 0.0
        %4949 = vmatpush2.msra.mxu0 0.0
        %4950 = vmatprep.subr.mxu0 0.0
        %4951 = vmatpush2.msra.mxu0 0.0
        %4952 = vmatprep.subr.mxu0 0.0
        %4953 = vmatpush2.msra.mxu0 0.0
        %4954 = vmatprep.subr.mxu0 0.0
        %4955 = vmatpush2.msra.mxu0 0.0
        %4956 = vmatprep.subr.mxu0 0.0
        %4957 = vmatpush2.msra.mxu0 0.0
        %4958 = vmatprep.subr.mxu0 0.0
        %4959 = vmatpush2.msra.mxu0 0.0
        %4960 = vmatprep.subr.mxu0 0.0
        %4961 = vmatpush2.msra.mxu0 0.0
        %4962 = vmatprep.subr.mxu0 0.0
        %4963 = vmatpush2.msra.mxu0 0.0
        %4964 = vmatprep.subr.mxu0 0.0
        %4965 = vmatpush2.msra.mxu0 0.0
        %4966 = vmatprep.subr.mxu0 0.0
        %4967 = vmatpush2.msra.mxu0 0.0
        %4968 = vmatprep.subr.mxu0 0.0
        %4969 = vmatpush2.msra.mxu0 0.0
        %4970 = vmatprep.mubr.f32.mxu0 0.0
        %v4971 = vand.u32 %v4516, 4294901760
        %4972 = vmatmul.mubr.f32.gmra.mxu0 %v4971
        %v4973 = vpop.f32.mrf.mxu0
        %v4974 = vadd.f32 %v4901, %v4973
        %v4975 = vpop.f32.mrf.mxu0
        %4976 = vdwg.mxu0
        %4977 = vst.msk [vmem:[%s212 + $0x1c] sm:$0xf] %vm1735, %v4974
        %p4978 = scmp.lt.s32.totalorder %s16, 1
        %s4979 = scalar_select %p4978, %s16, 1
        %s4980 = smul.addr %s4979, 4
        %s4981 = smul.addr %s4980, 8
        %s4982 = scalar_lea.vmem %s4, %s4981
        // Predicated region
        $region41: #{tpu_custom_call.1} parent=35 // pred_check
          %p4983 = pneg %p123
        $region42: #{tpu_custom_call.1} parent=35 // pred_check_branch
          %4985 = sbr.rel (%p4983) target = $region44
        $region43: #{tpu_custom_call.1} parent=35 // pred_region
          _
        $region44: #{tpu_custom_call.1} parent=35 // pred_fallthru
          _
      $region36: #{tpu_custom_call.1} parent=5 // pred_fallthru
        _
      %p4986 = scmp.le.s32.totalorder 2, %s11
      // Predicated region
      $region45: #{tpu_custom_call.1} parent=5 // pred_check
        %p4987 = pneg %p4986
      $region46: #{tpu_custom_call.1} parent=5 // pred_check_branch
        %4989 = sbr.rel (%p4987) target = $region48
      $region47: #{tpu_custom_call.1} parent=5 // pred_region
        %s4990 = ssub.s32 %s11, 2
        // Predicated region
        $region49: #{tpu_custom_call.1} parent=47 // pred_check
          %p4991 = pneg %p129
        $region50: #{tpu_custom_call.1} parent=47 // pred_check_branch
          %4993 = sbr.rel (%p4991) target = $region52
        $region51: #{tpu_custom_call.1} parent=47 // pred_region
          %p4994 = scmp.lt.s32.totalorder %s17, 1
          %s4995 = scalar_select %p4994, %s17, 1
          %s4996 = smul.addr %s4995, 4
          %s4997 = smul.addr %s4996, 8
          %s4998 = scalar_lea.vmem %s4, %s4997
        $region52: #{tpu_custom_call.1} parent=47 // pred_fallthru
          _
      $region48: #{tpu_custom_call.1} parent=5 // pred_fallthru
        _
    $region6: #{tpu_custom_call.1} parent=1 // loop_footer
      %s15 = sadd.s32 1, %s11
    $region7: #{tpu_custom_call.1} parent=1 // loop_footer_branch
      %10 = sbr.rel target = $region3
    $region8: #{tpu_custom_call.1} parent=1 // loop_exit
      _
    %4999 = vsyncpa [#allocation3], 1
    %s5000 = scalar_lea.sflag [#allocation3], 1
    %5001 = vsyncpa %s5000, 1

</llo_original>
